<compile_context>
chip_gen: v5e
topology: v5e:2x2
jax: 0.10.0
libtpu: 0.0.40
codegen_flags: <defaults>
</compile_context>

<pallas_src>
import functools

import jax
import jax.numpy as jnp
from jax.experimental import pallas as pl
from jax.experimental.pallas import tpu as pltpu


def _decoder_kernel(hidden_ref, cell_ref, wih_ref, whh_ref, b_ref, out_ref,
                    *, tau, n_layers, d_model):
    H = d_model

    # LSTM state: bf16 copies feed the MXU; cell stays f32 (elementwise math
    # must stay f32 — v5e has no bf16 VPU/EUP path).
    h_bf = [hidden_ref[l].astype(jnp.bfloat16) for l in range(n_layers)]  # (B, H)
    c = [cell_ref[l].astype(jnp.float32) for l in range(n_layers)]        # (B, H)

    def sigmoid(x):
        # tanh-based logistic: a single EUP transcendental per element.
        return 0.5 * (jnp.tanh(0.5 * x) + 1.0)

    # tau=4: static unroll is the right structure (see header comment).
    # TODO(synk): for tau > ~16 switch to grid=(tau,) with h/c in VMEM scratch
    # to bound vreg live ranges and code size.
    x_f32 = None
    for t in range(tau):
        # Input at every decode step = previous top-layer hidden state
        # (hidden[n_layers-1:n_layers].transpose(1, 0) in the PyTorch code).
        x_bf = h_bf[n_layers - 1]

        # Off-critical-path recurrence matmuls: all depend only on step t-1
        # state, so they issue back-to-back through the MXU.  Bias row
        # (1, 4H) broadcasts over sublanes at the add site — no materialized
        # (B, 4H) copy held live across the unrolled body.
        hh = [
            jnp.dot(h_bf[l], whh_ref[l], preferred_element_type=jnp.float32)
            + b_ref[l]
            for l in range(n_layers)
        ]                                                                 # (B, 4H)

        for l in range(n_layers):
            gates = (
                jnp.dot(x_bf, wih_ref[l], preferred_element_type=jnp.float32)
                + hh[l]
            )                                                             # (B, 4H)
            # Gate order in the kernel is [i, f, o, g] (permuted wrapper-side)
            # so one fused logistic covers the contiguous first 3H lanes.
            sg = sigmoid(gates[:, 0:3 * H])                               # (B, 3H)
            i_g = sg[:, 0 * H:1 * H]
            f_g = sg[:, 1 * H:2 * H]
            o_g = sg[:, 2 * H:3 * H]
            g_g = jnp.tanh(gates[:, 3 * H:4 * H])

            c_new = f_g * c[l] + i_g * g_g
            h_f32 = o_g * jnp.tanh(c_new)
            c[l] = c_new

            # Single bf16 cast, reused as next-layer x and next-step W_hh
            # operand; the f32 copy only survives for the top-layer store.
            h_new_bf = h_f32.astype(jnp.bfloat16)
            h_bf[l] = h_new_bf
            x_bf = h_new_bf
            x_f32 = h_f32
            # TODO(synk): nn.LSTM applies dropout(p=0.1) between stacked
            # layers only in training mode; eval-mode semantics here.

        # Full, unmasked (8, 128) tile store per step (output layout (tau,B,H)).
        out_ref[t] = x_f32.astype(out_ref.dtype)


def _permute_gates_ifgo_to_ifog(arr, H):
    """Permute the last axis from PyTorch gate order [i,f,g,o] to [i,f,o,g]."""
    lead = arr.shape[:-1]
    a = arr.reshape(lead + (4, H))
    a = a[..., jnp.array([0, 1, 3, 2]), :]
    return a.reshape(lead + (4 * H,))


def decoder_forward(hidden, cell, w_ih, w_hh, bias, *, tau):
    """hidden/cell: (L, B, H) f32; w_ih/w_hh: (L, H, 4H); bias: (L, 1, 4H).

    Weights/bias are expected in PyTorch gate order [i, f, g, o] along the
    last axis; the kernel-internal [i, f, o, g] permutation (for a fused
    3H-wide sigmoid) happens here, wrapper-side, once.
    """
    n_layers, batch, d_model = hidden.shape
    H = d_model

    # One-time gate-column permutation + bf16 cast (native MXU operand path).
    w_ih_bf = _permute_gates_ifgo_to_ifog(w_ih, H).astype(jnp.bfloat16)
    w_hh_bf = _permute_gates_ifgo_to_ifog(w_hh, H).astype(jnp.bfloat16)
    bias_p = _permute_gates_ifgo_to_ifog(bias, H).astype(jnp.float32)

    kernel = functools.partial(
        _decoder_kernel, tau=tau, n_layers=n_layers, d_model=d_model)
    vmem = pl.BlockSpec(memory_space=pltpu.MemorySpace.VMEM)

    flops = int(tau * n_layers * 2 * (2 * batch * H * 4 * H))
    transcendentals = int(tau * n_layers * 5 * batch * H)
    bytes_accessed = int(
        w_ih_bf.size * 2 + w_hh_bf.size * 2          # bf16 weights
        + bias_p.size * 4                             # f32 bias
        + (hidden.size + cell.size) * 4               # f32 state
        + tau * batch * H * 4)                        # f32 output

    out_tbh = pl.pallas_call(
        kernel,
        out_shape=jax.ShapeDtypeStruct((tau, batch, d_model), hidden.dtype),
        in_specs=[vmem] * 5,
        out_specs=vmem,
        compiler_params=pltpu.CompilerParams(vmem_limit_bytes=4 << 20),
        cost_estimate=pl.CostEstimate(flops=flops,
                                      transcendentals=transcendentals,
                                      bytes_accessed=bytes_accessed),
    )(hidden, cell, w_ih_bf, w_hh_bf, bias_p)

    # (tau, B, H) -> (B, tau, H): matches torch.cat(lstm_output, axis=1) with
    # batch_first=True.
    return jnp.transpose(out_tbh, (1, 0, 2))


def _reference(hidden, cell, w_ih, w_hh, bias, *, tau):
    """Pure-JAX f32 reference of the same rollout (PyTorch gate order)."""
    n_layers, _, H = hidden.shape
    h = list(hidden)
    c = list(cell)
    outs = []
    for _ in range(tau):
        x = h[n_layers - 1]
        for l in range(n_layers):
            gates = x @ w_ih[l] + h[l] @ w_hh[l] + bias[l]
            i_g = jax.nn.sigmoid(gates[:, 0 * H:1 * H])
            f_g = jax.nn.sigmoid(gates[:, 1 * H:2 * H])
            g_g = jnp.tanh(gates[:, 2 * H:3 * H])
            o_g = jax.nn.sigmoid(gates[:, 3 * H:4 * H])
            c[l] = f_g * c[l] + i_g * g_g
            h[l] = o_g * jnp.tanh(c[l])
            x = h[l]
        outs.append(x)
    return jnp.stack(outs, axis=1)


if __name__ == "__main__":
    d_model = 128     # hidden size (lane-aligned)
    batch = 8         # one full sublane tile
    tau = 4           # decode horizon
    n_layers = 3

    key = jax.random.PRNGKey(0)
    k_h, k_c, k_wih, k_whh, k_bih, k_bhh = jax.random.split(key, 6)
    bound = 1.0 / (d_model ** 0.5)

    hidden = jax.random.normal(k_h, (n_layers, batch, d_model), jnp.float32)
    cell = jax.random.normal(k_c, (n_layers, batch, d_model), jnp.float32)

    # PyTorch nn.LSTM parameter shapes: weight_ih_l{l}: (4H, H),
    # weight_hh_l{l}: (4H, H), bias_ih_l{l}: (4H,), bias_hh_l{l}: (4H,).
    # (input_size == hidden_size == d_model, so all layers share shapes.)
    w_ih_pt = jax.random.uniform(k_wih, (n_layers, 4 * d_model, d_model),
                                 jnp.float32, -bound, bound)
    w_hh_pt = jax.random.uniform(k_whh, (n_layers, 4 * d_model, d_model),
                                 jnp.float32, -bound, bound)
    b_ih = jax.random.uniform(k_bih, (n_layers, 4 * d_model), jnp.float32,
                              -bound, bound)
    b_hh = jax.random.uniform(k_bhh, (n_layers, 4 * d_model), jnp.float32,
                              -bound, bound)

    # Pre-transpose so the kernel does x @ W (PyTorch gate order [i,f,g,o]
    # along the lane axis); fold the two biases together.
    w_ih = jnp.transpose(w_ih_pt, (0, 2, 1))      # (L, H, 4H)
    w_hh = jnp.transpose(w_hh_pt, (0, 2, 1))      # (L, H, 4H)
    bias = (b_ih + b_hh)[:, None, :]              # (L, 1, 4H)

    out = decoder_forward(hidden, cell, w_ih, w_hh, bias, tau=tau)
    out = jax.block_until_ready(out)

    ref = _reference(hidden, cell, w_ih, w_hh, bias, tau=tau)
    assert out.shape == (batch, tau, d_model)
    # bf16 matmul operands / bf16 recurrent state in the kernel vs. the f32
    # reference -> loosened tolerance.
    assert jnp.allclose(out, ref, atol=5e-2, rtol=5e-2), "mismatch vs reference"
    print("KERNEL_OK")
</pallas_src>

<mosaic_0001>
module attributes {stable_mosaic.version = 11 : i64} {
  func.func @_decoder_kernel(%arg0: memref<3x8x128xf32, #tpu.memory_space<vmem>>, %arg1: memref<3x8x128xf32, #tpu.memory_space<vmem>>, %arg2: memref<3x128x512xbf16, #tpu.memory_space<vmem>>, %arg3: memref<3x128x512xbf16, #tpu.memory_space<vmem>>, %arg4: memref<3x1x512xf32, #tpu.memory_space<vmem>>, %arg5: memref<4x8x128xf32, #tpu.memory_space<vmem>>) attributes {dimension_semantics = [], scalar_prefetch = 0 : i64, scratch_operands = 0 : i64, tpu.core_type = #tpu.core_type<tc>} {
    %c0 = arith.constant 0 : index
    %c0_0 = arith.constant 0 : index
    %c0_1 = arith.constant 0 : index
    %0 = vector.load %arg0[%c0, %c0_0, %c0_1] : memref<3x8x128xf32, #tpu.memory_space<vmem>>, vector<1x8x128xf32>
    %1 = vector.shape_cast %0 : vector<1x8x128xf32> to vector<8x128xf32>
    %2 = arith.truncf %1 : vector<8x128xf32> to vector<8x128xbf16>
    %c1 = arith.constant 1 : index
    %c0_2 = arith.constant 0 : index
    %c0_3 = arith.constant 0 : index
    %3 = vector.load %arg0[%c1, %c0_2, %c0_3] : memref<3x8x128xf32, #tpu.memory_space<vmem>>, vector<1x8x128xf32>
    %4 = vector.shape_cast %3 : vector<1x8x128xf32> to vector<8x128xf32>
    %5 = arith.truncf %4 : vector<8x128xf32> to vector<8x128xbf16>
    %c2 = arith.constant 2 : index
    %c0_4 = arith.constant 0 : index
    %c0_5 = arith.constant 0 : index
    %6 = vector.load %arg0[%c2, %c0_4, %c0_5] : memref<3x8x128xf32, #tpu.memory_space<vmem>>, vector<1x8x128xf32>
    %7 = vector.shape_cast %6 : vector<1x8x128xf32> to vector<8x128xf32>
    %8 = arith.truncf %7 : vector<8x128xf32> to vector<8x128xbf16>
    %c0_6 = arith.constant 0 : index
    %c0_7 = arith.constant 0 : index
    %c0_8 = arith.constant 0 : index
    %9 = vector.load %arg1[%c0_6, %c0_7, %c0_8] : memref<3x8x128xf32, #tpu.memory_space<vmem>>, vector<1x8x128xf32>
    %10 = vector.shape_cast %9 : vector<1x8x128xf32> to vector<8x128xf32>
    %c1_9 = arith.constant 1 : index
    %c0_10 = arith.constant 0 : index
    %c0_11 = arith.constant 0 : index
    %11 = vector.load %arg1[%c1_9, %c0_10, %c0_11] : memref<3x8x128xf32, #tpu.memory_space<vmem>>, vector<1x8x128xf32>
    %12 = vector.shape_cast %11 : vector<1x8x128xf32> to vector<8x128xf32>
    %c2_12 = arith.constant 2 : index
    %c0_13 = arith.constant 0 : index
    %c0_14 = arith.constant 0 : index
    %13 = vector.load %arg1[%c2_12, %c0_13, %c0_14] : memref<3x8x128xf32, #tpu.memory_space<vmem>>, vector<1x8x128xf32>
    %14 = vector.shape_cast %13 : vector<1x8x128xf32> to vector<8x128xf32>
    %c0_15 = arith.constant 0 : index
    %c0_16 = arith.constant 0 : index
    %c0_17 = arith.constant 0 : index
    %15 = vector.load %arg3[%c0_15, %c0_16, %c0_17] : memref<3x128x512xbf16, #tpu.memory_space<vmem>>, vector<1x128x512xbf16>
    %16 = vector.shape_cast %15 : vector<1x128x512xbf16> to vector<128x512xbf16>
    %cst = arith.constant dense<0.000000e+00> : vector<8x512xf32>
    %17 = tpu.matmul %2, %16, %cst {dimension_numbers = #tpu.dot_dimension_numbers<[1], [0], [0], [1], [0, 0, 1, 1], [], []>} : vector<8x128xbf16>, vector<128x512xbf16>, vector<8x512xf32> -> vector<8x512xf32>
    %c0_18 = arith.constant 0 : index
    %c0_19 = arith.constant 0 : index
    %c0_20 = arith.constant 0 : index
    %18 = vector.load %arg4[%c0_18, %c0_19, %c0_20] : memref<3x1x512xf32, #tpu.memory_space<vmem>>, vector<1x1x512xf32>
    %19 = vector.shape_cast %18 : vector<1x1x512xf32> to vector<1x512xf32>
    %20 = vector.broadcast %19 : vector<1x512xf32> to vector<8x512xf32>
    %21 = arith.addf %17, %20 : vector<8x512xf32>
    %c1_21 = arith.constant 1 : index
    %c0_22 = arith.constant 0 : index
    %c0_23 = arith.constant 0 : index
    %22 = vector.load %arg3[%c1_21, %c0_22, %c0_23] : memref<3x128x512xbf16, #tpu.memory_space<vmem>>, vector<1x128x512xbf16>
    %23 = vector.shape_cast %22 : vector<1x128x512xbf16> to vector<128x512xbf16>
    %cst_24 = arith.constant dense<0.000000e+00> : vector<8x512xf32>
    %24 = tpu.matmul %5, %23, %cst_24 {dimension_numbers = #tpu.dot_dimension_numbers<[1], [0], [0], [1], [0, 0, 1, 1], [], []>} : vector<8x128xbf16>, vector<128x512xbf16>, vector<8x512xf32> -> vector<8x512xf32>
    %c1_25 = arith.constant 1 : index
    %c0_26 = arith.constant 0 : index
    %c0_27 = arith.constant 0 : index
    %25 = vector.load %arg4[%c1_25, %c0_26, %c0_27] : memref<3x1x512xf32, #tpu.memory_space<vmem>>, vector<1x1x512xf32>
    %26 = vector.shape_cast %25 : vector<1x1x512xf32> to vector<1x512xf32>
    %27 = vector.broadcast %26 : vector<1x512xf32> to vector<8x512xf32>
    %28 = arith.addf %24, %27 : vector<8x512xf32>
    %c2_28 = arith.constant 2 : index
    %c0_29 = arith.constant 0 : index
    %c0_30 = arith.constant 0 : index
    %29 = vector.load %arg3[%c2_28, %c0_29, %c0_30] : memref<3x128x512xbf16, #tpu.memory_space<vmem>>, vector<1x128x512xbf16>
    %30 = vector.shape_cast %29 : vector<1x128x512xbf16> to vector<128x512xbf16>
    %cst_31 = arith.constant dense<0.000000e+00> : vector<8x512xf32>
    %31 = tpu.matmul %8, %30, %cst_31 {dimension_numbers = #tpu.dot_dimension_numbers<[1], [0], [0], [1], [0, 0, 1, 1], [], []>} : vector<8x128xbf16>, vector<128x512xbf16>, vector<8x512xf32> -> vector<8x512xf32>
    %c2_32 = arith.constant 2 : index
    %c0_33 = arith.constant 0 : index
    %c0_34 = arith.constant 0 : index
    %32 = vector.load %arg4[%c2_32, %c0_33, %c0_34] : memref<3x1x512xf32, #tpu.memory_space<vmem>>, vector<1x1x512xf32>
    %33 = vector.shape_cast %32 : vector<1x1x512xf32> to vector<1x512xf32>
    %34 = vector.broadcast %33 : vector<1x512xf32> to vector<8x512xf32>
    %35 = arith.addf %31, %34 : vector<8x512xf32>
    %c0_35 = arith.constant 0 : index
    %c0_36 = arith.constant 0 : index
    %c0_37 = arith.constant 0 : index
    %36 = vector.load %arg2[%c0_35, %c0_36, %c0_37] : memref<3x128x512xbf16, #tpu.memory_space<vmem>>, vector<1x128x512xbf16>
    %37 = vector.shape_cast %36 : vector<1x128x512xbf16> to vector<128x512xbf16>
    %cst_38 = arith.constant dense<0.000000e+00> : vector<8x512xf32>
    %38 = tpu.matmul %8, %37, %cst_38 {dimension_numbers = #tpu.dot_dimension_numbers<[1], [0], [0], [1], [0, 0, 1, 1], [], []>} : vector<8x128xbf16>, vector<128x512xbf16>, vector<8x512xf32> -> vector<8x512xf32>
    %39 = arith.addf %38, %21 : vector<8x512xf32>
    %40 = vector.extract_strided_slice %39 {offsets = [0, 0], sizes = [8, 384], strides = [1, 1]} : vector<8x512xf32> to vector<8x384xf32>
    %cst_39 = arith.constant 5.000000e-01 : f32
    %41 = vector.broadcast %cst_39 : f32 to vector<8x384xf32>
    %42 = arith.mulf %41, %40 : vector<8x384xf32>
    %43 = math.tanh %42 : vector<8x384xf32>
    %cst_40 = arith.constant 1.000000e+00 : f32
    %44 = vector.broadcast %cst_40 : f32 to vector<8x384xf32>
    %45 = arith.addf %43, %44 : vector<8x384xf32>
    %cst_41 = arith.constant 5.000000e-01 : f32
    %46 = vector.broadcast %cst_41 : f32 to vector<8x384xf32>
    %47 = arith.mulf %46, %45 : vector<8x384xf32>
    %48 = vector.extract_strided_slice %47 {offsets = [0, 0], sizes = [8, 128], strides = [1, 1]} : vector<8x384xf32> to vector<8x128xf32>
    %49 = vector.extract_strided_slice %47 {offsets = [0, 128], sizes = [8, 128], strides = [1, 1]} : vector<8x384xf32> to vector<8x128xf32>
    %50 = vector.extract_strided_slice %47 {offsets = [0, 256], sizes = [8, 128], strides = [1, 1]} : vector<8x384xf32> to vector<8x128xf32>
    %51 = vector.extract_strided_slice %39 {offsets = [0, 384], sizes = [8, 128], strides = [1, 1]} : vector<8x512xf32> to vector<8x128xf32>
    %52 = math.tanh %51 : vector<8x128xf32>
    %53 = arith.mulf %49, %10 : vector<8x128xf32>
    %54 = arith.mulf %48, %52 : vector<8x128xf32>
    %55 = arith.addf %53, %54 : vector<8x128xf32>
    %56 = math.tanh %55 : vector<8x128xf32>
    %57 = arith.mulf %50, %56 : vector<8x128xf32>
    %58 = arith.truncf %57 : vector<8x128xf32> to vector<8x128xbf16>
    %c1_42 = arith.constant 1 : index
    %c0_43 = arith.constant 0 : index
    %c0_44 = arith.constant 0 : index
    %59 = vector.load %arg2[%c1_42, %c0_43, %c0_44] : memref<3x128x512xbf16, #tpu.memory_space<vmem>>, vector<1x128x512xbf16>
    %60 = vector.shape_cast %59 : vector<1x128x512xbf16> to vector<128x512xbf16>
    %cst_45 = arith.constant dense<0.000000e+00> : vector<8x512xf32>
    %61 = tpu.matmul %58, %60, %cst_45 {dimension_numbers = #tpu.dot_dimension_numbers<[1], [0], [0], [1], [0, 0, 1, 1], [], []>} : vector<8x128xbf16>, vector<128x512xbf16>, vector<8x512xf32> -> vector<8x512xf32>
    %62 = arith.addf %61, %28 : vector<8x512xf32>
    %63 = vector.extract_strided_slice %62 {offsets = [0, 0], sizes = [8, 384], strides = [1, 1]} : vector<8x512xf32> to vector<8x384xf32>
    %cst_46 = arith.constant 5.000000e-01 : f32
    %64 = vector.broadcast %cst_46 : f32 to vector<8x384xf32>
    %65 = arith.mulf %64, %63 : vector<8x384xf32>
    %66 = math.tanh %65 : vector<8x384xf32>
    %cst_47 = arith.constant 1.000000e+00 : f32
    %67 = vector.broadcast %cst_47 : f32 to vector<8x384xf32>
    %68 = arith.addf %66, %67 : vector<8x384xf32>
    %cst_48 = arith.constant 5.000000e-01 : f32
    %69 = vector.broadcast %cst_48 : f32 to vector<8x384xf32>
    %70 = arith.mulf %69, %68 : vector<8x384xf32>
    %71 = vector.extract_strided_slice %70 {offsets = [0, 0], sizes = [8, 128], strides = [1, 1]} : vector<8x384xf32> to vector<8x128xf32>
    %72 = vector.extract_strided_slice %70 {offsets = [0, 128], sizes = [8, 128], strides = [1, 1]} : vector<8x384xf32> to vector<8x128xf32>
    %73 = vector.extract_strided_slice %70 {offsets = [0, 256], sizes = [8, 128], strides = [1, 1]} : vector<8x384xf32> to vector<8x128xf32>
    %74 = vector.extract_strided_slice %62 {offsets = [0, 384], sizes = [8, 128], strides = [1, 1]} : vector<8x512xf32> to vector<8x128xf32>
    %75 = math.tanh %74 : vector<8x128xf32>
    %76 = arith.mulf %72, %12 : vector<8x128xf32>
    %77 = arith.mulf %71, %75 : vector<8x128xf32>
    %78 = arith.addf %76, %77 : vector<8x128xf32>
    %79 = math.tanh %78 : vector<8x128xf32>
    %80 = arith.mulf %73, %79 : vector<8x128xf32>
    %81 = arith.truncf %80 : vector<8x128xf32> to vector<8x128xbf16>
    %c2_49 = arith.constant 2 : index
    %c0_50 = arith.constant 0 : index
    %c0_51 = arith.constant 0 : index
    %82 = vector.load %arg2[%c2_49, %c0_50, %c0_51] : memref<3x128x512xbf16, #tpu.memory_space<vmem>>, vector<1x128x512xbf16>
    %83 = vector.shape_cast %82 : vector<1x128x512xbf16> to vector<128x512xbf16>
    %cst_52 = arith.constant dense<0.000000e+00> : vector<8x512xf32>
    %84 = tpu.matmul %81, %83, %cst_52 {dimension_numbers = #tpu.dot_dimension_numbers<[1], [0], [0], [1], [0, 0, 1, 1], [], []>} : vector<8x128xbf16>, vector<128x512xbf16>, vector<8x512xf32> -> vector<8x512xf32>
    %85 = arith.addf %84, %35 : vector<8x512xf32>
    %86 = vector.extract_strided_slice %85 {offsets = [0, 0], sizes = [8, 384], strides = [1, 1]} : vector<8x512xf32> to vector<8x384xf32>
    %cst_53 = arith.constant 5.000000e-01 : f32
    %87 = vector.broadcast %cst_53 : f32 to vector<8x384xf32>
    %88 = arith.mulf %87, %86 : vector<8x384xf32>
    %89 = math.tanh %88 : vector<8x384xf32>
    %cst_54 = arith.constant 1.000000e+00 : f32
    %90 = vector.broadcast %cst_54 : f32 to vector<8x384xf32>
    %91 = arith.addf %89, %90 : vector<8x384xf32>
    %cst_55 = arith.constant 5.000000e-01 : f32
    %92 = vector.broadcast %cst_55 : f32 to vector<8x384xf32>
    %93 = arith.mulf %92, %91 : vector<8x384xf32>
    %94 = vector.extract_strided_slice %93 {offsets = [0, 0], sizes = [8, 128], strides = [1, 1]} : vector<8x384xf32> to vector<8x128xf32>
    %95 = vector.extract_strided_slice %93 {offsets = [0, 128], sizes = [8, 128], strides = [1, 1]} : vector<8x384xf32> to vector<8x128xf32>
    %96 = vector.extract_strided_slice %93 {offsets = [0, 256], sizes = [8, 128], strides = [1, 1]} : vector<8x384xf32> to vector<8x128xf32>
    %97 = vector.extract_strided_slice %85 {offsets = [0, 384], sizes = [8, 128], strides = [1, 1]} : vector<8x512xf32> to vector<8x128xf32>
    %98 = math.tanh %97 : vector<8x128xf32>
    %99 = arith.mulf %95, %14 : vector<8x128xf32>
    %100 = arith.mulf %94, %98 : vector<8x128xf32>
    %101 = arith.addf %99, %100 : vector<8x128xf32>
    %102 = math.tanh %101 : vector<8x128xf32>
    %103 = arith.mulf %96, %102 : vector<8x128xf32>
    %104 = arith.truncf %103 : vector<8x128xf32> to vector<8x128xbf16>
    %c0_56 = arith.constant 0 : index
    %c0_57 = arith.constant 0 : index
    %c0_58 = arith.constant 0 : index
    %105 = vector.load %arg5[%c0_56, %c0_57, %c0_58] : memref<4x8x128xf32, #tpu.memory_space<vmem>>, vector<1x8x128xf32>
    %106 = vector.shape_cast %105 : vector<1x8x128xf32> to vector<8x128xf32>
    %107 = vector.shape_cast %103 : vector<8x128xf32> to vector<1x8x128xf32>
    tpu.vector_store %arg5[%c0_56, %c0_57, %c0_58], %107 {strides = array<i32>} : memref<4x8x128xf32, #tpu.memory_space<vmem>>, vector<1x8x128xf32>,
    %c0_59 = arith.constant 0 : index
    %c0_60 = arith.constant 0 : index
    %c0_61 = arith.constant 0 : index
    %108 = vector.load %arg3[%c0_59, %c0_60, %c0_61] : memref<3x128x512xbf16, #tpu.memory_space<vmem>>, vector<1x128x512xbf16>
    %109 = vector.shape_cast %108 : vector<1x128x512xbf16> to vector<128x512xbf16>
    %cst_62 = arith.constant dense<0.000000e+00> : vector<8x512xf32>
    %110 = tpu.matmul %58, %109, %cst_62 {dimension_numbers = #tpu.dot_dimension_numbers<[1], [0], [0], [1], [0, 0, 1, 1], [], []>} : vector<8x128xbf16>, vector<128x512xbf16>, vector<8x512xf32> -> vector<8x512xf32>
    %c0_63 = arith.constant 0 : index
    %c0_64 = arith.constant 0 : index
    %c0_65 = arith.constant 0 : index
    %111 = vector.load %arg4[%c0_63, %c0_64, %c0_65] : memref<3x1x512xf32, #tpu.memory_space<vmem>>, vector<1x1x512xf32>
    %112 = vector.shape_cast %111 : vector<1x1x512xf32> to vector<1x512xf32>
    %113 = vector.broadcast %112 : vector<1x512xf32> to vector<8x512xf32>
    %114 = arith.addf %110, %113 : vector<8x512xf32>
    %c1_66 = arith.constant 1 : index
    %c0_67 = arith.constant 0 : index
    %c0_68 = arith.constant 0 : index
    %115 = vector.load %arg3[%c1_66, %c0_67, %c0_68] : memref<3x128x512xbf16, #tpu.memory_space<vmem>>, vector<1x128x512xbf16>
    %116 = vector.shape_cast %115 : vector<1x128x512xbf16> to vector<128x512xbf16>
    %cst_69 = arith.constant dense<0.000000e+00> : vector<8x512xf32>
    %117 = tpu.matmul %81, %116, %cst_69 {dimension_numbers = #tpu.dot_dimension_numbers<[1], [0], [0], [1], [0, 0, 1, 1], [], []>} : vector<8x128xbf16>, vector<128x512xbf16>, vector<8x512xf32> -> vector<8x512xf32>
    %c1_70 = arith.constant 1 : index
    %c0_71 = arith.constant 0 : index
    %c0_72 = arith.constant 0 : index
    %118 = vector.load %arg4[%c1_70, %c0_71, %c0_72] : memref<3x1x512xf32, #tpu.memory_space<vmem>>, vector<1x1x512xf32>
    %119 = vector.shape_cast %118 : vector<1x1x512xf32> to vector<1x512xf32>
    %120 = vector.broadcast %119 : vector<1x512xf32> to vector<8x512xf32>
    %121 = arith.addf %117, %120 : vector<8x512xf32>
    %c2_73 = arith.constant 2 : index
    %c0_74 = arith.constant 0 : index
    %c0_75 = arith.constant 0 : index
    %122 = vector.load %arg3[%c2_73, %c0_74, %c0_75] : memref<3x128x512xbf16, #tpu.memory_space<vmem>>, vector<1x128x512xbf16>
    %123 = vector.shape_cast %122 : vector<1x128x512xbf16> to vector<128x512xbf16>
    %cst_76 = arith.constant dense<0.000000e+00> : vector<8x512xf32>
    %124 = tpu.matmul %104, %123, %cst_76 {dimension_numbers = #tpu.dot_dimension_numbers<[1], [0], [0], [1], [0, 0, 1, 1], [], []>} : vector<8x128xbf16>, vector<128x512xbf16>, vector<8x512xf32> -> vector<8x512xf32>
    %c2_77 = arith.constant 2 : index
    %c0_78 = arith.constant 0 : index
    %c0_79 = arith.constant 0 : index
    %125 = vector.load %arg4[%c2_77, %c0_78, %c0_79] : memref<3x1x512xf32, #tpu.memory_space<vmem>>, vector<1x1x512xf32>
    %126 = vector.shape_cast %125 : vector<1x1x512xf32> to vector<1x512xf32>
    %127 = vector.broadcast %126 : vector<1x512xf32> to vector<8x512xf32>
    %128 = arith.addf %124, %127 : vector<8x512xf32>
    %c0_80 = arith.constant 0 : index
    %c0_81 = arith.constant 0 : index
    %c0_82 = arith.constant 0 : index
    %129 = vector.load %arg2[%c0_80, %c0_81, %c0_82] : memref<3x128x512xbf16, #tpu.memory_space<vmem>>, vector<1x128x512xbf16>
    %130 = vector.shape_cast %129 : vector<1x128x512xbf16> to vector<128x512xbf16>
    %cst_83 = arith.constant dense<0.000000e+00> : vector<8x512xf32>
    %131 = tpu.matmul %104, %130, %cst_83 {dimension_numbers = #tpu.dot_dimension_numbers<[1], [0], [0], [1], [0, 0, 1, 1], [], []>} : vector<8x128xbf16>, vector<128x512xbf16>, vector<8x512xf32> -> vector<8x512xf32>
    %132 = arith.addf %131, %114 : vector<8x512xf32>
    %133 = vector.extract_strided_slice %132 {offsets = [0, 0], sizes = [8, 384], strides = [1, 1]} : vector<8x512xf32> to vector<8x384xf32>
    %cst_84 = arith.constant 5.000000e-01 : f32
    %134 = vector.broadcast %cst_84 : f32 to vector<8x384xf32>
    %135 = arith.mulf %134, %133 : vector<8x384xf32>
    %136 = math.tanh %135 : vector<8x384xf32>
    %cst_85 = arith.constant 1.000000e+00 : f32
    %137 = vector.broadcast %cst_85 : f32 to vector<8x384xf32>
    %138 = arith.addf %136, %137 : vector<8x384xf32>
    %cst_86 = arith.constant 5.000000e-01 : f32
    %139 = vector.broadcast %cst_86 : f32 to vector<8x384xf32>
    %140 = arith.mulf %139, %138 : vector<8x384xf32>
    %141 = vector.extract_strided_slice %140 {offsets = [0, 0], sizes = [8, 128], strides = [1, 1]} : vector<8x384xf32> to vector<8x128xf32>
    %142 = vector.extract_strided_slice %140 {offsets = [0, 128], sizes = [8, 128], strides = [1, 1]} : vector<8x384xf32> to vector<8x128xf32>
    %143 = vector.extract_strided_slice %140 {offsets = [0, 256], sizes = [8, 128], strides = [1, 1]} : vector<8x384xf32> to vector<8x128xf32>
    %144 = vector.extract_strided_slice %132 {offsets = [0, 384], sizes = [8, 128], strides = [1, 1]} : vector<8x512xf32> to vector<8x128xf32>
    %145 = math.tanh %144 : vector<8x128xf32>
    %146 = arith.mulf %142, %55 : vector<8x128xf32>
    %147 = arith.mulf %141, %145 : vector<8x128xf32>
    %148 = arith.addf %146, %147 : vector<8x128xf32>
    %149 = math.tanh %148 : vector<8x128xf32>
    %150 = arith.mulf %143, %149 : vector<8x128xf32>
    %151 = arith.truncf %150 : vector<8x128xf32> to vector<8x128xbf16>
    %c1_87 = arith.constant 1 : index
    %c0_88 = arith.constant 0 : index
    %c0_89 = arith.constant 0 : index
    %152 = vector.load %arg2[%c1_87, %c0_88, %c0_89] : memref<3x128x512xbf16, #tpu.memory_space<vmem>>, vector<1x128x512xbf16>
    %153 = vector.shape_cast %152 : vector<1x128x512xbf16> to vector<128x512xbf16>
    %cst_90 = arith.constant dense<0.000000e+00> : vector<8x512xf32>
    %154 = tpu.matmul %151, %153, %cst_90 {dimension_numbers = #tpu.dot_dimension_numbers<[1], [0], [0], [1], [0, 0, 1, 1], [], []>} : vector<8x128xbf16>, vector<128x512xbf16>, vector<8x512xf32> -> vector<8x512xf32>
    %155 = arith.addf %154, %121 : vector<8x512xf32>
    %156 = vector.extract_strided_slice %155 {offsets = [0, 0], sizes = [8, 384], strides = [1, 1]} : vector<8x512xf32> to vector<8x384xf32>
    %cst_91 = arith.constant 5.000000e-01 : f32
    %157 = vector.broadcast %cst_91 : f32 to vector<8x384xf32>
    %158 = arith.mulf %157, %156 : vector<8x384xf32>
    %159 = math.tanh %158 : vector<8x384xf32>
    %cst_92 = arith.constant 1.000000e+00 : f32
    %160 = vector.broadcast %cst_92 : f32 to vector<8x384xf32>
    %161 = arith.addf %159, %160 : vector<8x384xf32>
    %cst_93 = arith.constant 5.000000e-01 : f32
    %162 = vector.broadcast %cst_93 : f32 to vector<8x384xf32>
    %163 = arith.mulf %162, %161 : vector<8x384xf32>
    %164 = vector.extract_strided_slice %163 {offsets = [0, 0], sizes = [8, 128], strides = [1, 1]} : vector<8x384xf32> to vector<8x128xf32>
    %165 = vector.extract_strided_slice %163 {offsets = [0, 128], sizes = [8, 128], strides = [1, 1]} : vector<8x384xf32> to vector<8x128xf32>
    %166 = vector.extract_strided_slice %163 {offsets = [0, 256], sizes = [8, 128], strides = [1, 1]} : vector<8x384xf32> to vector<8x128xf32>
    %167 = vector.extract_strided_slice %155 {offsets = [0, 384], sizes = [8, 128], strides = [1, 1]} : vector<8x512xf32> to vector<8x128xf32>
    %168 = math.tanh %167 : vector<8x128xf32>
    %169 = arith.mulf %165, %78 : vector<8x128xf32>
    %170 = arith.mulf %164, %168 : vector<8x128xf32>
    %171 = arith.addf %169, %170 : vector<8x128xf32>
    %172 = math.tanh %171 : vector<8x128xf32>
    %173 = arith.mulf %166, %172 : vector<8x128xf32>
    %174 = arith.truncf %173 : vector<8x128xf32> to vector<8x128xbf16>
    %c2_94 = arith.constant 2 : index
    %c0_95 = arith.constant 0 : index
    %c0_96 = arith.constant 0 : index
    %175 = vector.load %arg2[%c2_94, %c0_95, %c0_96] : memref<3x128x512xbf16, #tpu.memory_space<vmem>>, vector<1x128x512xbf16>
    %176 = vector.shape_cast %175 : vector<1x128x512xbf16> to vector<128x512xbf16>
    %cst_97 = arith.constant dense<0.000000e+00> : vector<8x512xf32>
    %177 = tpu.matmul %174, %176, %cst_97 {dimension_numbers = #tpu.dot_dimension_numbers<[1], [0], [0], [1], [0, 0, 1, 1], [], []>} : vector<8x128xbf16>, vector<128x512xbf16>, vector<8x512xf32> -> vector<8x512xf32>
    %178 = arith.addf %177, %128 : vector<8x512xf32>
    %179 = vector.extract_strided_slice %178 {offsets = [0, 0], sizes = [8, 384], strides = [1, 1]} : vector<8x512xf32> to vector<8x384xf32>
    %cst_98 = arith.constant 5.000000e-01 : f32
    %180 = vector.broadcast %cst_98 : f32 to vector<8x384xf32>
    %181 = arith.mulf %180, %179 : vector<8x384xf32>
    %182 = math.tanh %181 : vector<8x384xf32>
    %cst_99 = arith.constant 1.000000e+00 : f32
    %183 = vector.broadcast %cst_99 : f32 to vector<8x384xf32>
    %184 = arith.addf %182, %183 : vector<8x384xf32>
    %cst_100 = arith.constant 5.000000e-01 : f32
    %185 = vector.broadcast %cst_100 : f32 to vector<8x384xf32>
    %186 = arith.mulf %185, %184 : vector<8x384xf32>
    %187 = vector.extract_strided_slice %186 {offsets = [0, 0], sizes = [8, 128], strides = [1, 1]} : vector<8x384xf32> to vector<8x128xf32>
    %188 = vector.extract_strided_slice %186 {offsets = [0, 128], sizes = [8, 128], strides = [1, 1]} : vector<8x384xf32> to vector<8x128xf32>
    %189 = vector.extract_strided_slice %186 {offsets = [0, 256], sizes = [8, 128], strides = [1, 1]} : vector<8x384xf32> to vector<8x128xf32>
    %190 = vector.extract_strided_slice %178 {offsets = [0, 384], sizes = [8, 128], strides = [1, 1]} : vector<8x512xf32> to vector<8x128xf32>
    %191 = math.tanh %190 : vector<8x128xf32>
    %192 = arith.mulf %188, %101 : vector<8x128xf32>
    %193 = arith.mulf %187, %191 : vector<8x128xf32>
    %194 = arith.addf %192, %193 : vector<8x128xf32>
    %195 = math.tanh %194 : vector<8x128xf32>
    %196 = arith.mulf %189, %195 : vector<8x128xf32>
    %197 = arith.truncf %196 : vector<8x128xf32> to vector<8x128xbf16>
    %c1_101 = arith.constant 1 : index
    %c0_102 = arith.constant 0 : index
    %c0_103 = arith.constant 0 : index
    %198 = vector.load %arg5[%c1_101, %c0_102, %c0_103] : memref<4x8x128xf32, #tpu.memory_space<vmem>>, vector<1x8x128xf32>
    %199 = vector.shape_cast %198 : vector<1x8x128xf32> to vector<8x128xf32>
    %200 = vector.shape_cast %196 : vector<8x128xf32> to vector<1x8x128xf32>
    tpu.vector_store %arg5[%c1_101, %c0_102, %c0_103], %200 {strides = array<i32>} : memref<4x8x128xf32, #tpu.memory_space<vmem>>, vector<1x8x128xf32>,
    %c0_104 = arith.constant 0 : index
    %c0_105 = arith.constant 0 : index
    %c0_106 = arith.constant 0 : index
    %201 = vector.load %arg3[%c0_104, %c0_105, %c0_106] : memref<3x128x512xbf16, #tpu.memory_space<vmem>>, vector<1x128x512xbf16>
    %202 = vector.shape_cast %201 : vector<1x128x512xbf16> to vector<128x512xbf16>
    %cst_107 = arith.constant dense<0.000000e+00> : vector<8x512xf32>
    %203 = tpu.matmul %151, %202, %cst_107 {dimension_numbers = #tpu.dot_dimension_numbers<[1], [0], [0], [1], [0, 0, 1, 1], [], []>} : vector<8x128xbf16>, vector<128x512xbf16>, vector<8x512xf32> -> vector<8x512xf32>
    %c0_108 = arith.constant 0 : index
    %c0_109 = arith.constant 0 : index
    %c0_110 = arith.constant 0 : index
    %204 = vector.load %arg4[%c0_108, %c0_109, %c0_110] : memref<3x1x512xf32, #tpu.memory_space<vmem>>, vector<1x1x512xf32>
    %205 = vector.shape_cast %204 : vector<1x1x512xf32> to vector<1x512xf32>
    %206 = vector.broadcast %205 : vector<1x512xf32> to vector<8x512xf32>
    %207 = arith.addf %203, %206 : vector<8x512xf32>
    %c1_111 = arith.constant 1 : index
    %c0_112 = arith.constant 0 : index
    %c0_113 = arith.constant 0 : index
    %208 = vector.load %arg3[%c1_111, %c0_112, %c0_113] : memref<3x128x512xbf16, #tpu.memory_space<vmem>>, vector<1x128x512xbf16>
    %209 = vector.shape_cast %208 : vector<1x128x512xbf16> to vector<128x512xbf16>
    %cst_114 = arith.constant dense<0.000000e+00> : vector<8x512xf32>
    %210 = tpu.matmul %174, %209, %cst_114 {dimension_numbers = #tpu.dot_dimension_numbers<[1], [0], [0], [1], [0, 0, 1, 1], [], []>} : vector<8x128xbf16>, vector<128x512xbf16>, vector<8x512xf32> -> vector<8x512xf32>
    %c1_115 = arith.constant 1 : index
    %c0_116 = arith.constant 0 : index
    %c0_117 = arith.constant 0 : index
    %211 = vector.load %arg4[%c1_115, %c0_116, %c0_117] : memref<3x1x512xf32, #tpu.memory_space<vmem>>, vector<1x1x512xf32>
    %212 = vector.shape_cast %211 : vector<1x1x512xf32> to vector<1x512xf32>
    %213 = vector.broadcast %212 : vector<1x512xf32> to vector<8x512xf32>
    %214 = arith.addf %210, %213 : vector<8x512xf32>
    %c2_118 = arith.constant 2 : index
    %c0_119 = arith.constant 0 : index
    %c0_120 = arith.constant 0 : index
    %215 = vector.load %arg3[%c2_118, %c0_119, %c0_120] : memref<3x128x512xbf16, #tpu.memory_space<vmem>>, vector<1x128x512xbf16>
    %216 = vector.shape_cast %215 : vector<1x128x512xbf16> to vector<128x512xbf16>
    %cst_121 = arith.constant dense<0.000000e+00> : vector<8x512xf32>
    %217 = tpu.matmul %197, %216, %cst_121 {dimension_numbers = #tpu.dot_dimension_numbers<[1], [0], [0], [1], [0, 0, 1, 1], [], []>} : vector<8x128xbf16>, vector<128x512xbf16>, vector<8x512xf32> -> vector<8x512xf32>
    %c2_122 = arith.constant 2 : index
    %c0_123 = arith.constant 0 : index
    %c0_124 = arith.constant 0 : index
    %218 = vector.load %arg4[%c2_122, %c0_123, %c0_124] : memref<3x1x512xf32, #tpu.memory_space<vmem>>, vector<1x1x512xf32>
    %219 = vector.shape_cast %218 : vector<1x1x512xf32> to vector<1x512xf32>
    %220 = vector.broadcast %219 : vector<1x512xf32> to vector<8x512xf32>
    %221 = arith.addf %217, %220 : vector<8x512xf32>
    %c0_125 = arith.constant 0 : index
    %c0_126 = arith.constant 0 : index
    %c0_127 = arith.constant 0 : index
    %222 = vector.load %arg2[%c0_125, %c0_126, %c0_127] : memref<3x128x512xbf16, #tpu.memory_space<vmem>>, vector<1x128x512xbf16>
    %223 = vector.shape_cast %222 : vector<1x128x512xbf16> to vector<128x512xbf16>
    %cst_128 = arith.constant dense<0.000000e+00> : vector<8x512xf32>
    %224 = tpu.matmul %197, %223, %cst_128 {dimension_numbers = #tpu.dot_dimension_numbers<[1], [0], [0], [1], [0, 0, 1, 1], [], []>} : vector<8x128xbf16>, vector<128x512xbf16>, vector<8x512xf32> -> vector<8x512xf32>
    %225 = arith.addf %224, %207 : vector<8x512xf32>
    %226 = vector.extract_strided_slice %225 {offsets = [0, 0], sizes = [8, 384], strides = [1, 1]} : vector<8x512xf32> to vector<8x384xf32>
    %cst_129 = arith.constant 5.000000e-01 : f32
    %227 = vector.broadcast %cst_129 : f32 to vector<8x384xf32>
    %228 = arith.mulf %227, %226 : vector<8x384xf32>
    %229 = math.tanh %228 : vector<8x384xf32>
    %cst_130 = arith.constant 1.000000e+00 : f32
    %230 = vector.broadcast %cst_130 : f32 to vector<8x384xf32>
    %231 = arith.addf %229, %230 : vector<8x384xf32>
    %cst_131 = arith.constant 5.000000e-01 : f32
    %232 = vector.broadcast %cst_131 : f32 to vector<8x384xf32>
    %233 = arith.mulf %232, %231 : vector<8x384xf32>
    %234 = vector.extract_strided_slice %233 {offsets = [0, 0], sizes = [8, 128], strides = [1, 1]} : vector<8x384xf32> to vector<8x128xf32>
    %235 = vector.extract_strided_slice %233 {offsets = [0, 128], sizes = [8, 128], strides = [1, 1]} : vector<8x384xf32> to vector<8x128xf32>
    %236 = vector.extract_strided_slice %233 {offsets = [0, 256], sizes = [8, 128], strides = [1, 1]} : vector<8x384xf32> to vector<8x128xf32>
    %237 = vector.extract_strided_slice %225 {offsets = [0, 384], sizes = [8, 128], strides = [1, 1]} : vector<8x512xf32> to vector<8x128xf32>
    %238 = math.tanh %237 : vector<8x128xf32>
    %239 = arith.mulf %235, %148 : vector<8x128xf32>
    %240 = arith.mulf %234, %238 : vector<8x128xf32>
    %241 = arith.addf %239, %240 : vector<8x128xf32>
    %242 = math.tanh %241 : vector<8x128xf32>
    %243 = arith.mulf %236, %242 : vector<8x128xf32>
    %244 = arith.truncf %243 : vector<8x128xf32> to vector<8x128xbf16>
    %c1_132 = arith.constant 1 : index
    %c0_133 = arith.constant 0 : index
    %c0_134 = arith.constant 0 : index
    %245 = vector.load %arg2[%c1_132, %c0_133, %c0_134] : memref<3x128x512xbf16, #tpu.memory_space<vmem>>, vector<1x128x512xbf16>
    %246 = vector.shape_cast %245 : vector<1x128x512xbf16> to vector<128x512xbf16>
    %cst_135 = arith.constant dense<0.000000e+00> : vector<8x512xf32>
    %247 = tpu.matmul %244, %246, %cst_135 {dimension_numbers = #tpu.dot_dimension_numbers<[1], [0], [0], [1], [0, 0, 1, 1], [], []>} : vector<8x128xbf16>, vector<128x512xbf16>, vector<8x512xf32> -> vector<8x512xf32>
    %248 = arith.addf %247, %214 : vector<8x512xf32>
    %249 = vector.extract_strided_slice %248 {offsets = [0, 0], sizes = [8, 384], strides = [1, 1]} : vector<8x512xf32> to vector<8x384xf32>
    %cst_136 = arith.constant 5.000000e-01 : f32
    %250 = vector.broadcast %cst_136 : f32 to vector<8x384xf32>
    %251 = arith.mulf %250, %249 : vector<8x384xf32>
    %252 = math.tanh %251 : vector<8x384xf32>
    %cst_137 = arith.constant 1.000000e+00 : f32
    %253 = vector.broadcast %cst_137 : f32 to vector<8x384xf32>
    %254 = arith.addf %252, %253 : vector<8x384xf32>
    %cst_138 = arith.constant 5.000000e-01 : f32
    %255 = vector.broadcast %cst_138 : f32 to vector<8x384xf32>
    %256 = arith.mulf %255, %254 : vector<8x384xf32>
    %257 = vector.extract_strided_slice %256 {offsets = [0, 0], sizes = [8, 128], strides = [1, 1]} : vector<8x384xf32> to vector<8x128xf32>
    %258 = vector.extract_strided_slice %256 {offsets = [0, 128], sizes = [8, 128], strides = [1, 1]} : vector<8x384xf32> to vector<8x128xf32>
    %259 = vector.extract_strided_slice %256 {offsets = [0, 256], sizes = [8, 128], strides = [1, 1]} : vector<8x384xf32> to vector<8x128xf32>
    %260 = vector.extract_strided_slice %248 {offsets = [0, 384], sizes = [8, 128], strides = [1, 1]} : vector<8x512xf32> to vector<8x128xf32>
    %261 = math.tanh %260 : vector<8x128xf32>
    %262 = arith.mulf %258, %171 : vector<8x128xf32>
    %263 = arith.mulf %257, %261 : vector<8x128xf32>
    %264 = arith.addf %262, %263 : vector<8x128xf32>
    %265 = math.tanh %264 : vector<8x128xf32>
    %266 = arith.mulf %259, %265 : vector<8x128xf32>
    %267 = arith.truncf %266 : vector<8x128xf32> to vector<8x128xbf16>
    %c2_139 = arith.constant 2 : index
    %c0_140 = arith.constant 0 : index
    %c0_141 = arith.constant 0 : index
    %268 = vector.load %arg2[%c2_139, %c0_140, %c0_141] : memref<3x128x512xbf16, #tpu.memory_space<vmem>>, vector<1x128x512xbf16>
    %269 = vector.shape_cast %268 : vector<1x128x512xbf16> to vector<128x512xbf16>
    %cst_142 = arith.constant dense<0.000000e+00> : vector<8x512xf32>
    %270 = tpu.matmul %267, %269, %cst_142 {dimension_numbers = #tpu.dot_dimension_numbers<[1], [0], [0], [1], [0, 0, 1, 1], [], []>} : vector<8x128xbf16>, vector<128x512xbf16>, vector<8x512xf32> -> vector<8x512xf32>
    %271 = arith.addf %270, %221 : vector<8x512xf32>
    %272 = vector.extract_strided_slice %271 {offsets = [0, 0], sizes = [8, 384], strides = [1, 1]} : vector<8x512xf32> to vector<8x384xf32>
    %cst_143 = arith.constant 5.000000e-01 : f32
    %273 = vector.broadcast %cst_143 : f32 to vector<8x384xf32>
    %274 = arith.mulf %273, %272 : vector<8x384xf32>
    %275 = math.tanh %274 : vector<8x384xf32>
    %cst_144 = arith.constant 1.000000e+00 : f32
    %276 = vector.broadcast %cst_144 : f32 to vector<8x384xf32>
    %277 = arith.addf %275, %276 : vector<8x384xf32>
    %cst_145 = arith.constant 5.000000e-01 : f32
    %278 = vector.broadcast %cst_145 : f32 to vector<8x384xf32>
    %279 = arith.mulf %278, %277 : vector<8x384xf32>
    %280 = vector.extract_strided_slice %279 {offsets = [0, 0], sizes = [8, 128], strides = [1, 1]} : vector<8x384xf32> to vector<8x128xf32>
    %281 = vector.extract_strided_slice %279 {offsets = [0, 128], sizes = [8, 128], strides = [1, 1]} : vector<8x384xf32> to vector<8x128xf32>
    %282 = vector.extract_strided_slice %279 {offsets = [0, 256], sizes = [8, 128], strides = [1, 1]} : vector<8x384xf32> to vector<8x128xf32>
    %283 = vector.extract_strided_slice %271 {offsets = [0, 384], sizes = [8, 128], strides = [1, 1]} : vector<8x512xf32> to vector<8x128xf32>
    %284 = math.tanh %283 : vector<8x128xf32>
    %285 = arith.mulf %281, %194 : vector<8x128xf32>
    %286 = arith.mulf %280, %284 : vector<8x128xf32>
    %287 = arith.addf %285, %286 : vector<8x128xf32>
    %288 = math.tanh %287 : vector<8x128xf32>
    %289 = arith.mulf %282, %288 : vector<8x128xf32>
    %290 = arith.truncf %289 : vector<8x128xf32> to vector<8x128xbf16>
    %c2_146 = arith.constant 2 : index
    %c0_147 = arith.constant 0 : index
    %c0_148 = arith.constant 0 : index
    %291 = vector.load %arg5[%c2_146, %c0_147, %c0_148] : memref<4x8x128xf32, #tpu.memory_space<vmem>>, vector<1x8x128xf32>
    %292 = vector.shape_cast %291 : vector<1x8x128xf32> to vector<8x128xf32>
    %293 = vector.shape_cast %289 : vector<8x128xf32> to vector<1x8x128xf32>
    tpu.vector_store %arg5[%c2_146, %c0_147, %c0_148], %293 {strides = array<i32>} : memref<4x8x128xf32, #tpu.memory_space<vmem>>, vector<1x8x128xf32>,
    %c0_149 = arith.constant 0 : index
    %c0_150 = arith.constant 0 : index
    %c0_151 = arith.constant 0 : index
    %294 = vector.load %arg3[%c0_149, %c0_150, %c0_151] : memref<3x128x512xbf16, #tpu.memory_space<vmem>>, vector<1x128x512xbf16>
    %295 = vector.shape_cast %294 : vector<1x128x512xbf16> to vector<128x512xbf16>
    %cst_152 = arith.constant dense<0.000000e+00> : vector<8x512xf32>
    %296 = tpu.matmul %244, %295, %cst_152 {dimension_numbers = #tpu.dot_dimension_numbers<[1], [0], [0], [1], [0, 0, 1, 1], [], []>} : vector<8x128xbf16>, vector<128x512xbf16>, vector<8x512xf32> -> vector<8x512xf32>
    %c0_153 = arith.constant 0 : index
    %c0_154 = arith.constant 0 : index
    %c0_155 = arith.constant 0 : index
    %297 = vector.load %arg4[%c0_153, %c0_154, %c0_155] : memref<3x1x512xf32, #tpu.memory_space<vmem>>, vector<1x1x512xf32>
    %298 = vector.shape_cast %297 : vector<1x1x512xf32> to vector<1x512xf32>
    %299 = vector.broadcast %298 : vector<1x512xf32> to vector<8x512xf32>
    %300 = arith.addf %296, %299 : vector<8x512xf32>
    %c1_156 = arith.constant 1 : index
    %c0_157 = arith.constant 0 : index
    %c0_158 = arith.constant 0 : index
    %301 = vector.load %arg3[%c1_156, %c0_157, %c0_158] : memref<3x128x512xbf16, #tpu.memory_space<vmem>>, vector<1x128x512xbf16>
    %302 = vector.shape_cast %301 : vector<1x128x512xbf16> to vector<128x512xbf16>
    %cst_159 = arith.constant dense<0.000000e+00> : vector<8x512xf32>
    %303 = tpu.matmul %267, %302, %cst_159 {dimension_numbers = #tpu.dot_dimension_numbers<[1], [0], [0], [1], [0, 0, 1, 1], [], []>} : vector<8x128xbf16>, vector<128x512xbf16>, vector<8x512xf32> -> vector<8x512xf32>
    %c1_160 = arith.constant 1 : index
    %c0_161 = arith.constant 0 : index
    %c0_162 = arith.constant 0 : index
    %304 = vector.load %arg4[%c1_160, %c0_161, %c0_162] : memref<3x1x512xf32, #tpu.memory_space<vmem>>, vector<1x1x512xf32>
    %305 = vector.shape_cast %304 : vector<1x1x512xf32> to vector<1x512xf32>
    %306 = vector.broadcast %305 : vector<1x512xf32> to vector<8x512xf32>
    %307 = arith.addf %303, %306 : vector<8x512xf32>
    %c2_163 = arith.constant 2 : index
    %c0_164 = arith.constant 0 : index
    %c0_165 = arith.constant 0 : index
    %308 = vector.load %arg3[%c2_163, %c0_164, %c0_165] : memref<3x128x512xbf16, #tpu.memory_space<vmem>>, vector<1x128x512xbf16>
    %309 = vector.shape_cast %308 : vector<1x128x512xbf16> to vector<128x512xbf16>
    %cst_166 = arith.constant dense<0.000000e+00> : vector<8x512xf32>
    %310 = tpu.matmul %290, %309, %cst_166 {dimension_numbers = #tpu.dot_dimension_numbers<[1], [0], [0], [1], [0, 0, 1, 1], [], []>} : vector<8x128xbf16>, vector<128x512xbf16>, vector<8x512xf32> -> vector<8x512xf32>
    %c2_167 = arith.constant 2 : index
    %c0_168 = arith.constant 0 : index
    %c0_169 = arith.constant 0 : index
    %311 = vector.load %arg4[%c2_167, %c0_168, %c0_169] : memref<3x1x512xf32, #tpu.memory_space<vmem>>, vector<1x1x512xf32>
    %312 = vector.shape_cast %311 : vector<1x1x512xf32> to vector<1x512xf32>
    %313 = vector.broadcast %312 : vector<1x512xf32> to vector<8x512xf32>
    %314 = arith.addf %310, %313 : vector<8x512xf32>
    %c0_170 = arith.constant 0 : index
    %c0_171 = arith.constant 0 : index
    %c0_172 = arith.constant 0 : index
    %315 = vector.load %arg2[%c0_170, %c0_171, %c0_172] : memref<3x128x512xbf16, #tpu.memory_space<vmem>>, vector<1x128x512xbf16>
    %316 = vector.shape_cast %315 : vector<1x128x512xbf16> to vector<128x512xbf16>
    %cst_173 = arith.constant dense<0.000000e+00> : vector<8x512xf32>
    %317 = tpu.matmul %290, %316, %cst_173 {dimension_numbers = #tpu.dot_dimension_numbers<[1], [0], [0], [1], [0, 0, 1, 1], [], []>} : vector<8x128xbf16>, vector<128x512xbf16>, vector<8x512xf32> -> vector<8x512xf32>
    %318 = arith.addf %317, %300 : vector<8x512xf32>
    %319 = vector.extract_strided_slice %318 {offsets = [0, 0], sizes = [8, 384], strides = [1, 1]} : vector<8x512xf32> to vector<8x384xf32>
    %cst_174 = arith.constant 5.000000e-01 : f32
    %320 = vector.broadcast %cst_174 : f32 to vector<8x384xf32>
    %321 = arith.mulf %320, %319 : vector<8x384xf32>
    %322 = math.tanh %321 : vector<8x384xf32>
    %cst_175 = arith.constant 1.000000e+00 : f32
    %323 = vector.broadcast %cst_175 : f32 to vector<8x384xf32>
    %324 = arith.addf %322, %323 : vector<8x384xf32>
    %cst_176 = arith.constant 5.000000e-01 : f32
    %325 = vector.broadcast %cst_176 : f32 to vector<8x384xf32>
    %326 = arith.mulf %325, %324 : vector<8x384xf32>
    %327 = vector.extract_strided_slice %326 {offsets = [0, 0], sizes = [8, 128], strides = [1, 1]} : vector<8x384xf32> to vector<8x128xf32>
    %328 = vector.extract_strided_slice %326 {offsets = [0, 128], sizes = [8, 128], strides = [1, 1]} : vector<8x384xf32> to vector<8x128xf32>
    %329 = vector.extract_strided_slice %326 {offsets = [0, 256], sizes = [8, 128], strides = [1, 1]} : vector<8x384xf32> to vector<8x128xf32>
    %330 = vector.extract_strided_slice %318 {offsets = [0, 384], sizes = [8, 128], strides = [1, 1]} : vector<8x512xf32> to vector<8x128xf32>
    %331 = math.tanh %330 : vector<8x128xf32>
    %332 = arith.mulf %328, %241 : vector<8x128xf32>
    %333 = arith.mulf %327, %331 : vector<8x128xf32>
    %334 = arith.addf %332, %333 : vector<8x128xf32>
    %335 = math.tanh %334 : vector<8x128xf32>
    %336 = arith.mulf %329, %335 : vector<8x128xf32>
    %337 = arith.truncf %336 : vector<8x128xf32> to vector<8x128xbf16>
    %c1_177 = arith.constant 1 : index
    %c0_178 = arith.constant 0 : index
    %c0_179 = arith.constant 0 : index
    %338 = vector.load %arg2[%c1_177, %c0_178, %c0_179] : memref<3x128x512xbf16, #tpu.memory_space<vmem>>, vector<1x128x512xbf16>
    %339 = vector.shape_cast %338 : vector<1x128x512xbf16> to vector<128x512xbf16>
    %cst_180 = arith.constant dense<0.000000e+00> : vector<8x512xf32>
    %340 = tpu.matmul %337, %339, %cst_180 {dimension_numbers = #tpu.dot_dimension_numbers<[1], [0], [0], [1], [0, 0, 1, 1], [], []>} : vector<8x128xbf16>, vector<128x512xbf16>, vector<8x512xf32> -> vector<8x512xf32>
    %341 = arith.addf %340, %307 : vector<8x512xf32>
    %342 = vector.extract_strided_slice %341 {offsets = [0, 0], sizes = [8, 384], strides = [1, 1]} : vector<8x512xf32> to vector<8x384xf32>
    %cst_181 = arith.constant 5.000000e-01 : f32
    %343 = vector.broadcast %cst_181 : f32 to vector<8x384xf32>
    %344 = arith.mulf %343, %342 : vector<8x384xf32>
    %345 = math.tanh %344 : vector<8x384xf32>
    %cst_182 = arith.constant 1.000000e+00 : f32
    %346 = vector.broadcast %cst_182 : f32 to vector<8x384xf32>
    %347 = arith.addf %345, %346 : vector<8x384xf32>
    %cst_183 = arith.constant 5.000000e-01 : f32
    %348 = vector.broadcast %cst_183 : f32 to vector<8x384xf32>
    %349 = arith.mulf %348, %347 : vector<8x384xf32>
    %350 = vector.extract_strided_slice %349 {offsets = [0, 0], sizes = [8, 128], strides = [1, 1]} : vector<8x384xf32> to vector<8x128xf32>
    %351 = vector.extract_strided_slice %349 {offsets = [0, 128], sizes = [8, 128], strides = [1, 1]} : vector<8x384xf32> to vector<8x128xf32>
    %352 = vector.extract_strided_slice %349 {offsets = [0, 256], sizes = [8, 128], strides = [1, 1]} : vector<8x384xf32> to vector<8x128xf32>
    %353 = vector.extract_strided_slice %341 {offsets = [0, 384], sizes = [8, 128], strides = [1, 1]} : vector<8x512xf32> to vector<8x128xf32>
    %354 = math.tanh %353 : vector<8x128xf32>
    %355 = arith.mulf %351, %264 : vector<8x128xf32>
    %356 = arith.mulf %350, %354 : vector<8x128xf32>
    %357 = arith.addf %355, %356 : vector<8x128xf32>
    %358 = math.tanh %357 : vector<8x128xf32>
    %359 = arith.mulf %352, %358 : vector<8x128xf32>
    %360 = arith.truncf %359 : vector<8x128xf32> to vector<8x128xbf16>
    %c2_184 = arith.constant 2 : index
    %c0_185 = arith.constant 0 : index
    %c0_186 = arith.constant 0 : index
    %361 = vector.load %arg2[%c2_184, %c0_185, %c0_186] : memref<3x128x512xbf16, #tpu.memory_space<vmem>>, vector<1x128x512xbf16>
    %362 = vector.shape_cast %361 : vector<1x128x512xbf16> to vector<128x512xbf16>
    %cst_187 = arith.constant dense<0.000000e+00> : vector<8x512xf32>
    %363 = tpu.matmul %360, %362, %cst_187 {dimension_numbers = #tpu.dot_dimension_numbers<[1], [0], [0], [1], [0, 0, 1, 1], [], []>} : vector<8x128xbf16>, vector<128x512xbf16>, vector<8x512xf32> -> vector<8x512xf32>
    %364 = arith.addf %363, %314 : vector<8x512xf32>
    %365 = vector.extract_strided_slice %364 {offsets = [0, 0], sizes = [8, 384], strides = [1, 1]} : vector<8x512xf32> to vector<8x384xf32>
    %cst_188 = arith.constant 5.000000e-01 : f32
    %366 = vector.broadcast %cst_188 : f32 to vector<8x384xf32>
    %367 = arith.mulf %366, %365 : vector<8x384xf32>
    %368 = math.tanh %367 : vector<8x384xf32>
    %cst_189 = arith.constant 1.000000e+00 : f32
    %369 = vector.broadcast %cst_189 : f32 to vector<8x384xf32>
    %370 = arith.addf %368, %369 : vector<8x384xf32>
    %cst_190 = arith.constant 5.000000e-01 : f32
    %371 = vector.broadcast %cst_190 : f32 to vector<8x384xf32>
    %372 = arith.mulf %371, %370 : vector<8x384xf32>
    %373 = vector.extract_strided_slice %372 {offsets = [0, 0], sizes = [8, 128], strides = [1, 1]} : vector<8x384xf32> to vector<8x128xf32>
    %374 = vector.extract_strided_slice %372 {offsets = [0, 128], sizes = [8, 128], strides = [1, 1]} : vector<8x384xf32> to vector<8x128xf32>
    %375 = vector.extract_strided_slice %372 {offsets = [0, 256], sizes = [8, 128], strides = [1, 1]} : vector<8x384xf32> to vector<8x128xf32>
    %376 = vector.extract_strided_slice %364 {offsets = [0, 384], sizes = [8, 128], strides = [1, 1]} : vector<8x512xf32> to vector<8x128xf32>
    %377 = math.tanh %376 : vector<8x128xf32>
    %378 = arith.mulf %374, %287 : vector<8x128xf32>
    %379 = arith.mulf %373, %377 : vector<8x128xf32>
    %380 = arith.addf %378, %379 : vector<8x128xf32>
    %381 = math.tanh %380 : vector<8x128xf32>
    %382 = arith.mulf %375, %381 : vector<8x128xf32>
    %c3 = arith.constant 3 : index
    %c0_191 = arith.constant 0 : index
    %c0_192 = arith.constant 0 : index
    %383 = vector.load %arg5[%c3, %c0_191, %c0_192] : memref<4x8x128xf32, #tpu.memory_space<vmem>>, vector<1x8x128xf32>
    %384 = vector.shape_cast %383 : vector<1x8x128xf32> to vector<8x128xf32>
    %385 = vector.shape_cast %382 : vector<8x128xf32> to vector<1x8x128xf32>
    tpu.vector_store %arg5[%c3, %c0_191, %c0_192], %385 {strides = array<i32>} : memref<4x8x128xf32, #tpu.memory_space<vmem>>, vector<1x8x128xf32>,
    return
  }
}

</mosaic_0001>

<llo_original>
// kernel: tpu_custom_call.1
$region0: #{tpu_custom_call.1}
  #allocation0 [shape = 'u32[]', space=smem, size = 0x4, offset = 0x4, fixed_abs, tag = 'smem constant byte address 0x4 - core index']
  #allocation1 [shape = 'u32[72,128]{1,0:T(1,128)}', space=vmem, size = 0x9000, scoped, tag = 'internal scratch']
  %s0 = inlined_call_operand.hbm [shape: f32[3,8,128], index: 0, kind: input, shape index: {}]
  %s1 = inlined_call_operand.hbm [shape: f32[3,8,128], index: 1, kind: input, shape index: {}]
  %s2 = inlined_call_operand.hbm [shape: bf16[3,128,512], index: 2, kind: input, shape index: {}]
  %s3 = inlined_call_operand.hbm [shape: bf16[3,128,512], index: 3, kind: input, shape index: {}]
  %s4 = inlined_call_operand.hbm [shape: f32[3,1,512], index: 4, kind: input, shape index: {}]
  %s5 = inlined_call_operand.hbm [shape: f32[4,8,128], index: 5, kind: output, shape index: {}]
  %s6 = sld [smem:[#allocation0]]
  $region50: #{tpu_custom_call.1} parent=0
    _
  %s8 = ssub.s32 1, %s6
  %s9 = scalar_select 0, %s8, %s6
  $region1: #{tpu_custom_call.1} parent=0
    #allocation2 [shape = 'u8[12288]{0}', space=vmem, size = 0x3000, scoped, tag = 'input window, operand 0, single buffered']
    #allocation3 [shape = 's32[1]{0}', space=sflag, size = 0x4, scoped, tag = 'scoped memory for tpu_custom_call.1']
    #allocation4 [shape = 's32[1]{0}', space=sflag, size = 0x4, scoped, tag = 'scoped memory for tpu_custom_call.1']
    #allocation5 [shape = 'u8[12288]{0}', space=vmem, size = 0x3000, scoped, tag = 'input window, operand 1, single buffered']
    #allocation6 [shape = 's32[1]{0}', space=sflag, size = 0x4, scoped, tag = 'scoped memory for tpu_custom_call.1']
    #allocation7 [shape = 'u8[393216]{0}', space=vmem, size = 0x60000, scoped, tag = 'input window, operand 2, single buffered']
    #allocation8 [shape = 'u8[393216]{0}', space=vmem, size = 0x60000, scoped, tag = 'input window, operand 3, single buffered']
    #allocation9 [shape = 's32[1]{0}', space=sflag, size = 0x4, scoped, tag = 'scoped memory for tpu_custom_call.1']
    #allocation10 [shape = 'u8[6144]{0}', space=vmem, size = 0x1800, scoped, tag = 'input window, operand 4, single buffered']
    #allocation11 [shape = 'u8[16384]{0}', space=vmem, size = 0x4000, scoped, tag = 'output window, operand 0, single buffered']
    %10 = vsyncpa [#allocation3], 0
    %11 = vsyncpa [#allocation6], 0
    %12 = vsyncpa [#allocation9], 0
    %13 = vsyncpa [#allocation4], 0
    // Predicated region
    $region2: #{tpu_custom_call.1} parent=1 // pred_check
      _
    $region3: #{tpu_custom_call.1} parent=1 // pred_check_branch
      %15 = sbr.rel (0) target = $region5
    $region4: #{tpu_custom_call.1} parent=1 // pred_region
      %17 = vsyncadd [#allocation3], 0
      %s18 = sshll.u32 %s0, 4
      %s19 = int_to_ptr.hbm [resolvable:$true] %s18
      %s20 = sshll.u32 [#allocation2], 4
      %s21 = int_to_ptr.vmem [resolvable:$true] %s20
      %26 = dma.hbm_to_vmem [thread:$0]  %s19, 384, %s21, [#allocation3], 128, 128, 8
    $region5: #{tpu_custom_call.1} parent=1 // pred_fallthru
      _
    // Predicated region
    $region6: #{tpu_custom_call.1} parent=1 // pred_check
      _
    $region7: #{tpu_custom_call.1} parent=1 // pred_check_branch
      %28 = sbr.rel (0) target = $region9
    $region8: #{tpu_custom_call.1} parent=1 // pred_region
      %30 = vsyncadd [#allocation6], 0
      %s31 = sshll.u32 %s1, 4
      %s32 = int_to_ptr.hbm [resolvable:$true] %s31
      %s33 = sshll.u32 [#allocation5], 4
      %s34 = int_to_ptr.vmem [resolvable:$true] %s33
      %39 = dma.hbm_to_vmem [thread:$0]  %s32, 384, %s34, [#allocation6], 128, 128, 8
    $region9: #{tpu_custom_call.1} parent=1 // pred_fallthru
      _
    // Predicated region
    $region10: #{tpu_custom_call.1} parent=1 // pred_check
      _
    $region11: #{tpu_custom_call.1} parent=1 // pred_check_branch
      %41 = sbr.rel (0) target = $region13
    $region12: #{tpu_custom_call.1} parent=1 // pred_region
      %43 = vsyncadd [#allocation6], 0
      %s44 = sshll.u32 %s2, 4
      %s45 = int_to_ptr.hbm [resolvable:$true] %s44
      %s46 = sshll.u32 [#allocation7], 4
      %s47 = int_to_ptr.vmem [resolvable:$true] %s46
      %52 = dma.hbm_to_vmem [thread:$0]  %s45, 12288, %s47, [#allocation6], 256, 256, 16
    $region13: #{tpu_custom_call.1} parent=1 // pred_fallthru
      _
    // Predicated region
    $region14: #{tpu_custom_call.1} parent=1 // pred_check
      _
    $region15: #{tpu_custom_call.1} parent=1 // pred_check_branch
      %54 = sbr.rel (0) target = $region17
    $region16: #{tpu_custom_call.1} parent=1 // pred_region
      %56 = vsyncadd [#allocation9], 0
      %s57 = sshll.u32 %s3, 4
      %s58 = int_to_ptr.hbm [resolvable:$true] %s57
      %s59 = sshll.u32 [#allocation8], 4
      %s60 = int_to_ptr.vmem [resolvable:$true] %s59
      %65 = dma.hbm_to_vmem [thread:$0]  %s58, 12288, %s60, [#allocation9], 256, 256, 16
    $region17: #{tpu_custom_call.1} parent=1 // pred_fallthru
      _
    // Predicated region
    $region18: #{tpu_custom_call.1} parent=1 // pred_check
      _
    $region19: #{tpu_custom_call.1} parent=1 // pred_check_branch
      %67 = sbr.rel (0) target = $region21
    $region20: #{tpu_custom_call.1} parent=1 // pred_region
      %69 = vsyncadd [#allocation9], 0
      %s70 = sshll.u32 %s4, 4
      %s71 = int_to_ptr.hbm [resolvable:$true] %s70
      %s72 = sshll.u32 [#allocation10], 4
      %s73 = int_to_ptr.vmem [resolvable:$true] %s72
      %78 = dma.hbm_to_vmem [thread:$0]  %s71, 192, %s73, [#allocation9], 64, 64, 4
    $region21: #{tpu_custom_call.1} parent=1 // pred_fallthru
      _
    // Predicated region
    $region22: #{tpu_custom_call.1} parent=1 // pred_check
      _
    $region23: #{tpu_custom_call.1} parent=1 // pred_check_branch
      %80 = sbr.rel (0) target = $region25
    $region24: #{tpu_custom_call.1} parent=1 // pred_region
      %82 = dma.done [#allocation3], 384
    $region25: #{tpu_custom_call.1} parent=1 // pred_fallthru
      _
    // Predicated region
    $region26: #{tpu_custom_call.1} parent=1 // pred_check
      _
    $region27: #{tpu_custom_call.1} parent=1 // pred_check_branch
      %84 = sbr.rel (0) target = $region29
    $region28: #{tpu_custom_call.1} parent=1 // pred_region
      %86 = dma.done [#allocation6], 384
    $region29: #{tpu_custom_call.1} parent=1 // pred_fallthru
      _
    // Predicated region
    $region30: #{tpu_custom_call.1} parent=1 // pred_check
      _
    $region31: #{tpu_custom_call.1} parent=1 // pred_check_branch
      %88 = sbr.rel (0) target = $region33
    $region32: #{tpu_custom_call.1} parent=1 // pred_region
      %90 = dma.done [#allocation6], 12288
    $region33: #{tpu_custom_call.1} parent=1 // pred_fallthru
      _
    // Predicated region
    $region34: #{tpu_custom_call.1} parent=1 // pred_check
      _
    $region35: #{tpu_custom_call.1} parent=1 // pred_check_branch
      %92 = sbr.rel (0) target = $region37
    $region36: #{tpu_custom_call.1} parent=1 // pred_region
      %94 = dma.done [#allocation9], 12288
    $region37: #{tpu_custom_call.1} parent=1 // pred_fallthru
      _
    // Predicated region
    $region38: #{tpu_custom_call.1} parent=1 // pred_check
      _
    $region39: #{tpu_custom_call.1} parent=1 // pred_check_branch
      %96 = sbr.rel (0) target = $region41
    $region40: #{tpu_custom_call.1} parent=1 // pred_region
      %98 = dma.done [#allocation9], 192
    $region41: #{tpu_custom_call.1} parent=1 // pred_fallthru
      _
    %v99 = vld [vmem:[#allocation2] sm:$0xff]
    %v100 = vpack.c.bf16 %v99, %v99
    %s101 = scalar_lea.vmem [#allocation2], 8
    %v102 = vld [vmem:[%s101] sm:$0xff]
    %v103 = vpack.c.bf16 %v102, %v102
    %s104 = scalar_lea.vmem [#allocation2], 16
    %v105 = vld [vmem:[%s104] sm:$0xff]
    %v106 = vpack.c.bf16 %v105, %v105
    %v107 = vld [vmem:[#allocation5] sm:$0xff]
    %s108 = scalar_lea.vmem [#allocation5], 8
    %v109 = vld [vmem:[%s108] sm:$0xff]
    %s110 = scalar_lea.vmem [#allocation5], 16
    %v111 = vld [vmem:[%s110] sm:$0xff]
    %v112 = vld [vmem:[#allocation8] sm:$0xff]
    %v113 = vld [vmem:[#allocation8 + $0x8] sm:$0xff]
    %v114 = vld [vmem:[#allocation8 + $0x10] sm:$0xff]
    %v115 = vld [vmem:[#allocation8 + $0x18] sm:$0xff]
    %v116 = vld [vmem:[#allocation8 + $0x20] sm:$0xff]
    %v117 = vld [vmem:[#allocation8 + $0x28] sm:$0xff]
    %v118 = vld [vmem:[#allocation8 + $0x30] sm:$0xff]
    %v119 = vld [vmem:[#allocation8 + $0x38] sm:$0xff]
    %v120 = vld [vmem:[#allocation8 + $0x40] sm:$0xff]
    %v121 = vld [vmem:[#allocation8 + $0x48] sm:$0xff]
    %v122 = vld [vmem:[#allocation8 + $0x50] sm:$0xff]
    %v123 = vld [vmem:[#allocation8 + $0x58] sm:$0xff]
    %v124 = vld [vmem:[#allocation8 + $0x60] sm:$0xff]
    %v125 = vld [vmem:[#allocation8 + $0x68] sm:$0xff]
    %v126 = vld [vmem:[#allocation8 + $0x70] sm:$0xff]
    %v127 = vld [vmem:[#allocation8 + $0x78] sm:$0xff]
    %v128 = vld [vmem:[#allocation8 + $0x80] sm:$0xff]
    %v129 = vld [vmem:[#allocation8 + $0x88] sm:$0xff]
    %v130 = vld [vmem:[#allocation8 + $0x90] sm:$0xff]
    %v131 = vld [vmem:[#allocation8 + $0x98] sm:$0xff]
    %v132 = vld [vmem:[#allocation8 + $0xa0] sm:$0xff]
    %v133 = vld [vmem:[#allocation8 + $0xa8] sm:$0xff]
    %v134 = vld [vmem:[#allocation8 + $0xb0] sm:$0xff]
    %v135 = vld [vmem:[#allocation8 + $0xb8] sm:$0xff]
    %v136 = vld [vmem:[#allocation8 + $0xc0] sm:$0xff]
    %v137 = vld [vmem:[#allocation8 + $0xc8] sm:$0xff]
    %v138 = vld [vmem:[#allocation8 + $0xd0] sm:$0xff]
    %v139 = vld [vmem:[#allocation8 + $0xd8] sm:$0xff]
    %v140 = vld [vmem:[#allocation8 + $0xe0] sm:$0xff]
    %v141 = vld [vmem:[#allocation8 + $0xe8] sm:$0xff]
    %v142 = vld [vmem:[#allocation8 + $0xf0] sm:$0xff]
    %v143 = vld [vmem:[#allocation8 + $0xf8] sm:$0xff]
    %v144 = vld [vmem:[#allocation10] sm:$0xf]
    %v146 = vperm.slane %v144, 0
    %v147 = vperm.slane %v144, 1
    %v148 = vperm.slane %v144, 2
    %v149 = vperm.slane %v144, 3
    %v186 = vunpack.c.l.b16 %v112
    %v187 = vunpack.c.h.b16 %v112
    %v188 = vunpack.c.l.b16 %v113
    %v189 = vunpack.c.h.b16 %v113
    %v190 = vunpack.c.l.b16 %v114
    %v191 = vunpack.c.h.b16 %v114
    %v192 = vunpack.c.l.b16 %v115
    %v193 = vunpack.c.h.b16 %v115
    %v194 = vunpack.c.l.b16 %v116
    %v195 = vunpack.c.h.b16 %v116
    %v196 = vunpack.c.l.b16 %v117
    %v197 = vunpack.c.h.b16 %v117
    %v198 = vunpack.c.l.b16 %v118
    %v199 = vunpack.c.h.b16 %v118
    %v200 = vunpack.c.l.b16 %v119
    %v201 = vunpack.c.h.b16 %v119
    %v202 = vunpack.c.l.b16 %v120
    %v203 = vunpack.c.h.b16 %v120
    %v204 = vunpack.c.l.b16 %v121
    %v205 = vunpack.c.h.b16 %v121
    %v206 = vunpack.c.l.b16 %v122
    %v207 = vunpack.c.h.b16 %v122
    %v208 = vunpack.c.l.b16 %v123
    %v209 = vunpack.c.h.b16 %v123
    %v210 = vunpack.c.l.b16 %v124
    %v211 = vunpack.c.h.b16 %v124
    %v212 = vunpack.c.l.b16 %v125
    %v213 = vunpack.c.h.b16 %v125
    %v214 = vunpack.c.l.b16 %v126
    %v215 = vunpack.c.h.b16 %v126
    %v216 = vunpack.c.l.b16 %v127
    %v217 = vunpack.c.h.b16 %v127
    %v218 = vunpack.c.l.b16 %v128
    %v219 = vunpack.c.h.b16 %v128
    %v220 = vunpack.c.l.b16 %v129
    %v221 = vunpack.c.h.b16 %v129
    %v222 = vunpack.c.l.b16 %v130
    %v223 = vunpack.c.h.b16 %v130
    %v224 = vunpack.c.l.b16 %v131
    %v225 = vunpack.c.h.b16 %v131
    %v226 = vunpack.c.l.b16 %v132
    %v227 = vunpack.c.h.b16 %v132
    %v228 = vunpack.c.l.b16 %v133
    %v229 = vunpack.c.h.b16 %v133
    %v230 = vunpack.c.l.b16 %v134
    %v231 = vunpack.c.h.b16 %v134
    %v232 = vunpack.c.l.b16 %v135
    %v233 = vunpack.c.h.b16 %v135
    %v234 = vunpack.c.l.b16 %v136
    %v235 = vunpack.c.h.b16 %v136
    %v236 = vunpack.c.l.b16 %v137
    %v237 = vunpack.c.h.b16 %v137
    %v238 = vunpack.c.l.b16 %v138
    %v239 = vunpack.c.h.b16 %v138
    %v240 = vunpack.c.l.b16 %v139
    %v241 = vunpack.c.h.b16 %v139
    %v242 = vunpack.c.l.b16 %v140
    %v243 = vunpack.c.h.b16 %v140
    %v244 = vunpack.c.l.b16 %v141
    %v245 = vunpack.c.h.b16 %v141
    %v246 = vunpack.c.l.b16 %v142
    %v247 = vunpack.c.h.b16 %v142
    %v248 = vunpack.c.l.b16 %v143
    %v249 = vunpack.c.h.b16 %v143
    %v250 = vpack.c.b16 %v190, %v186
    %v251 = vpack.c.b16 %v191, %v187
    %v252 = vpack.c.b16 %v192, %v188
    %v253 = vpack.c.b16 %v193, %v189
    %v254 = vpack.c.b16 %v198, %v194
    %v255 = vpack.c.b16 %v199, %v195
    %v256 = vpack.c.b16 %v200, %v196
    %v257 = vpack.c.b16 %v201, %v197
    %v258 = vpack.c.b16 %v206, %v202
    %v259 = vpack.c.b16 %v207, %v203
    %v260 = vpack.c.b16 %v208, %v204
    %v261 = vpack.c.b16 %v209, %v205
    %v262 = vpack.c.b16 %v214, %v210
    %v263 = vpack.c.b16 %v215, %v211
    %v264 = vpack.c.b16 %v216, %v212
    %v265 = vpack.c.b16 %v217, %v213
    %v266 = vpack.c.b16 %v222, %v218
    %v267 = vpack.c.b16 %v223, %v219
    %v268 = vpack.c.b16 %v224, %v220
    %v269 = vpack.c.b16 %v225, %v221
    %v270 = vpack.c.b16 %v230, %v226
    %v271 = vpack.c.b16 %v231, %v227
    %v272 = vpack.c.b16 %v232, %v228
    %v273 = vpack.c.b16 %v233, %v229
    %v274 = vpack.c.b16 %v238, %v234
    %v275 = vpack.c.b16 %v239, %v235
    %v276 = vpack.c.b16 %v240, %v236
    %v277 = vpack.c.b16 %v241, %v237
    %v278 = vpack.c.b16 %v246, %v242
    %v279 = vpack.c.b16 %v247, %v243
    %v280 = vpack.c.b16 %v248, %v244
    %v281 = vpack.c.b16 %v249, %v245
    %314 = vmatpush.bf16.msra.mxu0 %v278
    %315 = vmatpush.bf16.msra.mxu0 %v274
    %316 = vmatpush.bf16.msra.mxu0 %v270
    %317 = vmatpush.bf16.msra.mxu0 %v266
    %318 = vmatpush.bf16.msra.mxu0 %v262
    %319 = vmatpush.bf16.msra.mxu0 %v258
    %320 = vmatpush.bf16.msra.mxu0 %v254
    %321 = vmatpush.bf16.msra.mxu0 %v250
    %322 = vmatmul.bf16.gmra.mxu0 %v100
    %v323 = vpop.f32.mrf.mxu0
    %v324 = vadd.f32 %v146, %v323
    %v325 = vpop.f32.mrf.mxu0
    %326 = vdwg.mxu0
    %327 = vmatpush.bf16.msra.mxu0 %v279
    %328 = vmatpush.bf16.msra.mxu0 %v275
    %329 = vmatpush.bf16.msra.mxu0 %v271
    %330 = vmatpush.bf16.msra.mxu0 %v267
    %331 = vmatpush.bf16.msra.mxu0 %v263
    %332 = vmatpush.bf16.msra.mxu0 %v259
    %333 = vmatpush.bf16.msra.mxu0 %v255
    %334 = vmatpush.bf16.msra.mxu0 %v251
    %335 = vmatmul.bf16.gmra.mxu0 %v100
    %v336 = vpop.f32.mrf.mxu0
    %v337 = vadd.f32 %v147, %v336
    %v338 = vpop.f32.mrf.mxu0
    %339 = vdwg.mxu0
    %340 = vmatpush.bf16.msra.mxu0 %v280
    %341 = vmatpush.bf16.msra.mxu0 %v276
    %342 = vmatpush.bf16.msra.mxu0 %v272
    %343 = vmatpush.bf16.msra.mxu0 %v268
    %344 = vmatpush.bf16.msra.mxu0 %v264
    %345 = vmatpush.bf16.msra.mxu0 %v260
    %346 = vmatpush.bf16.msra.mxu0 %v256
    %347 = vmatpush.bf16.msra.mxu0 %v252
    %348 = vmatmul.bf16.gmra.mxu0 %v100
    %v349 = vpop.f32.mrf.mxu0
    %v350 = vadd.f32 %v148, %v349
    %v351 = vpop.f32.mrf.mxu0
    %352 = vdwg.mxu0
    %353 = vmatpush.bf16.msra.mxu0 %v281
    %354 = vmatpush.bf16.msra.mxu0 %v277
    %355 = vmatpush.bf16.msra.mxu0 %v273
    %356 = vmatpush.bf16.msra.mxu0 %v269
    %357 = vmatpush.bf16.msra.mxu0 %v265
    %358 = vmatpush.bf16.msra.mxu0 %v261
    %359 = vmatpush.bf16.msra.mxu0 %v257
    %360 = vmatpush.bf16.msra.mxu0 %v253
    %361 = vmatmul.bf16.gmra.mxu0 %v100
    %v362 = vpop.f32.mrf.mxu0
    %v363 = vadd.f32 %v149, %v362
    %v364 = vpop.f32.mrf.mxu0
    %365 = vdwg.mxu0
    %s366 = scalar_lea.vmem [#allocation8], 256
    %v367 = vld [vmem:[%s366] sm:$0xff]
    %v368 = vld [vmem:[%s366 + $0x8] sm:$0xff]
    %v369 = vld [vmem:[%s366 + $0x10] sm:$0xff]
    %v370 = vld [vmem:[%s366 + $0x18] sm:$0xff]
    %v371 = vld [vmem:[%s366 + $0x20] sm:$0xff]
    %v372 = vld [vmem:[%s366 + $0x28] sm:$0xff]
    %v373 = vld [vmem:[%s366 + $0x30] sm:$0xff]
    %v374 = vld [vmem:[%s366 + $0x38] sm:$0xff]
    %v375 = vld [vmem:[%s366 + $0x40] sm:$0xff]
    %v376 = vld [vmem:[%s366 + $0x48] sm:$0xff]
    %v377 = vld [vmem:[%s366 + $0x50] sm:$0xff]
    %v378 = vld [vmem:[%s366 + $0x58] sm:$0xff]
    %v379 = vld [vmem:[%s366 + $0x60] sm:$0xff]
    %v380 = vld [vmem:[%s366 + $0x68] sm:$0xff]
    %v381 = vld [vmem:[%s366 + $0x70] sm:$0xff]
    %v382 = vld [vmem:[%s366 + $0x78] sm:$0xff]
    %v383 = vld [vmem:[%s366 + $0x80] sm:$0xff]
    %v384 = vld [vmem:[%s366 + $0x88] sm:$0xff]
    %v385 = vld [vmem:[%s366 + $0x90] sm:$0xff]
    %v386 = vld [vmem:[%s366 + $0x98] sm:$0xff]
    %v387 = vld [vmem:[%s366 + $0xa0] sm:$0xff]
    %v388 = vld [vmem:[%s366 + $0xa8] sm:$0xff]
    %v389 = vld [vmem:[%s366 + $0xb0] sm:$0xff]
    %v390 = vld [vmem:[%s366 + $0xb8] sm:$0xff]
    %v391 = vld [vmem:[%s366 + $0xc0] sm:$0xff]
    %v392 = vld [vmem:[%s366 + $0xc8] sm:$0xff]
    %v393 = vld [vmem:[%s366 + $0xd0] sm:$0xff]
    %v394 = vld [vmem:[%s366 + $0xd8] sm:$0xff]
    %v395 = vld [vmem:[%s366 + $0xe0] sm:$0xff]
    %v396 = vld [vmem:[%s366 + $0xe8] sm:$0xff]
    %v397 = vld [vmem:[%s366 + $0xf0] sm:$0xff]
    %v398 = vld [vmem:[%s366 + $0xf8] sm:$0xff]
    %s399 = scalar_lea.vmem [#allocation10], 4
    %v400 = vld [vmem:[%s399] sm:$0xf]
    %v402 = vperm.slane %v400, 0
    %v403 = vperm.slane %v400, 1
    %v404 = vperm.slane %v400, 2
    %v405 = vperm.slane %v400, 3
    %v442 = vunpack.c.l.b16 %v367
    %v443 = vunpack.c.h.b16 %v367
    %v444 = vunpack.c.l.b16 %v368
    %v445 = vunpack.c.h.b16 %v368
    %v446 = vunpack.c.l.b16 %v369
    %v447 = vunpack.c.h.b16 %v369
    %v448 = vunpack.c.l.b16 %v370
    %v449 = vunpack.c.h.b16 %v370
    %v450 = vunpack.c.l.b16 %v371
    %v451 = vunpack.c.h.b16 %v371
    %v452 = vunpack.c.l.b16 %v372
    %v453 = vunpack.c.h.b16 %v372
    %v454 = vunpack.c.l.b16 %v373
    %v455 = vunpack.c.h.b16 %v373
    %v456 = vunpack.c.l.b16 %v374
    %v457 = vunpack.c.h.b16 %v374
    %v458 = vunpack.c.l.b16 %v375
    %v459 = vunpack.c.h.b16 %v375
    %v460 = vunpack.c.l.b16 %v376
    %v461 = vunpack.c.h.b16 %v376
    %v462 = vunpack.c.l.b16 %v377
    %v463 = vunpack.c.h.b16 %v377
    %v464 = vunpack.c.l.b16 %v378
    %v465 = vunpack.c.h.b16 %v378
    %v466 = vunpack.c.l.b16 %v379
    %v467 = vunpack.c.h.b16 %v379
    %v468 = vunpack.c.l.b16 %v380
    %v469 = vunpack.c.h.b16 %v380
    %v470 = vunpack.c.l.b16 %v381
    %v471 = vunpack.c.h.b16 %v381
    %v472 = vunpack.c.l.b16 %v382
    %v473 = vunpack.c.h.b16 %v382
    %v474 = vunpack.c.l.b16 %v383
    %v475 = vunpack.c.h.b16 %v383
    %v476 = vunpack.c.l.b16 %v384
    %v477 = vunpack.c.h.b16 %v384
    %v478 = vunpack.c.l.b16 %v385
    %v479 = vunpack.c.h.b16 %v385
    %v480 = vunpack.c.l.b16 %v386
    %v481 = vunpack.c.h.b16 %v386
    %v482 = vunpack.c.l.b16 %v387
    %v483 = vunpack.c.h.b16 %v387
    %v484 = vunpack.c.l.b16 %v388
    %v485 = vunpack.c.h.b16 %v388
    %v486 = vunpack.c.l.b16 %v389
    %v487 = vunpack.c.h.b16 %v389
    %v488 = vunpack.c.l.b16 %v390
    %v489 = vunpack.c.h.b16 %v390
    %v490 = vunpack.c.l.b16 %v391
    %v491 = vunpack.c.h.b16 %v391
    %v492 = vunpack.c.l.b16 %v392
    %v493 = vunpack.c.h.b16 %v392
    %v494 = vunpack.c.l.b16 %v393
    %v495 = vunpack.c.h.b16 %v393
    %v496 = vunpack.c.l.b16 %v394
    %v497 = vunpack.c.h.b16 %v394
    %v498 = vunpack.c.l.b16 %v395
    %v499 = vunpack.c.h.b16 %v395
    %v500 = vunpack.c.l.b16 %v396
    %v501 = vunpack.c.h.b16 %v396
    %v502 = vunpack.c.l.b16 %v397
    %v503 = vunpack.c.h.b16 %v397
    %v504 = vunpack.c.l.b16 %v398
    %v505 = vunpack.c.h.b16 %v398
    %v506 = vpack.c.b16 %v446, %v442
    %v507 = vpack.c.b16 %v447, %v443
    %v508 = vpack.c.b16 %v448, %v444
    %v509 = vpack.c.b16 %v449, %v445
    %v510 = vpack.c.b16 %v454, %v450
    %v511 = vpack.c.b16 %v455, %v451
    %v512 = vpack.c.b16 %v456, %v452
    %v513 = vpack.c.b16 %v457, %v453
    %v514 = vpack.c.b16 %v462, %v458
    %v515 = vpack.c.b16 %v463, %v459
    %v516 = vpack.c.b16 %v464, %v460
    %v517 = vpack.c.b16 %v465, %v461
    %v518 = vpack.c.b16 %v470, %v466
    %v519 = vpack.c.b16 %v471, %v467
    %v520 = vpack.c.b16 %v472, %v468
    %v521 = vpack.c.b16 %v473, %v469
    %v522 = vpack.c.b16 %v478, %v474
    %v523 = vpack.c.b16 %v479, %v475
    %v524 = vpack.c.b16 %v480, %v476
    %v525 = vpack.c.b16 %v481, %v477
    %v526 = vpack.c.b16 %v486, %v482
    %v527 = vpack.c.b16 %v487, %v483
    %v528 = vpack.c.b16 %v488, %v484
    %v529 = vpack.c.b16 %v489, %v485
    %v530 = vpack.c.b16 %v494, %v490
    %v531 = vpack.c.b16 %v495, %v491
    %v532 = vpack.c.b16 %v496, %v492
    %v533 = vpack.c.b16 %v497, %v493
    %v534 = vpack.c.b16 %v502, %v498
    %v535 = vpack.c.b16 %v503, %v499
    %v536 = vpack.c.b16 %v504, %v500
    %v537 = vpack.c.b16 %v505, %v501
    %570 = vmatpush.bf16.msra.mxu0 %v534
    %571 = vmatpush.bf16.msra.mxu0 %v530
    %572 = vmatpush.bf16.msra.mxu0 %v526
    %573 = vmatpush.bf16.msra.mxu0 %v522
    %574 = vmatpush.bf16.msra.mxu0 %v518
    %575 = vmatpush.bf16.msra.mxu0 %v514
    %576 = vmatpush.bf16.msra.mxu0 %v510
    %577 = vmatpush.bf16.msra.mxu0 %v506
    %578 = vmatmul.bf16.gmra.mxu0 %v103
    %v579 = vpop.f32.mrf.mxu0
    %v580 = vadd.f32 %v402, %v579
    %v581 = vpop.f32.mrf.mxu0
    %582 = vdwg.mxu0
    %583 = vmatpush.bf16.msra.mxu0 %v535
    %584 = vmatpush.bf16.msra.mxu0 %v531
    %585 = vmatpush.bf16.msra.mxu0 %v527
    %586 = vmatpush.bf16.msra.mxu0 %v523
    %587 = vmatpush.bf16.msra.mxu0 %v519
    %588 = vmatpush.bf16.msra.mxu0 %v515
    %589 = vmatpush.bf16.msra.mxu0 %v511
    %590 = vmatpush.bf16.msra.mxu0 %v507
    %591 = vmatmul.bf16.gmra.mxu0 %v103
    %v592 = vpop.f32.mrf.mxu0
    %v593 = vadd.f32 %v403, %v592
    %v594 = vpop.f32.mrf.mxu0
    %595 = vdwg.mxu0
    %596 = vmatpush.bf16.msra.mxu0 %v536
    %597 = vmatpush.bf16.msra.mxu0 %v532
    %598 = vmatpush.bf16.msra.mxu0 %v528
    %599 = vmatpush.bf16.msra.mxu0 %v524
    %600 = vmatpush.bf16.msra.mxu0 %v520
    %601 = vmatpush.bf16.msra.mxu0 %v516
    %602 = vmatpush.bf16.msra.mxu0 %v512
    %603 = vmatpush.bf16.msra.mxu0 %v508
    %604 = vmatmul.bf16.gmra.mxu0 %v103
    %v605 = vpop.f32.mrf.mxu0
    %v606 = vadd.f32 %v404, %v605
    %v607 = vpop.f32.mrf.mxu0
    %608 = vdwg.mxu0
    %609 = vmatpush.bf16.msra.mxu0 %v537
    %610 = vmatpush.bf16.msra.mxu0 %v533
    %611 = vmatpush.bf16.msra.mxu0 %v529
    %612 = vmatpush.bf16.msra.mxu0 %v525
    %613 = vmatpush.bf16.msra.mxu0 %v521
    %614 = vmatpush.bf16.msra.mxu0 %v517
    %615 = vmatpush.bf16.msra.mxu0 %v513
    %616 = vmatpush.bf16.msra.mxu0 %v509
    %617 = vmatmul.bf16.gmra.mxu0 %v103
    %v618 = vpop.f32.mrf.mxu0
    %v619 = vadd.f32 %v405, %v618
    %v620 = vpop.f32.mrf.mxu0
    %621 = vdwg.mxu0
    %s622 = scalar_lea.vmem [#allocation8], 512
    %v623 = vld [vmem:[%s622] sm:$0xff]
    %v624 = vld [vmem:[%s622 + $0x8] sm:$0xff]
    %v625 = vld [vmem:[%s622 + $0x10] sm:$0xff]
    %v626 = vld [vmem:[%s622 + $0x18] sm:$0xff]
    %v627 = vld [vmem:[%s622 + $0x20] sm:$0xff]
    %v628 = vld [vmem:[%s622 + $0x28] sm:$0xff]
    %v629 = vld [vmem:[%s622 + $0x30] sm:$0xff]
    %v630 = vld [vmem:[%s622 + $0x38] sm:$0xff]
    %v631 = vld [vmem:[%s622 + $0x40] sm:$0xff]
    %v632 = vld [vmem:[%s622 + $0x48] sm:$0xff]
    %v633 = vld [vmem:[%s622 + $0x50] sm:$0xff]
    %v634 = vld [vmem:[%s622 + $0x58] sm:$0xff]
    %v635 = vld [vmem:[%s622 + $0x60] sm:$0xff]
    %v636 = vld [vmem:[%s622 + $0x68] sm:$0xff]
    %v637 = vld [vmem:[%s622 + $0x70] sm:$0xff]
    %v638 = vld [vmem:[%s622 + $0x78] sm:$0xff]
    %v639 = vld [vmem:[%s622 + $0x80] sm:$0xff]
    %v640 = vld [vmem:[%s622 + $0x88] sm:$0xff]
    %v641 = vld [vmem:[%s622 + $0x90] sm:$0xff]
    %v642 = vld [vmem:[%s622 + $0x98] sm:$0xff]
    %v643 = vld [vmem:[%s622 + $0xa0] sm:$0xff]
    %v644 = vld [vmem:[%s622 + $0xa8] sm:$0xff]
    %v645 = vld [vmem:[%s622 + $0xb0] sm:$0xff]
    %v646 = vld [vmem:[%s622 + $0xb8] sm:$0xff]
    %v647 = vld [vmem:[%s622 + $0xc0] sm:$0xff]
    %v648 = vld [vmem:[%s622 + $0xc8] sm:$0xff]
    %v649 = vld [vmem:[%s622 + $0xd0] sm:$0xff]
    %v650 = vld [vmem:[%s622 + $0xd8] sm:$0xff]
    %v651 = vld [vmem:[%s622 + $0xe0] sm:$0xff]
    %v652 = vld [vmem:[%s622 + $0xe8] sm:$0xff]
    %v653 = vld [vmem:[%s622 + $0xf0] sm:$0xff]
    %v654 = vld [vmem:[%s622 + $0xf8] sm:$0xff]
    %s655 = scalar_lea.vmem [#allocation10], 8
    %v656 = vld [vmem:[%s655] sm:$0xf]
    %v658 = vperm.slane %v656, 0
    %v659 = vperm.slane %v656, 1
    %v660 = vperm.slane %v656, 2
    %v661 = vperm.slane %v656, 3
    %v698 = vunpack.c.l.b16 %v623
    %v699 = vunpack.c.h.b16 %v623
    %v700 = vunpack.c.l.b16 %v624
    %v701 = vunpack.c.h.b16 %v624
    %v702 = vunpack.c.l.b16 %v625
    %v703 = vunpack.c.h.b16 %v625
    %v704 = vunpack.c.l.b16 %v626
    %v705 = vunpack.c.h.b16 %v626
    %v706 = vunpack.c.l.b16 %v627
    %v707 = vunpack.c.h.b16 %v627
    %v708 = vunpack.c.l.b16 %v628
    %v709 = vunpack.c.h.b16 %v628
    %v710 = vunpack.c.l.b16 %v629
    %v711 = vunpack.c.h.b16 %v629
    %v712 = vunpack.c.l.b16 %v630
    %v713 = vunpack.c.h.b16 %v630
    %v714 = vunpack.c.l.b16 %v631
    %v715 = vunpack.c.h.b16 %v631
    %v716 = vunpack.c.l.b16 %v632
    %v717 = vunpack.c.h.b16 %v632
    %v718 = vunpack.c.l.b16 %v633
    %v719 = vunpack.c.h.b16 %v633
    %v720 = vunpack.c.l.b16 %v634
    %v721 = vunpack.c.h.b16 %v634
    %v722 = vunpack.c.l.b16 %v635
    %v723 = vunpack.c.h.b16 %v635
    %v724 = vunpack.c.l.b16 %v636
    %v725 = vunpack.c.h.b16 %v636
    %v726 = vunpack.c.l.b16 %v637
    %v727 = vunpack.c.h.b16 %v637
    %v728 = vunpack.c.l.b16 %v638
    %v729 = vunpack.c.h.b16 %v638
    %v730 = vunpack.c.l.b16 %v639
    %v731 = vunpack.c.h.b16 %v639
    %v732 = vunpack.c.l.b16 %v640
    %v733 = vunpack.c.h.b16 %v640
    %v734 = vunpack.c.l.b16 %v641
    %v735 = vunpack.c.h.b16 %v641
    %v736 = vunpack.c.l.b16 %v642
    %v737 = vunpack.c.h.b16 %v642
    %v738 = vunpack.c.l.b16 %v643
    %v739 = vunpack.c.h.b16 %v643
    %v740 = vunpack.c.l.b16 %v644
    %v741 = vunpack.c.h.b16 %v644
    %v742 = vunpack.c.l.b16 %v645
    %v743 = vunpack.c.h.b16 %v645
    %v744 = vunpack.c.l.b16 %v646
    %v745 = vunpack.c.h.b16 %v646
    %v746 = vunpack.c.l.b16 %v647
    %v747 = vunpack.c.h.b16 %v647
    %v748 = vunpack.c.l.b16 %v648
    %v749 = vunpack.c.h.b16 %v648
    %v750 = vunpack.c.l.b16 %v649
    %v751 = vunpack.c.h.b16 %v649
    %v752 = vunpack.c.l.b16 %v650
    %v753 = vunpack.c.h.b16 %v650
    %v754 = vunpack.c.l.b16 %v651
    %v755 = vunpack.c.h.b16 %v651
    %v756 = vunpack.c.l.b16 %v652
    %v757 = vunpack.c.h.b16 %v652
    %v758 = vunpack.c.l.b16 %v653
    %v759 = vunpack.c.h.b16 %v653
    %v760 = vunpack.c.l.b16 %v654
    %v761 = vunpack.c.h.b16 %v654
    %v762 = vpack.c.b16 %v702, %v698
    %v763 = vpack.c.b16 %v703, %v699
    %v764 = vpack.c.b16 %v704, %v700
    %v765 = vpack.c.b16 %v705, %v701
    %v766 = vpack.c.b16 %v710, %v706
    %v767 = vpack.c.b16 %v711, %v707
    %v768 = vpack.c.b16 %v712, %v708
    %v769 = vpack.c.b16 %v713, %v709
    %v770 = vpack.c.b16 %v718, %v714
    %v771 = vpack.c.b16 %v719, %v715
    %v772 = vpack.c.b16 %v720, %v716
    %v773 = vpack.c.b16 %v721, %v717
    %v774 = vpack.c.b16 %v726, %v722
    %v775 = vpack.c.b16 %v727, %v723
    %v776 = vpack.c.b16 %v728, %v724
    %v777 = vpack.c.b16 %v729, %v725
    %v778 = vpack.c.b16 %v734, %v730
    %v779 = vpack.c.b16 %v735, %v731
    %v780 = vpack.c.b16 %v736, %v732
    %v781 = vpack.c.b16 %v737, %v733
    %v782 = vpack.c.b16 %v742, %v738
    %v783 = vpack.c.b16 %v743, %v739
    %v784 = vpack.c.b16 %v744, %v740
    %v785 = vpack.c.b16 %v745, %v741
    %v786 = vpack.c.b16 %v750, %v746
    %v787 = vpack.c.b16 %v751, %v747
    %v788 = vpack.c.b16 %v752, %v748
    %v789 = vpack.c.b16 %v753, %v749
    %v790 = vpack.c.b16 %v758, %v754
    %v791 = vpack.c.b16 %v759, %v755
    %v792 = vpack.c.b16 %v760, %v756
    %v793 = vpack.c.b16 %v761, %v757
    %826 = vmatpush.bf16.msra.mxu0 %v790
    %827 = vmatpush.bf16.msra.mxu0 %v786
    %828 = vmatpush.bf16.msra.mxu0 %v782
    %829 = vmatpush.bf16.msra.mxu0 %v778
    %830 = vmatpush.bf16.msra.mxu0 %v774
    %831 = vmatpush.bf16.msra.mxu0 %v770
    %832 = vmatpush.bf16.msra.mxu0 %v766
    %833 = vmatpush.bf16.msra.mxu0 %v762
    %834 = vmatmul.bf16.gmra.mxu0 %v106
    %v835 = vpop.f32.mrf.mxu0
    %v836 = vadd.f32 %v658, %v835
    %v837 = vpop.f32.mrf.mxu0
    %838 = vdwg.mxu0
    %839 = vmatpush.bf16.msra.mxu0 %v791
    %840 = vmatpush.bf16.msra.mxu0 %v787
    %841 = vmatpush.bf16.msra.mxu0 %v783
    %842 = vmatpush.bf16.msra.mxu0 %v779
    %843 = vmatpush.bf16.msra.mxu0 %v775
    %844 = vmatpush.bf16.msra.mxu0 %v771
    %845 = vmatpush.bf16.msra.mxu0 %v767
    %846 = vmatpush.bf16.msra.mxu0 %v763
    %847 = vmatmul.bf16.gmra.mxu0 %v106
    %v848 = vpop.f32.mrf.mxu0
    %v849 = vadd.f32 %v659, %v848
    %v850 = vpop.f32.mrf.mxu0
    %851 = vdwg.mxu0
    %852 = vmatpush.bf16.msra.mxu0 %v792
    %853 = vmatpush.bf16.msra.mxu0 %v788
    %854 = vmatpush.bf16.msra.mxu0 %v784
    %855 = vmatpush.bf16.msra.mxu0 %v780
    %856 = vmatpush.bf16.msra.mxu0 %v776
    %857 = vmatpush.bf16.msra.mxu0 %v772
    %858 = vmatpush.bf16.msra.mxu0 %v768
    %859 = vmatpush.bf16.msra.mxu0 %v764
    %860 = vmatmul.bf16.gmra.mxu0 %v106
    %v861 = vpop.f32.mrf.mxu0
    %v862 = vadd.f32 %v660, %v861
    %v863 = vpop.f32.mrf.mxu0
    %864 = vdwg.mxu0
    %865 = vmatpush.bf16.msra.mxu0 %v793
    %866 = vmatpush.bf16.msra.mxu0 %v789
    %867 = vmatpush.bf16.msra.mxu0 %v785
    %868 = vmatpush.bf16.msra.mxu0 %v781
    %869 = vmatpush.bf16.msra.mxu0 %v777
    %870 = vmatpush.bf16.msra.mxu0 %v773
    %871 = vmatpush.bf16.msra.mxu0 %v769
    %872 = vmatpush.bf16.msra.mxu0 %v765
    %873 = vmatmul.bf16.gmra.mxu0 %v106
    %v874 = vpop.f32.mrf.mxu0
    %v875 = vadd.f32 %v661, %v874
    %v876 = vpop.f32.mrf.mxu0
    %877 = vdwg.mxu0
    %v878 = vld [vmem:[#allocation7] sm:$0xff]
    %v879 = vld [vmem:[#allocation7 + $0x8] sm:$0xff]
    %v880 = vld [vmem:[#allocation7 + $0x10] sm:$0xff]
    %v881 = vld [vmem:[#allocation7 + $0x18] sm:$0xff]
    %v882 = vld [vmem:[#allocation7 + $0x20] sm:$0xff]
    %v883 = vld [vmem:[#allocation7 + $0x28] sm:$0xff]
    %v884 = vld [vmem:[#allocation7 + $0x30] sm:$0xff]
    %v885 = vld [vmem:[#allocation7 + $0x38] sm:$0xff]
    %v886 = vld [vmem:[#allocation7 + $0x40] sm:$0xff]
    %v887 = vld [vmem:[#allocation7 + $0x48] sm:$0xff]
    %v888 = vld [vmem:[#allocation7 + $0x50] sm:$0xff]
    %v889 = vld [vmem:[#allocation7 + $0x58] sm:$0xff]
    %v890 = vld [vmem:[#allocation7 + $0x60] sm:$0xff]
    %v891 = vld [vmem:[#allocation7 + $0x68] sm:$0xff]
    %v892 = vld [vmem:[#allocation7 + $0x70] sm:$0xff]
    %v893 = vld [vmem:[#allocation7 + $0x78] sm:$0xff]
    %v894 = vld [vmem:[#allocation7 + $0x80] sm:$0xff]
    %v895 = vld [vmem:[#allocation7 + $0x88] sm:$0xff]
    %v896 = vld [vmem:[#allocation7 + $0x90] sm:$0xff]
    %v897 = vld [vmem:[#allocation7 + $0x98] sm:$0xff]
    %v898 = vld [vmem:[#allocation7 + $0xa0] sm:$0xff]
    %v899 = vld [vmem:[#allocation7 + $0xa8] sm:$0xff]
    %v900 = vld [vmem:[#allocation7 + $0xb0] sm:$0xff]
    %v901 = vld [vmem:[#allocation7 + $0xb8] sm:$0xff]
    %v902 = vld [vmem:[#allocation7 + $0xc0] sm:$0xff]
    %v903 = vld [vmem:[#allocation7 + $0xc8] sm:$0xff]
    %v904 = vld [vmem:[#allocation7 + $0xd0] sm:$0xff]
    %v905 = vld [vmem:[#allocation7 + $0xd8] sm:$0xff]
    %v906 = vld [vmem:[#allocation7 + $0xe0] sm:$0xff]
    %v907 = vld [vmem:[#allocation7 + $0xe8] sm:$0xff]
    %v908 = vld [vmem:[#allocation7 + $0xf0] sm:$0xff]
    %v909 = vld [vmem:[#allocation7 + $0xf8] sm:$0xff]
    %v942 = vunpack.c.l.b16 %v878
    %v943 = vunpack.c.h.b16 %v878
    %v944 = vunpack.c.l.b16 %v879
    %v945 = vunpack.c.h.b16 %v879
    %v946 = vunpack.c.l.b16 %v880
    %v947 = vunpack.c.h.b16 %v880
    %v948 = vunpack.c.l.b16 %v881
    %v949 = vunpack.c.h.b16 %v881
    %v950 = vunpack.c.l.b16 %v882
    %v951 = vunpack.c.h.b16 %v882
    %v952 = vunpack.c.l.b16 %v883
    %v953 = vunpack.c.h.b16 %v883
    %v954 = vunpack.c.l.b16 %v884
    %v955 = vunpack.c.h.b16 %v884
    %v956 = vunpack.c.l.b16 %v885
    %v957 = vunpack.c.h.b16 %v885
    %v958 = vunpack.c.l.b16 %v886
    %v959 = vunpack.c.h.b16 %v886
    %v960 = vunpack.c.l.b16 %v887
    %v961 = vunpack.c.h.b16 %v887
    %v962 = vunpack.c.l.b16 %v888
    %v963 = vunpack.c.h.b16 %v888
    %v964 = vunpack.c.l.b16 %v889
    %v965 = vunpack.c.h.b16 %v889
    %v966 = vunpack.c.l.b16 %v890
    %v967 = vunpack.c.h.b16 %v890
    %v968 = vunpack.c.l.b16 %v891
    %v969 = vunpack.c.h.b16 %v891
    %v970 = vunpack.c.l.b16 %v892
    %v971 = vunpack.c.h.b16 %v892
    %v972 = vunpack.c.l.b16 %v893
    %v973 = vunpack.c.h.b16 %v893
    %v974 = vunpack.c.l.b16 %v894
    %v975 = vunpack.c.h.b16 %v894
    %v976 = vunpack.c.l.b16 %v895
    %v977 = vunpack.c.h.b16 %v895
    %v978 = vunpack.c.l.b16 %v896
    %v979 = vunpack.c.h.b16 %v896
    %v980 = vunpack.c.l.b16 %v897
    %v981 = vunpack.c.h.b16 %v897
    %v982 = vunpack.c.l.b16 %v898
    %v983 = vunpack.c.h.b16 %v898
    %v984 = vunpack.c.l.b16 %v899
    %v985 = vunpack.c.h.b16 %v899
    %v986 = vunpack.c.l.b16 %v900
    %v987 = vunpack.c.h.b16 %v900
    %v988 = vunpack.c.l.b16 %v901
    %v989 = vunpack.c.h.b16 %v901
    %v990 = vunpack.c.l.b16 %v902
    %v991 = vunpack.c.h.b16 %v902
    %v992 = vunpack.c.l.b16 %v903
    %v993 = vunpack.c.h.b16 %v903
    %v994 = vunpack.c.l.b16 %v904
    %v995 = vunpack.c.h.b16 %v904
    %v996 = vunpack.c.l.b16 %v905
    %v997 = vunpack.c.h.b16 %v905
    %v998 = vunpack.c.l.b16 %v906
    %v999 = vunpack.c.h.b16 %v906
    %v1000 = vunpack.c.l.b16 %v907
    %v1001 = vunpack.c.h.b16 %v907
    %v1002 = vunpack.c.l.b16 %v908
    %v1003 = vunpack.c.h.b16 %v908
    %v1004 = vunpack.c.l.b16 %v909
    %v1005 = vunpack.c.h.b16 %v909
    %v1006 = vpack.c.b16 %v946, %v942
    %v1007 = vpack.c.b16 %v947, %v943
    %v1008 = vpack.c.b16 %v948, %v944
    %v1009 = vpack.c.b16 %v949, %v945
    %v1010 = vpack.c.b16 %v954, %v950
    %v1011 = vpack.c.b16 %v955, %v951
    %v1012 = vpack.c.b16 %v956, %v952
    %v1013 = vpack.c.b16 %v957, %v953
    %v1014 = vpack.c.b16 %v962, %v958
    %v1015 = vpack.c.b16 %v963, %v959
    %v1016 = vpack.c.b16 %v964, %v960
    %v1017 = vpack.c.b16 %v965, %v961
    %v1018 = vpack.c.b16 %v970, %v966
    %v1019 = vpack.c.b16 %v971, %v967
    %v1020 = vpack.c.b16 %v972, %v968
    %v1021 = vpack.c.b16 %v973, %v969
    %v1022 = vpack.c.b16 %v978, %v974
    %v1023 = vpack.c.b16 %v979, %v975
    %v1024 = vpack.c.b16 %v980, %v976
    %v1025 = vpack.c.b16 %v981, %v977
    %v1026 = vpack.c.b16 %v986, %v982
    %v1027 = vpack.c.b16 %v987, %v983
    %v1028 = vpack.c.b16 %v988, %v984
    %v1029 = vpack.c.b16 %v989, %v985
    %v1030 = vpack.c.b16 %v994, %v990
    %v1031 = vpack.c.b16 %v995, %v991
    %v1032 = vpack.c.b16 %v996, %v992
    %v1033 = vpack.c.b16 %v997, %v993
    %v1034 = vpack.c.b16 %v1002, %v998
    %v1035 = vpack.c.b16 %v1003, %v999
    %v1036 = vpack.c.b16 %v1004, %v1000
    %v1037 = vpack.c.b16 %v1005, %v1001
    %1070 = vmatpush.bf16.msra.mxu0 %v1034
    %1071 = vmatpush.bf16.msra.mxu0 %v1030
    %1072 = vmatpush.bf16.msra.mxu0 %v1026
    %1073 = vmatpush.bf16.msra.mxu0 %v1022
    %1074 = vmatpush.bf16.msra.mxu0 %v1018
    %1075 = vmatpush.bf16.msra.mxu0 %v1014
    %1076 = vmatpush.bf16.msra.mxu0 %v1010
    %1077 = vmatpush.bf16.msra.mxu0 %v1006
    %1078 = vmatmul.bf16.gmra.mxu0 %v106
    %v1079 = vpop.f32.mrf.mxu0
    %v1080 = vadd.f32 %v324, %v1079
    %v1081 = vpop.f32.mrf.mxu0
    %1082 = vdwg.mxu0
    %1083 = vmatpush.bf16.msra.mxu0 %v1035
    %1084 = vmatpush.bf16.msra.mxu0 %v1031
    %1085 = vmatpush.bf16.msra.mxu0 %v1027
    %1086 = vmatpush.bf16.msra.mxu0 %v1023
    %1087 = vmatpush.bf16.msra.mxu0 %v1019
    %1088 = vmatpush.bf16.msra.mxu0 %v1015
    %1089 = vmatpush.bf16.msra.mxu0 %v1011
    %1090 = vmatpush.bf16.msra.mxu0 %v1007
    %1091 = vmatmul.bf16.gmra.mxu0 %v106
    %v1092 = vpop.f32.mrf.mxu0
    %v1093 = vadd.f32 %v337, %v1092
    %v1094 = vpop.f32.mrf.mxu0
    %1095 = vdwg.mxu0
    %1096 = vmatpush.bf16.msra.mxu0 %v1036
    %1097 = vmatpush.bf16.msra.mxu0 %v1032
    %1098 = vmatpush.bf16.msra.mxu0 %v1028
    %1099 = vmatpush.bf16.msra.mxu0 %v1024
    %1100 = vmatpush.bf16.msra.mxu0 %v1020
    %1101 = vmatpush.bf16.msra.mxu0 %v1016
    %1102 = vmatpush.bf16.msra.mxu0 %v1012
    %1103 = vmatpush.bf16.msra.mxu0 %v1008
    %1104 = vmatmul.bf16.gmra.mxu0 %v106
    %v1105 = vpop.f32.mrf.mxu0
    %v1106 = vadd.f32 %v350, %v1105
    %v1107 = vpop.f32.mrf.mxu0
    %1108 = vdwg.mxu0
    %1109 = vmatpush.bf16.msra.mxu0 %v1037
    %1110 = vmatpush.bf16.msra.mxu0 %v1033
    %1111 = vmatpush.bf16.msra.mxu0 %v1029
    %1112 = vmatpush.bf16.msra.mxu0 %v1025
    %1113 = vmatpush.bf16.msra.mxu0 %v1021
    %1114 = vmatpush.bf16.msra.mxu0 %v1017
    %1115 = vmatpush.bf16.msra.mxu0 %v1013
    %1116 = vmatpush.bf16.msra.mxu0 %v1009
    %1117 = vmatmul.bf16.gmra.mxu0 %v106
    %v1118 = vpop.f32.mrf.mxu0
    %v1119 = vadd.f32 %v363, %v1118
    %v1120 = vpop.f32.mrf.mxu0
    %1121 = vdwg.mxu0
    %v1122 = vmul.f32 %v1080, 0.5
    %v1123 = vmul.f32 %v1093, 0.5
    %v1124 = vmul.f32 %v1106, 0.5
    %v1125 = vtanh.pop %v1122
    %v1126 = vtanh.pop %v1123
    %v1127 = vtanh.pop %v1124
    %v1128 = vadd.f32 %v1125, 1.0
    %v1129 = vadd.f32 %v1126, 1.0
    %v1130 = vadd.f32 %v1127, 1.0
    %v1131 = vmul.f32 %v1128, 0.5
    %v1132 = vmul.f32 %v1129, 0.5
    %v1133 = vmul.f32 %v1130, 0.5
    %v1134 = vtanh.pop %v1119
    %v1135 = vmul.f32 %v1132, %v107
    %v1136 = vmul.f32 %v1131, %v1134
    %v1137 = vadd.f32 %v1135, %v1136
    %v1138 = vtanh.pop %v1137
    %v1139 = vmul.f32 %v1133, %v1138
    %v1140 = vpack.c.bf16 %v1139, %v1139
    %s1141 = scalar_lea.vmem [#allocation7], 256
    %v1142 = vld [vmem:[%s1141] sm:$0xff]
    %v1143 = vld [vmem:[%s1141 + $0x8] sm:$0xff]
    %v1144 = vld [vmem:[%s1141 + $0x10] sm:$0xff]
    %v1145 = vld [vmem:[%s1141 + $0x18] sm:$0xff]
    %v1146 = vld [vmem:[%s1141 + $0x20] sm:$0xff]
    %v1147 = vld [vmem:[%s1141 + $0x28] sm:$0xff]
    %v1148 = vld [vmem:[%s1141 + $0x30] sm:$0xff]
    %v1149 = vld [vmem:[%s1141 + $0x38] sm:$0xff]
    %v1150 = vld [vmem:[%s1141 + $0x40] sm:$0xff]
    %v1151 = vld [vmem:[%s1141 + $0x48] sm:$0xff]
    %v1152 = vld [vmem:[%s1141 + $0x50] sm:$0xff]
    %v1153 = vld [vmem:[%s1141 + $0x58] sm:$0xff]
    %v1154 = vld [vmem:[%s1141 + $0x60] sm:$0xff]
    %v1155 = vld [vmem:[%s1141 + $0x68] sm:$0xff]
    %v1156 = vld [vmem:[%s1141 + $0x70] sm:$0xff]
    %v1157 = vld [vmem:[%s1141 + $0x78] sm:$0xff]
    %v1158 = vld [vmem:[%s1141 + $0x80] sm:$0xff]
    %v1159 = vld [vmem:[%s1141 + $0x88] sm:$0xff]
    %v1160 = vld [vmem:[%s1141 + $0x90] sm:$0xff]
    %v1161 = vld [vmem:[%s1141 + $0x98] sm:$0xff]
    %v1162 = vld [vmem:[%s1141 + $0xa0] sm:$0xff]
    %v1163 = vld [vmem:[%s1141 + $0xa8] sm:$0xff]
    %v1164 = vld [vmem:[%s1141 + $0xb0] sm:$0xff]
    %v1165 = vld [vmem:[%s1141 + $0xb8] sm:$0xff]
    %v1166 = vld [vmem:[%s1141 + $0xc0] sm:$0xff]
    %v1167 = vld [vmem:[%s1141 + $0xc8] sm:$0xff]
    %v1168 = vld [vmem:[%s1141 + $0xd0] sm:$0xff]
    %v1169 = vld [vmem:[%s1141 + $0xd8] sm:$0xff]
    %v1170 = vld [vmem:[%s1141 + $0xe0] sm:$0xff]
    %v1171 = vld [vmem:[%s1141 + $0xe8] sm:$0xff]
    %v1172 = vld [vmem:[%s1141 + $0xf0] sm:$0xff]
    %v1173 = vld [vmem:[%s1141 + $0xf8] sm:$0xff]
    %v1206 = vunpack.c.l.b16 %v1142
    %v1207 = vunpack.c.h.b16 %v1142
    %v1208 = vunpack.c.l.b16 %v1143
    %v1209 = vunpack.c.h.b16 %v1143
    %v1210 = vunpack.c.l.b16 %v1144
    %v1211 = vunpack.c.h.b16 %v1144
    %v1212 = vunpack.c.l.b16 %v1145
    %v1213 = vunpack.c.h.b16 %v1145
    %v1214 = vunpack.c.l.b16 %v1146
    %v1215 = vunpack.c.h.b16 %v1146
    %v1216 = vunpack.c.l.b16 %v1147
    %v1217 = vunpack.c.h.b16 %v1147
    %v1218 = vunpack.c.l.b16 %v1148
    %v1219 = vunpack.c.h.b16 %v1148
    %v1220 = vunpack.c.l.b16 %v1149
    %v1221 = vunpack.c.h.b16 %v1149
    %v1222 = vunpack.c.l.b16 %v1150
    %v1223 = vunpack.c.h.b16 %v1150
    %v1224 = vunpack.c.l.b16 %v1151
    %v1225 = vunpack.c.h.b16 %v1151
    %v1226 = vunpack.c.l.b16 %v1152
    %v1227 = vunpack.c.h.b16 %v1152
    %v1228 = vunpack.c.l.b16 %v1153
    %v1229 = vunpack.c.h.b16 %v1153
    %v1230 = vunpack.c.l.b16 %v1154
    %v1231 = vunpack.c.h.b16 %v1154
    %v1232 = vunpack.c.l.b16 %v1155
    %v1233 = vunpack.c.h.b16 %v1155
    %v1234 = vunpack.c.l.b16 %v1156
    %v1235 = vunpack.c.h.b16 %v1156
    %v1236 = vunpack.c.l.b16 %v1157
    %v1237 = vunpack.c.h.b16 %v1157
    %v1238 = vunpack.c.l.b16 %v1158
    %v1239 = vunpack.c.h.b16 %v1158
    %v1240 = vunpack.c.l.b16 %v1159
    %v1241 = vunpack.c.h.b16 %v1159
    %v1242 = vunpack.c.l.b16 %v1160
    %v1243 = vunpack.c.h.b16 %v1160
    %v1244 = vunpack.c.l.b16 %v1161
    %v1245 = vunpack.c.h.b16 %v1161
    %v1246 = vunpack.c.l.b16 %v1162
    %v1247 = vunpack.c.h.b16 %v1162
    %v1248 = vunpack.c.l.b16 %v1163
    %v1249 = vunpack.c.h.b16 %v1163
    %v1250 = vunpack.c.l.b16 %v1164
    %v1251 = vunpack.c.h.b16 %v1164
    %v1252 = vunpack.c.l.b16 %v1165
    %v1253 = vunpack.c.h.b16 %v1165
    %v1254 = vunpack.c.l.b16 %v1166
    %v1255 = vunpack.c.h.b16 %v1166
    %v1256 = vunpack.c.l.b16 %v1167
    %v1257 = vunpack.c.h.b16 %v1167
    %v1258 = vunpack.c.l.b16 %v1168
    %v1259 = vunpack.c.h.b16 %v1168
    %v1260 = vunpack.c.l.b16 %v1169
    %v1261 = vunpack.c.h.b16 %v1169
    %v1262 = vunpack.c.l.b16 %v1170
    %v1263 = vunpack.c.h.b16 %v1170
    %v1264 = vunpack.c.l.b16 %v1171
    %v1265 = vunpack.c.h.b16 %v1171
    %v1266 = vunpack.c.l.b16 %v1172
    %v1267 = vunpack.c.h.b16 %v1172
    %v1268 = vunpack.c.l.b16 %v1173
    %v1269 = vunpack.c.h.b16 %v1173
    %v1270 = vpack.c.b16 %v1210, %v1206
    %v1271 = vpack.c.b16 %v1211, %v1207
    %v1272 = vpack.c.b16 %v1212, %v1208
    %v1273 = vpack.c.b16 %v1213, %v1209
    %v1274 = vpack.c.b16 %v1218, %v1214
    %v1275 = vpack.c.b16 %v1219, %v1215
    %v1276 = vpack.c.b16 %v1220, %v1216
    %v1277 = vpack.c.b16 %v1221, %v1217
    %v1278 = vpack.c.b16 %v1226, %v1222
    %v1279 = vpack.c.b16 %v1227, %v1223
    %v1280 = vpack.c.b16 %v1228, %v1224
    %v1281 = vpack.c.b16 %v1229, %v1225
    %v1282 = vpack.c.b16 %v1234, %v1230
    %v1283 = vpack.c.b16 %v1235, %v1231
    %v1284 = vpack.c.b16 %v1236, %v1232
    %v1285 = vpack.c.b16 %v1237, %v1233
    %v1286 = vpack.c.b16 %v1242, %v1238
    %v1287 = vpack.c.b16 %v1243, %v1239
    %v1288 = vpack.c.b16 %v1244, %v1240
    %v1289 = vpack.c.b16 %v1245, %v1241
    %v1290 = vpack.c.b16 %v1250, %v1246
    %v1291 = vpack.c.b16 %v1251, %v1247
    %v1292 = vpack.c.b16 %v1252, %v1248
    %v1293 = vpack.c.b16 %v1253, %v1249
    %v1294 = vpack.c.b16 %v1258, %v1254
    %v1295 = vpack.c.b16 %v1259, %v1255
    %v1296 = vpack.c.b16 %v1260, %v1256
    %v1297 = vpack.c.b16 %v1261, %v1257
    %v1298 = vpack.c.b16 %v1266, %v1262
    %v1299 = vpack.c.b16 %v1267, %v1263
    %v1300 = vpack.c.b16 %v1268, %v1264
    %v1301 = vpack.c.b16 %v1269, %v1265
    %1334 = vmatpush.bf16.msra.mxu0 %v1298
    %1335 = vmatpush.bf16.msra.mxu0 %v1294
    %1336 = vmatpush.bf16.msra.mxu0 %v1290
    %1337 = vmatpush.bf16.msra.mxu0 %v1286
    %1338 = vmatpush.bf16.msra.mxu0 %v1282
    %1339 = vmatpush.bf16.msra.mxu0 %v1278
    %1340 = vmatpush.bf16.msra.mxu0 %v1274
    %1341 = vmatpush.bf16.msra.mxu0 %v1270
    %1342 = vmatmul.bf16.gmra.mxu0 %v1140
    %v1343 = vpop.f32.mrf.mxu0
    %v1344 = vadd.f32 %v580, %v1343
    %v1345 = vpop.f32.mrf.mxu0
    %1346 = vdwg.mxu0
    %1347 = vmatpush.bf16.msra.mxu0 %v1299
    %1348 = vmatpush.bf16.msra.mxu0 %v1295
    %1349 = vmatpush.bf16.msra.mxu0 %v1291
    %1350 = vmatpush.bf16.msra.mxu0 %v1287
    %1351 = vmatpush.bf16.msra.mxu0 %v1283
    %1352 = vmatpush.bf16.msra.mxu0 %v1279
    %1353 = vmatpush.bf16.msra.mxu0 %v1275
    %1354 = vmatpush.bf16.msra.mxu0 %v1271
    %1355 = vmatmul.bf16.gmra.mxu0 %v1140
    %v1356 = vpop.f32.mrf.mxu0
    %v1357 = vadd.f32 %v593, %v1356
    %v1358 = vpop.f32.mrf.mxu0
    %1359 = vdwg.mxu0
    %1360 = vmatpush.bf16.msra.mxu0 %v1300
    %1361 = vmatpush.bf16.msra.mxu0 %v1296
    %1362 = vmatpush.bf16.msra.mxu0 %v1292
    %1363 = vmatpush.bf16.msra.mxu0 %v1288
    %1364 = vmatpush.bf16.msra.mxu0 %v1284
    %1365 = vmatpush.bf16.msra.mxu0 %v1280
    %1366 = vmatpush.bf16.msra.mxu0 %v1276
    %1367 = vmatpush.bf16.msra.mxu0 %v1272
    %1368 = vmatmul.bf16.gmra.mxu0 %v1140
    %v1369 = vpop.f32.mrf.mxu0
    %v1370 = vadd.f32 %v606, %v1369
    %v1371 = vpop.f32.mrf.mxu0
    %1372 = vdwg.mxu0
    %1373 = vmatpush.bf16.msra.mxu0 %v1301
    %1374 = vmatpush.bf16.msra.mxu0 %v1297
    %1375 = vmatpush.bf16.msra.mxu0 %v1293
    %1376 = vmatpush.bf16.msra.mxu0 %v1289
    %1377 = vmatpush.bf16.msra.mxu0 %v1285
    %1378 = vmatpush.bf16.msra.mxu0 %v1281
    %1379 = vmatpush.bf16.msra.mxu0 %v1277
    %1380 = vmatpush.bf16.msra.mxu0 %v1273
    %1381 = vmatmul.bf16.gmra.mxu0 %v1140
    %v1382 = vpop.f32.mrf.mxu0
    %v1383 = vadd.f32 %v619, %v1382
    %v1384 = vpop.f32.mrf.mxu0
    %1385 = vdwg.mxu0
    %v1386 = vmul.f32 %v1344, 0.5
    %v1387 = vmul.f32 %v1357, 0.5
    %v1388 = vmul.f32 %v1370, 0.5
    %v1389 = vtanh.pop %v1386
    %v1390 = vtanh.pop %v1387
    %v1391 = vtanh.pop %v1388
    %v1392 = vadd.f32 %v1389, 1.0
    %v1393 = vadd.f32 %v1390, 1.0
    %v1394 = vadd.f32 %v1391, 1.0
    %v1395 = vmul.f32 %v1392, 0.5
    %v1396 = vmul.f32 %v1393, 0.5
    %v1397 = vmul.f32 %v1394, 0.5
    %v1398 = vtanh.pop %v1383
    %v1399 = vmul.f32 %v1396, %v109
    %v1400 = vmul.f32 %v1395, %v1398
    %v1401 = vadd.f32 %v1399, %v1400
    %v1402 = vtanh.pop %v1401
    %v1403 = vmul.f32 %v1397, %v1402
    %v1404 = vpack.c.bf16 %v1403, %v1403
    %s1405 = scalar_lea.vmem [#allocation7], 512
    %v1406 = vld [vmem:[%s1405] sm:$0xff]
    %v1407 = vld [vmem:[%s1405 + $0x8] sm:$0xff]
    %v1408 = vld [vmem:[%s1405 + $0x10] sm:$0xff]
    %v1409 = vld [vmem:[%s1405 + $0x18] sm:$0xff]
    %v1410 = vld [vmem:[%s1405 + $0x20] sm:$0xff]
    %v1411 = vld [vmem:[%s1405 + $0x28] sm:$0xff]
    %v1412 = vld [vmem:[%s1405 + $0x30] sm:$0xff]
    %v1413 = vld [vmem:[%s1405 + $0x38] sm:$0xff]
    %v1414 = vld [vmem:[%s1405 + $0x40] sm:$0xff]
    %v1415 = vld [vmem:[%s1405 + $0x48] sm:$0xff]
    %v1416 = vld [vmem:[%s1405 + $0x50] sm:$0xff]
    %v1417 = vld [vmem:[%s1405 + $0x58] sm:$0xff]
    %v1418 = vld [vmem:[%s1405 + $0x60] sm:$0xff]
    %v1419 = vld [vmem:[%s1405 + $0x68] sm:$0xff]
    %v1420 = vld [vmem:[%s1405 + $0x70] sm:$0xff]
    %v1421 = vld [vmem:[%s1405 + $0x78] sm:$0xff]
    %v1422 = vld [vmem:[%s1405 + $0x80] sm:$0xff]
    %v1423 = vld [vmem:[%s1405 + $0x88] sm:$0xff]
    %v1424 = vld [vmem:[%s1405 + $0x90] sm:$0xff]
    %v1425 = vld [vmem:[%s1405 + $0x98] sm:$0xff]
    %v1426 = vld [vmem:[%s1405 + $0xa0] sm:$0xff]
    %v1427 = vld [vmem:[%s1405 + $0xa8] sm:$0xff]
    %v1428 = vld [vmem:[%s1405 + $0xb0] sm:$0xff]
    %v1429 = vld [vmem:[%s1405 + $0xb8] sm:$0xff]
    %v1430 = vld [vmem:[%s1405 + $0xc0] sm:$0xff]
    %v1431 = vld [vmem:[%s1405 + $0xc8] sm:$0xff]
    %v1432 = vld [vmem:[%s1405 + $0xd0] sm:$0xff]
    %v1433 = vld [vmem:[%s1405 + $0xd8] sm:$0xff]
    %v1434 = vld [vmem:[%s1405 + $0xe0] sm:$0xff]
    %v1435 = vld [vmem:[%s1405 + $0xe8] sm:$0xff]
    %v1436 = vld [vmem:[%s1405 + $0xf0] sm:$0xff]
    %v1437 = vld [vmem:[%s1405 + $0xf8] sm:$0xff]
    %v1470 = vunpack.c.l.b16 %v1406
    %v1471 = vunpack.c.h.b16 %v1406
    %v1472 = vunpack.c.l.b16 %v1407
    %v1473 = vunpack.c.h.b16 %v1407
    %v1474 = vunpack.c.l.b16 %v1408
    %v1475 = vunpack.c.h.b16 %v1408
    %v1476 = vunpack.c.l.b16 %v1409
    %v1477 = vunpack.c.h.b16 %v1409
    %v1478 = vunpack.c.l.b16 %v1410
    %v1479 = vunpack.c.h.b16 %v1410
    %v1480 = vunpack.c.l.b16 %v1411
    %v1481 = vunpack.c.h.b16 %v1411
    %v1482 = vunpack.c.l.b16 %v1412
    %v1483 = vunpack.c.h.b16 %v1412
    %v1484 = vunpack.c.l.b16 %v1413
    %v1485 = vunpack.c.h.b16 %v1413
    %v1486 = vunpack.c.l.b16 %v1414
    %v1487 = vunpack.c.h.b16 %v1414
    %v1488 = vunpack.c.l.b16 %v1415
    %v1489 = vunpack.c.h.b16 %v1415
    %v1490 = vunpack.c.l.b16 %v1416
    %v1491 = vunpack.c.h.b16 %v1416
    %v1492 = vunpack.c.l.b16 %v1417
    %v1493 = vunpack.c.h.b16 %v1417
    %v1494 = vunpack.c.l.b16 %v1418
    %v1495 = vunpack.c.h.b16 %v1418
    %v1496 = vunpack.c.l.b16 %v1419
    %v1497 = vunpack.c.h.b16 %v1419
    %v1498 = vunpack.c.l.b16 %v1420
    %v1499 = vunpack.c.h.b16 %v1420
    %v1500 = vunpack.c.l.b16 %v1421
    %v1501 = vunpack.c.h.b16 %v1421
    %v1502 = vunpack.c.l.b16 %v1422
    %v1503 = vunpack.c.h.b16 %v1422
    %v1504 = vunpack.c.l.b16 %v1423
    %v1505 = vunpack.c.h.b16 %v1423
    %v1506 = vunpack.c.l.b16 %v1424
    %v1507 = vunpack.c.h.b16 %v1424
    %v1508 = vunpack.c.l.b16 %v1425
    %v1509 = vunpack.c.h.b16 %v1425
    %v1510 = vunpack.c.l.b16 %v1426
    %v1511 = vunpack.c.h.b16 %v1426
    %v1512 = vunpack.c.l.b16 %v1427
    %v1513 = vunpack.c.h.b16 %v1427
    %v1514 = vunpack.c.l.b16 %v1428
    %v1515 = vunpack.c.h.b16 %v1428
    %v1516 = vunpack.c.l.b16 %v1429
    %v1517 = vunpack.c.h.b16 %v1429
    %v1518 = vunpack.c.l.b16 %v1430
    %v1519 = vunpack.c.h.b16 %v1430
    %v1520 = vunpack.c.l.b16 %v1431
    %v1521 = vunpack.c.h.b16 %v1431
    %v1522 = vunpack.c.l.b16 %v1432
    %v1523 = vunpack.c.h.b16 %v1432
    %v1524 = vunpack.c.l.b16 %v1433
    %v1525 = vunpack.c.h.b16 %v1433
    %v1526 = vunpack.c.l.b16 %v1434
    %v1527 = vunpack.c.h.b16 %v1434
    %v1528 = vunpack.c.l.b16 %v1435
    %v1529 = vunpack.c.h.b16 %v1435
    %v1530 = vunpack.c.l.b16 %v1436
    %v1531 = vunpack.c.h.b16 %v1436
    %v1532 = vunpack.c.l.b16 %v1437
    %v1533 = vunpack.c.h.b16 %v1437
    %v1534 = vpack.c.b16 %v1474, %v1470
    %v1535 = vpack.c.b16 %v1475, %v1471
    %v1536 = vpack.c.b16 %v1476, %v1472
    %v1537 = vpack.c.b16 %v1477, %v1473
    %v1538 = vpack.c.b16 %v1482, %v1478
    %v1539 = vpack.c.b16 %v1483, %v1479
    %v1540 = vpack.c.b16 %v1484, %v1480
    %v1541 = vpack.c.b16 %v1485, %v1481
    %v1542 = vpack.c.b16 %v1490, %v1486
    %v1543 = vpack.c.b16 %v1491, %v1487
    %v1544 = vpack.c.b16 %v1492, %v1488
    %v1545 = vpack.c.b16 %v1493, %v1489
    %v1546 = vpack.c.b16 %v1498, %v1494
    %v1547 = vpack.c.b16 %v1499, %v1495
    %v1548 = vpack.c.b16 %v1500, %v1496
    %v1549 = vpack.c.b16 %v1501, %v1497
    %v1550 = vpack.c.b16 %v1506, %v1502
    %v1551 = vpack.c.b16 %v1507, %v1503
    %v1552 = vpack.c.b16 %v1508, %v1504
    %v1553 = vpack.c.b16 %v1509, %v1505
    %v1554 = vpack.c.b16 %v1514, %v1510
    %v1555 = vpack.c.b16 %v1515, %v1511
    %v1556 = vpack.c.b16 %v1516, %v1512
    %v1557 = vpack.c.b16 %v1517, %v1513
    %v1558 = vpack.c.b16 %v1522, %v1518
    %v1559 = vpack.c.b16 %v1523, %v1519
    %v1560 = vpack.c.b16 %v1524, %v1520
    %v1561 = vpack.c.b16 %v1525, %v1521
    %v1562 = vpack.c.b16 %v1530, %v1526
    %v1563 = vpack.c.b16 %v1531, %v1527
    %v1564 = vpack.c.b16 %v1532, %v1528
    %v1565 = vpack.c.b16 %v1533, %v1529
    %1598 = vmatpush.bf16.msra.mxu0 %v1562
    %1599 = vmatpush.bf16.msra.mxu0 %v1558
    %1600 = vmatpush.bf16.msra.mxu0 %v1554
    %1601 = vmatpush.bf16.msra.mxu0 %v1550
    %1602 = vmatpush.bf16.msra.mxu0 %v1546
    %1603 = vmatpush.bf16.msra.mxu0 %v1542
    %1604 = vmatpush.bf16.msra.mxu0 %v1538
    %1605 = vmatpush.bf16.msra.mxu0 %v1534
    %1606 = vmatmul.bf16.gmra.mxu0 %v1404
    %v1607 = vpop.f32.mrf.mxu0
    %v1608 = vadd.f32 %v836, %v1607
    %v1609 = vpop.f32.mrf.mxu0
    %1610 = vdwg.mxu0
    %1611 = vmatpush.bf16.msra.mxu0 %v1563
    %1612 = vmatpush.bf16.msra.mxu0 %v1559
    %1613 = vmatpush.bf16.msra.mxu0 %v1555
    %1614 = vmatpush.bf16.msra.mxu0 %v1551
    %1615 = vmatpush.bf16.msra.mxu0 %v1547
    %1616 = vmatpush.bf16.msra.mxu0 %v1543
    %1617 = vmatpush.bf16.msra.mxu0 %v1539
    %1618 = vmatpush.bf16.msra.mxu0 %v1535
    %1619 = vmatmul.bf16.gmra.mxu0 %v1404
    %v1620 = vpop.f32.mrf.mxu0
    %v1621 = vadd.f32 %v849, %v1620
    %v1622 = vpop.f32.mrf.mxu0
    %1623 = vdwg.mxu0
    %1624 = vmatpush.bf16.msra.mxu0 %v1564
    %1625 = vmatpush.bf16.msra.mxu0 %v1560
    %1626 = vmatpush.bf16.msra.mxu0 %v1556
    %1627 = vmatpush.bf16.msra.mxu0 %v1552
    %1628 = vmatpush.bf16.msra.mxu0 %v1548
    %1629 = vmatpush.bf16.msra.mxu0 %v1544
    %1630 = vmatpush.bf16.msra.mxu0 %v1540
    %1631 = vmatpush.bf16.msra.mxu0 %v1536
    %1632 = vmatmul.bf16.gmra.mxu0 %v1404
    %v1633 = vpop.f32.mrf.mxu0
    %v1634 = vadd.f32 %v862, %v1633
    %v1635 = vpop.f32.mrf.mxu0
    %1636 = vdwg.mxu0
    %1637 = vmatpush.bf16.msra.mxu0 %v1565
    %1638 = vmatpush.bf16.msra.mxu0 %v1561
    %1639 = vmatpush.bf16.msra.mxu0 %v1557
    %1640 = vmatpush.bf16.msra.mxu0 %v1553
    %1641 = vmatpush.bf16.msra.mxu0 %v1549
    %1642 = vmatpush.bf16.msra.mxu0 %v1545
    %1643 = vmatpush.bf16.msra.mxu0 %v1541
    %1644 = vmatpush.bf16.msra.mxu0 %v1537
    %1645 = vmatmul.bf16.gmra.mxu0 %v1404
    %v1646 = vpop.f32.mrf.mxu0
    %v1647 = vadd.f32 %v875, %v1646
    %v1648 = vpop.f32.mrf.mxu0
    %1649 = vdwg.mxu0
    %v1650 = vmul.f32 %v1608, 0.5
    %v1651 = vmul.f32 %v1621, 0.5
    %v1652 = vmul.f32 %v1634, 0.5
    %v1653 = vtanh.pop %v1650
    %v1654 = vtanh.pop %v1651
    %v1655 = vtanh.pop %v1652
    %v1656 = vadd.f32 %v1653, 1.0
    %v1657 = vadd.f32 %v1654, 1.0
    %v1658 = vadd.f32 %v1655, 1.0
    %v1659 = vmul.f32 %v1656, 0.5
    %v1660 = vmul.f32 %v1657, 0.5
    %v1661 = vmul.f32 %v1658, 0.5
    %v1662 = vtanh.pop %v1647
    %v1663 = vmul.f32 %v1660, %v111
    %v1664 = vmul.f32 %v1659, %v1662
    %v1665 = vadd.f32 %v1663, %v1664
    %v1666 = vtanh.pop %v1665
    %v1667 = vmul.f32 %v1661, %v1666
    %v1668 = vpack.c.bf16 %v1667, %v1667
    %1669 = vst [vmem:[#allocation11] sm:$0xff] %v1667
    %v1670 = vld [vmem:[#allocation8] sm:$0xff]
    %v1671 = vld [vmem:[#allocation8 + $0x8] sm:$0xff]
    %v1672 = vld [vmem:[#allocation8 + $0x10] sm:$0xff]
    %v1673 = vld [vmem:[#allocation8 + $0x18] sm:$0xff]
    %v1674 = vld [vmem:[#allocation8 + $0x20] sm:$0xff]
    %v1675 = vld [vmem:[#allocation8 + $0x28] sm:$0xff]
    %v1676 = vld [vmem:[#allocation8 + $0x30] sm:$0xff]
    %v1677 = vld [vmem:[#allocation8 + $0x38] sm:$0xff]
    %v1678 = vld [vmem:[#allocation8 + $0x40] sm:$0xff]
    %v1679 = vld [vmem:[#allocation8 + $0x48] sm:$0xff]
    %v1680 = vld [vmem:[#allocation8 + $0x50] sm:$0xff]
    %v1681 = vld [vmem:[#allocation8 + $0x58] sm:$0xff]
    %v1682 = vld [vmem:[#allocation8 + $0x60] sm:$0xff]
    %v1683 = vld [vmem:[#allocation8 + $0x68] sm:$0xff]
    %v1684 = vld [vmem:[#allocation8 + $0x70] sm:$0xff]
    %v1685 = vld [vmem:[#allocation8 + $0x78] sm:$0xff]
    %v1686 = vld [vmem:[#allocation8 + $0x80] sm:$0xff]
    %v1687 = vld [vmem:[#allocation8 + $0x88] sm:$0xff]
    %v1688 = vld [vmem:[#allocation8 + $0x90] sm:$0xff]
    %v1689 = vld [vmem:[#allocation8 + $0x98] sm:$0xff]
    %v1690 = vld [vmem:[#allocation8 + $0xa0] sm:$0xff]
    %v1691 = vld [vmem:[#allocation8 + $0xa8] sm:$0xff]
    %v1692 = vld [vmem:[#allocation8 + $0xb0] sm:$0xff]
    %v1693 = vld [vmem:[#allocation8 + $0xb8] sm:$0xff]
    %v1694 = vld [vmem:[#allocation8 + $0xc0] sm:$0xff]
    %v1695 = vld [vmem:[#allocation8 + $0xc8] sm:$0xff]
    %v1696 = vld [vmem:[#allocation8 + $0xd0] sm:$0xff]
    %v1697 = vld [vmem:[#allocation8 + $0xd8] sm:$0xff]
    %v1698 = vld [vmem:[#allocation8 + $0xe0] sm:$0xff]
    %v1699 = vld [vmem:[#allocation8 + $0xe8] sm:$0xff]
    %v1700 = vld [vmem:[#allocation8 + $0xf0] sm:$0xff]
    %v1701 = vld [vmem:[#allocation8 + $0xf8] sm:$0xff]
    %v1702 = vld [vmem:[#allocation10] sm:$0xf]
    %v1704 = vperm.slane %v1702, 0
    %v1705 = vperm.slane %v1702, 1
    %v1706 = vperm.slane %v1702, 2
    %v1707 = vperm.slane %v1702, 3
    %v1744 = vunpack.c.l.b16 %v1670
    %v1745 = vunpack.c.h.b16 %v1670
    %v1746 = vunpack.c.l.b16 %v1671
    %v1747 = vunpack.c.h.b16 %v1671
    %v1748 = vunpack.c.l.b16 %v1672
    %v1749 = vunpack.c.h.b16 %v1672
    %v1750 = vunpack.c.l.b16 %v1673
    %v1751 = vunpack.c.h.b16 %v1673
    %v1752 = vunpack.c.l.b16 %v1674
    %v1753 = vunpack.c.h.b16 %v1674
    %v1754 = vunpack.c.l.b16 %v1675
    %v1755 = vunpack.c.h.b16 %v1675
    %v1756 = vunpack.c.l.b16 %v1676
    %v1757 = vunpack.c.h.b16 %v1676
    %v1758 = vunpack.c.l.b16 %v1677
    %v1759 = vunpack.c.h.b16 %v1677
    %v1760 = vunpack.c.l.b16 %v1678
    %v1761 = vunpack.c.h.b16 %v1678
    %v1762 = vunpack.c.l.b16 %v1679
    %v1763 = vunpack.c.h.b16 %v1679
    %v1764 = vunpack.c.l.b16 %v1680
    %v1765 = vunpack.c.h.b16 %v1680
    %v1766 = vunpack.c.l.b16 %v1681
    %v1767 = vunpack.c.h.b16 %v1681
    %v1768 = vunpack.c.l.b16 %v1682
    %v1769 = vunpack.c.h.b16 %v1682
    %v1770 = vunpack.c.l.b16 %v1683
    %v1771 = vunpack.c.h.b16 %v1683
    %v1772 = vunpack.c.l.b16 %v1684
    %v1773 = vunpack.c.h.b16 %v1684
    %v1774 = vunpack.c.l.b16 %v1685
    %v1775 = vunpack.c.h.b16 %v1685
    %v1776 = vunpack.c.l.b16 %v1686
    %v1777 = vunpack.c.h.b16 %v1686
    %v1778 = vunpack.c.l.b16 %v1687
    %v1779 = vunpack.c.h.b16 %v1687
    %v1780 = vunpack.c.l.b16 %v1688
    %v1781 = vunpack.c.h.b16 %v1688
    %v1782 = vunpack.c.l.b16 %v1689
    %v1783 = vunpack.c.h.b16 %v1689
    %v1784 = vunpack.c.l.b16 %v1690
    %v1785 = vunpack.c.h.b16 %v1690
    %v1786 = vunpack.c.l.b16 %v1691
    %v1787 = vunpack.c.h.b16 %v1691
    %v1788 = vunpack.c.l.b16 %v1692
    %v1789 = vunpack.c.h.b16 %v1692
    %v1790 = vunpack.c.l.b16 %v1693
    %v1791 = vunpack.c.h.b16 %v1693
    %v1792 = vunpack.c.l.b16 %v1694
    %v1793 = vunpack.c.h.b16 %v1694
    %v1794 = vunpack.c.l.b16 %v1695
    %v1795 = vunpack.c.h.b16 %v1695
    %v1796 = vunpack.c.l.b16 %v1696
    %v1797 = vunpack.c.h.b16 %v1696
    %v1798 = vunpack.c.l.b16 %v1697
    %v1799 = vunpack.c.h.b16 %v1697
    %v1800 = vunpack.c.l.b16 %v1698
    %v1801 = vunpack.c.h.b16 %v1698
    %v1802 = vunpack.c.l.b16 %v1699
    %v1803 = vunpack.c.h.b16 %v1699
    %v1804 = vunpack.c.l.b16 %v1700
    %v1805 = vunpack.c.h.b16 %v1700
    %v1806 = vunpack.c.l.b16 %v1701
    %v1807 = vunpack.c.h.b16 %v1701
    %v1808 = vpack.c.b16 %v1748, %v1744
    %v1809 = vpack.c.b16 %v1749, %v1745
    %v1810 = vpack.c.b16 %v1750, %v1746
    %v1811 = vpack.c.b16 %v1751, %v1747
    %v1812 = vpack.c.b16 %v1756, %v1752
    %v1813 = vpack.c.b16 %v1757, %v1753
    %v1814 = vpack.c.b16 %v1758, %v1754
    %v1815 = vpack.c.b16 %v1759, %v1755
    %v1816 = vpack.c.b16 %v1764, %v1760
    %v1817 = vpack.c.b16 %v1765, %v1761
    %v1818 = vpack.c.b16 %v1766, %v1762
    %v1819 = vpack.c.b16 %v1767, %v1763
    %v1820 = vpack.c.b16 %v1772, %v1768
    %v1821 = vpack.c.b16 %v1773, %v1769
    %v1822 = vpack.c.b16 %v1774, %v1770
    %v1823 = vpack.c.b16 %v1775, %v1771
    %v1824 = vpack.c.b16 %v1780, %v1776
    %v1825 = vpack.c.b16 %v1781, %v1777
    %v1826 = vpack.c.b16 %v1782, %v1778
    %v1827 = vpack.c.b16 %v1783, %v1779
    %v1828 = vpack.c.b16 %v1788, %v1784
    %v1829 = vpack.c.b16 %v1789, %v1785
    %v1830 = vpack.c.b16 %v1790, %v1786
    %v1831 = vpack.c.b16 %v1791, %v1787
    %v1832 = vpack.c.b16 %v1796, %v1792
    %v1833 = vpack.c.b16 %v1797, %v1793
    %v1834 = vpack.c.b16 %v1798, %v1794
    %v1835 = vpack.c.b16 %v1799, %v1795
    %v1836 = vpack.c.b16 %v1804, %v1800
    %v1837 = vpack.c.b16 %v1805, %v1801
    %v1838 = vpack.c.b16 %v1806, %v1802
    %v1839 = vpack.c.b16 %v1807, %v1803
    %1872 = vmatpush.bf16.msra.mxu0 %v1836
    %1873 = vmatpush.bf16.msra.mxu0 %v1832
    %1874 = vmatpush.bf16.msra.mxu0 %v1828
    %1875 = vmatpush.bf16.msra.mxu0 %v1824
    %1876 = vmatpush.bf16.msra.mxu0 %v1820
    %1877 = vmatpush.bf16.msra.mxu0 %v1816
    %1878 = vmatpush.bf16.msra.mxu0 %v1812
    %1879 = vmatpush.bf16.msra.mxu0 %v1808
    %1880 = vmatmul.bf16.gmra.mxu0 %v1140
    %v1881 = vpop.f32.mrf.mxu0
    %v1882 = vadd.f32 %v1704, %v1881
    %v1883 = vpop.f32.mrf.mxu0
    %1884 = vdwg.mxu0
    %1885 = vmatpush.bf16.msra.mxu0 %v1837
    %1886 = vmatpush.bf16.msra.mxu0 %v1833
    %1887 = vmatpush.bf16.msra.mxu0 %v1829
    %1888 = vmatpush.bf16.msra.mxu0 %v1825
    %1889 = vmatpush.bf16.msra.mxu0 %v1821
    %1890 = vmatpush.bf16.msra.mxu0 %v1817
    %1891 = vmatpush.bf16.msra.mxu0 %v1813
    %1892 = vmatpush.bf16.msra.mxu0 %v1809
    %1893 = vmatmul.bf16.gmra.mxu0 %v1140
    %v1894 = vpop.f32.mrf.mxu0
    %v1895 = vadd.f32 %v1705, %v1894
    %v1896 = vpop.f32.mrf.mxu0
    %1897 = vdwg.mxu0
    %1898 = vmatpush.bf16.msra.mxu0 %v1838
    %1899 = vmatpush.bf16.msra.mxu0 %v1834
    %1900 = vmatpush.bf16.msra.mxu0 %v1830
    %1901 = vmatpush.bf16.msra.mxu0 %v1826
    %1902 = vmatpush.bf16.msra.mxu0 %v1822
    %1903 = vmatpush.bf16.msra.mxu0 %v1818
    %1904 = vmatpush.bf16.msra.mxu0 %v1814
    %1905 = vmatpush.bf16.msra.mxu0 %v1810
    %1906 = vmatmul.bf16.gmra.mxu0 %v1140
    %v1907 = vpop.f32.mrf.mxu0
    %v1908 = vadd.f32 %v1706, %v1907
    %v1909 = vpop.f32.mrf.mxu0
    %1910 = vdwg.mxu0
    %1911 = vmatpush.bf16.msra.mxu0 %v1839
    %1912 = vmatpush.bf16.msra.mxu0 %v1835
    %1913 = vmatpush.bf16.msra.mxu0 %v1831
    %1914 = vmatpush.bf16.msra.mxu0 %v1827
    %1915 = vmatpush.bf16.msra.mxu0 %v1823
    %1916 = vmatpush.bf16.msra.mxu0 %v1819
    %1917 = vmatpush.bf16.msra.mxu0 %v1815
    %1918 = vmatpush.bf16.msra.mxu0 %v1811
    %1919 = vmatmul.bf16.gmra.mxu0 %v1140
    %v1920 = vpop.f32.mrf.mxu0
    %v1921 = vadd.f32 %v1707, %v1920
    %v1922 = vpop.f32.mrf.mxu0
    %1923 = vdwg.mxu0
    %v1924 = vld [vmem:[%s366] sm:$0xff]
    %v1925 = vld [vmem:[%s366 + $0x8] sm:$0xff]
    %v1926 = vld [vmem:[%s366 + $0x10] sm:$0xff]
    %v1927 = vld [vmem:[%s366 + $0x18] sm:$0xff]
    %v1928 = vld [vmem:[%s366 + $0x20] sm:$0xff]
    %v1929 = vld [vmem:[%s366 + $0x28] sm:$0xff]
    %v1930 = vld [vmem:[%s366 + $0x30] sm:$0xff]
    %v1931 = vld [vmem:[%s366 + $0x38] sm:$0xff]
    %v1932 = vld [vmem:[%s366 + $0x40] sm:$0xff]
    %v1933 = vld [vmem:[%s366 + $0x48] sm:$0xff]
    %v1934 = vld [vmem:[%s366 + $0x50] sm:$0xff]
    %v1935 = vld [vmem:[%s366 + $0x58] sm:$0xff]
    %v1936 = vld [vmem:[%s366 + $0x60] sm:$0xff]
    %v1937 = vld [vmem:[%s366 + $0x68] sm:$0xff]
    %v1938 = vld [vmem:[%s366 + $0x70] sm:$0xff]
    %v1939 = vld [vmem:[%s366 + $0x78] sm:$0xff]
    %v1940 = vld [vmem:[%s366 + $0x80] sm:$0xff]
    %v1941 = vld [vmem:[%s366 + $0x88] sm:$0xff]
    %v1942 = vld [vmem:[%s366 + $0x90] sm:$0xff]
    %v1943 = vld [vmem:[%s366 + $0x98] sm:$0xff]
    %v1944 = vld [vmem:[%s366 + $0xa0] sm:$0xff]
    %v1945 = vld [vmem:[%s366 + $0xa8] sm:$0xff]
    %v1946 = vld [vmem:[%s366 + $0xb0] sm:$0xff]
    %v1947 = vld [vmem:[%s366 + $0xb8] sm:$0xff]
    %v1948 = vld [vmem:[%s366 + $0xc0] sm:$0xff]
    %v1949 = vld [vmem:[%s366 + $0xc8] sm:$0xff]
    %v1950 = vld [vmem:[%s366 + $0xd0] sm:$0xff]
    %v1951 = vld [vmem:[%s366 + $0xd8] sm:$0xff]
    %v1952 = vld [vmem:[%s366 + $0xe0] sm:$0xff]
    %v1953 = vld [vmem:[%s366 + $0xe8] sm:$0xff]
    %v1954 = vld [vmem:[%s366 + $0xf0] sm:$0xff]
    %v1955 = vld [vmem:[%s366 + $0xf8] sm:$0xff]
    %v1956 = vld [vmem:[%s399] sm:$0xf]
    %v1958 = vperm.slane %v1956, 0
    %v1959 = vperm.slane %v1956, 1
    %v1960 = vperm.slane %v1956, 2
    %v1961 = vperm.slane %v1956, 3
    %v1998 = vunpack.c.l.b16 %v1924
    %v1999 = vunpack.c.h.b16 %v1924
    %v2000 = vunpack.c.l.b16 %v1925
    %v2001 = vunpack.c.h.b16 %v1925
    %v2002 = vunpack.c.l.b16 %v1926
    %v2003 = vunpack.c.h.b16 %v1926
    %v2004 = vunpack.c.l.b16 %v1927
    %v2005 = vunpack.c.h.b16 %v1927
    %v2006 = vunpack.c.l.b16 %v1928
    %v2007 = vunpack.c.h.b16 %v1928
    %v2008 = vunpack.c.l.b16 %v1929
    %v2009 = vunpack.c.h.b16 %v1929
    %v2010 = vunpack.c.l.b16 %v1930
    %v2011 = vunpack.c.h.b16 %v1930
    %v2012 = vunpack.c.l.b16 %v1931
    %v2013 = vunpack.c.h.b16 %v1931
    %v2014 = vunpack.c.l.b16 %v1932
    %v2015 = vunpack.c.h.b16 %v1932
    %v2016 = vunpack.c.l.b16 %v1933
    %v2017 = vunpack.c.h.b16 %v1933
    %v2018 = vunpack.c.l.b16 %v1934
    %v2019 = vunpack.c.h.b16 %v1934
    %v2020 = vunpack.c.l.b16 %v1935
    %v2021 = vunpack.c.h.b16 %v1935
    %v2022 = vunpack.c.l.b16 %v1936
    %v2023 = vunpack.c.h.b16 %v1936
    %v2024 = vunpack.c.l.b16 %v1937
    %v2025 = vunpack.c.h.b16 %v1937
    %v2026 = vunpack.c.l.b16 %v1938
    %v2027 = vunpack.c.h.b16 %v1938
    %v2028 = vunpack.c.l.b16 %v1939
    %v2029 = vunpack.c.h.b16 %v1939
    %v2030 = vunpack.c.l.b16 %v1940
    %v2031 = vunpack.c.h.b16 %v1940
    %v2032 = vunpack.c.l.b16 %v1941
    %v2033 = vunpack.c.h.b16 %v1941
    %v2034 = vunpack.c.l.b16 %v1942
    %v2035 = vunpack.c.h.b16 %v1942
    %v2036 = vunpack.c.l.b16 %v1943
    %v2037 = vunpack.c.h.b16 %v1943
    %v2038 = vunpack.c.l.b16 %v1944
    %v2039 = vunpack.c.h.b16 %v1944
    %v2040 = vunpack.c.l.b16 %v1945
    %v2041 = vunpack.c.h.b16 %v1945
    %v2042 = vunpack.c.l.b16 %v1946
    %v2043 = vunpack.c.h.b16 %v1946
    %v2044 = vunpack.c.l.b16 %v1947
    %v2045 = vunpack.c.h.b16 %v1947
    %v2046 = vunpack.c.l.b16 %v1948
    %v2047 = vunpack.c.h.b16 %v1948
    %v2048 = vunpack.c.l.b16 %v1949
    %v2049 = vunpack.c.h.b16 %v1949
    %v2050 = vunpack.c.l.b16 %v1950
    %v2051 = vunpack.c.h.b16 %v1950
    %v2052 = vunpack.c.l.b16 %v1951
    %v2053 = vunpack.c.h.b16 %v1951
    %v2054 = vunpack.c.l.b16 %v1952
    %v2055 = vunpack.c.h.b16 %v1952
    %v2056 = vunpack.c.l.b16 %v1953
    %v2057 = vunpack.c.h.b16 %v1953
    %v2058 = vunpack.c.l.b16 %v1954
    %v2059 = vunpack.c.h.b16 %v1954
    %v2060 = vunpack.c.l.b16 %v1955
    %v2061 = vunpack.c.h.b16 %v1955
    %v2062 = vpack.c.b16 %v2002, %v1998
    %v2063 = vpack.c.b16 %v2003, %v1999
    %v2064 = vpack.c.b16 %v2004, %v2000
    %v2065 = vpack.c.b16 %v2005, %v2001
    %v2066 = vpack.c.b16 %v2010, %v2006
    %v2067 = vpack.c.b16 %v2011, %v2007
    %v2068 = vpack.c.b16 %v2012, %v2008
    %v2069 = vpack.c.b16 %v2013, %v2009
    %v2070 = vpack.c.b16 %v2018, %v2014
    %v2071 = vpack.c.b16 %v2019, %v2015
    %v2072 = vpack.c.b16 %v2020, %v2016
    %v2073 = vpack.c.b16 %v2021, %v2017
    %v2074 = vpack.c.b16 %v2026, %v2022
    %v2075 = vpack.c.b16 %v2027, %v2023
    %v2076 = vpack.c.b16 %v2028, %v2024
    %v2077 = vpack.c.b16 %v2029, %v2025
    %v2078 = vpack.c.b16 %v2034, %v2030
    %v2079 = vpack.c.b16 %v2035, %v2031
    %v2080 = vpack.c.b16 %v2036, %v2032
    %v2081 = vpack.c.b16 %v2037, %v2033
    %v2082 = vpack.c.b16 %v2042, %v2038
    %v2083 = vpack.c.b16 %v2043, %v2039
    %v2084 = vpack.c.b16 %v2044, %v2040
    %v2085 = vpack.c.b16 %v2045, %v2041
    %v2086 = vpack.c.b16 %v2050, %v2046
    %v2087 = vpack.c.b16 %v2051, %v2047
    %v2088 = vpack.c.b16 %v2052, %v2048
    %v2089 = vpack.c.b16 %v2053, %v2049
    %v2090 = vpack.c.b16 %v2058, %v2054
    %v2091 = vpack.c.b16 %v2059, %v2055
    %v2092 = vpack.c.b16 %v2060, %v2056
    %v2093 = vpack.c.b16 %v2061, %v2057
    %2126 = vmatpush.bf16.msra.mxu0 %v2090
    %2127 = vmatpush.bf16.msra.mxu0 %v2086
    %2128 = vmatpush.bf16.msra.mxu0 %v2082
    %2129 = vmatpush.bf16.msra.mxu0 %v2078
    %2130 = vmatpush.bf16.msra.mxu0 %v2074
    %2131 = vmatpush.bf16.msra.mxu0 %v2070
    %2132 = vmatpush.bf16.msra.mxu0 %v2066
    %2133 = vmatpush.bf16.msra.mxu0 %v2062
    %2134 = vmatmul.bf16.gmra.mxu0 %v1404
    %v2135 = vpop.f32.mrf.mxu0
    %v2136 = vadd.f32 %v1958, %v2135
    %v2137 = vpop.f32.mrf.mxu0
    %2138 = vdwg.mxu0
    %2139 = vmatpush.bf16.msra.mxu0 %v2091
    %2140 = vmatpush.bf16.msra.mxu0 %v2087
    %2141 = vmatpush.bf16.msra.mxu0 %v2083
    %2142 = vmatpush.bf16.msra.mxu0 %v2079
    %2143 = vmatpush.bf16.msra.mxu0 %v2075
    %2144 = vmatpush.bf16.msra.mxu0 %v2071
    %2145 = vmatpush.bf16.msra.mxu0 %v2067
    %2146 = vmatpush.bf16.msra.mxu0 %v2063
    %2147 = vmatmul.bf16.gmra.mxu0 %v1404
    %v2148 = vpop.f32.mrf.mxu0
    %v2149 = vadd.f32 %v1959, %v2148
    %v2150 = vpop.f32.mrf.mxu0
    %2151 = vdwg.mxu0
    %2152 = vmatpush.bf16.msra.mxu0 %v2092
    %2153 = vmatpush.bf16.msra.mxu0 %v2088
    %2154 = vmatpush.bf16.msra.mxu0 %v2084
    %2155 = vmatpush.bf16.msra.mxu0 %v2080
    %2156 = vmatpush.bf16.msra.mxu0 %v2076
    %2157 = vmatpush.bf16.msra.mxu0 %v2072
    %2158 = vmatpush.bf16.msra.mxu0 %v2068
    %2159 = vmatpush.bf16.msra.mxu0 %v2064
    %2160 = vmatmul.bf16.gmra.mxu0 %v1404
    %v2161 = vpop.f32.mrf.mxu0
    %v2162 = vadd.f32 %v1960, %v2161
    %v2163 = vpop.f32.mrf.mxu0
    %2164 = vdwg.mxu0
    %2165 = vmatpush.bf16.msra.mxu0 %v2093
    %2166 = vmatpush.bf16.msra.mxu0 %v2089
    %2167 = vmatpush.bf16.msra.mxu0 %v2085
    %2168 = vmatpush.bf16.msra.mxu0 %v2081
    %2169 = vmatpush.bf16.msra.mxu0 %v2077
    %2170 = vmatpush.bf16.msra.mxu0 %v2073
    %2171 = vmatpush.bf16.msra.mxu0 %v2069
    %2172 = vmatpush.bf16.msra.mxu0 %v2065
    %2173 = vmatmul.bf16.gmra.mxu0 %v1404
    %v2174 = vpop.f32.mrf.mxu0
    %v2175 = vadd.f32 %v1961, %v2174
    %v2176 = vpop.f32.mrf.mxu0
    %2177 = vdwg.mxu0
    %v2178 = vld [vmem:[%s622] sm:$0xff]
    %v2179 = vld [vmem:[%s622 + $0x8] sm:$0xff]
    %v2180 = vld [vmem:[%s622 + $0x10] sm:$0xff]
    %v2181 = vld [vmem:[%s622 + $0x18] sm:$0xff]
    %v2182 = vld [vmem:[%s622 + $0x20] sm:$0xff]
    %v2183 = vld [vmem:[%s622 + $0x28] sm:$0xff]
    %v2184 = vld [vmem:[%s622 + $0x30] sm:$0xff]
    %v2185 = vld [vmem:[%s622 + $0x38] sm:$0xff]
    %v2186 = vld [vmem:[%s622 + $0x40] sm:$0xff]
    %v2187 = vld [vmem:[%s622 + $0x48] sm:$0xff]
    %v2188 = vld [vmem:[%s622 + $0x50] sm:$0xff]
    %v2189 = vld [vmem:[%s622 + $0x58] sm:$0xff]
    %v2190 = vld [vmem:[%s622 + $0x60] sm:$0xff]
    %v2191 = vld [vmem:[%s622 + $0x68] sm:$0xff]
    %v2192 = vld [vmem:[%s622 + $0x70] sm:$0xff]
    %v2193 = vld [vmem:[%s622 + $0x78] sm:$0xff]
    %v2194 = vld [vmem:[%s622 + $0x80] sm:$0xff]
    %v2195 = vld [vmem:[%s622 + $0x88] sm:$0xff]
    %v2196 = vld [vmem:[%s622 + $0x90] sm:$0xff]
    %v2197 = vld [vmem:[%s622 + $0x98] sm:$0xff]
    %v2198 = vld [vmem:[%s622 + $0xa0] sm:$0xff]
    %v2199 = vld [vmem:[%s622 + $0xa8] sm:$0xff]
    %v2200 = vld [vmem:[%s622 + $0xb0] sm:$0xff]
    %v2201 = vld [vmem:[%s622 + $0xb8] sm:$0xff]
    %v2202 = vld [vmem:[%s622 + $0xc0] sm:$0xff]
    %v2203 = vld [vmem:[%s622 + $0xc8] sm:$0xff]
    %v2204 = vld [vmem:[%s622 + $0xd0] sm:$0xff]
    %v2205 = vld [vmem:[%s622 + $0xd8] sm:$0xff]
    %v2206 = vld [vmem:[%s622 + $0xe0] sm:$0xff]
    %v2207 = vld [vmem:[%s622 + $0xe8] sm:$0xff]
    %v2208 = vld [vmem:[%s622 + $0xf0] sm:$0xff]
    %v2209 = vld [vmem:[%s622 + $0xf8] sm:$0xff]
    %v2210 = vld [vmem:[%s655] sm:$0xf]
    %v2212 = vperm.slane %v2210, 0
    %v2213 = vperm.slane %v2210, 1
    %v2214 = vperm.slane %v2210, 2
    %v2215 = vperm.slane %v2210, 3
    %v2252 = vunpack.c.l.b16 %v2178
    %v2253 = vunpack.c.h.b16 %v2178
    %v2254 = vunpack.c.l.b16 %v2179
    %v2255 = vunpack.c.h.b16 %v2179
    %v2256 = vunpack.c.l.b16 %v2180
    %v2257 = vunpack.c.h.b16 %v2180
    %v2258 = vunpack.c.l.b16 %v2181
    %v2259 = vunpack.c.h.b16 %v2181
    %v2260 = vunpack.c.l.b16 %v2182
    %v2261 = vunpack.c.h.b16 %v2182
    %v2262 = vunpack.c.l.b16 %v2183
    %v2263 = vunpack.c.h.b16 %v2183
    %v2264 = vunpack.c.l.b16 %v2184
    %v2265 = vunpack.c.h.b16 %v2184
    %v2266 = vunpack.c.l.b16 %v2185
    %v2267 = vunpack.c.h.b16 %v2185
    %v2268 = vunpack.c.l.b16 %v2186
    %v2269 = vunpack.c.h.b16 %v2186
    %v2270 = vunpack.c.l.b16 %v2187
    %v2271 = vunpack.c.h.b16 %v2187
    %v2272 = vunpack.c.l.b16 %v2188
    %v2273 = vunpack.c.h.b16 %v2188
    %v2274 = vunpack.c.l.b16 %v2189
    %v2275 = vunpack.c.h.b16 %v2189
    %v2276 = vunpack.c.l.b16 %v2190
    %v2277 = vunpack.c.h.b16 %v2190
    %v2278 = vunpack.c.l.b16 %v2191
    %v2279 = vunpack.c.h.b16 %v2191
    %v2280 = vunpack.c.l.b16 %v2192
    %v2281 = vunpack.c.h.b16 %v2192
    %v2282 = vunpack.c.l.b16 %v2193
    %v2283 = vunpack.c.h.b16 %v2193
    %v2284 = vunpack.c.l.b16 %v2194
    %v2285 = vunpack.c.h.b16 %v2194
    %v2286 = vunpack.c.l.b16 %v2195
    %v2287 = vunpack.c.h.b16 %v2195
    %v2288 = vunpack.c.l.b16 %v2196
    %v2289 = vunpack.c.h.b16 %v2196
    %v2290 = vunpack.c.l.b16 %v2197
    %v2291 = vunpack.c.h.b16 %v2197
    %v2292 = vunpack.c.l.b16 %v2198
    %v2293 = vunpack.c.h.b16 %v2198
    %v2294 = vunpack.c.l.b16 %v2199
    %v2295 = vunpack.c.h.b16 %v2199
    %v2296 = vunpack.c.l.b16 %v2200
    %v2297 = vunpack.c.h.b16 %v2200
    %v2298 = vunpack.c.l.b16 %v2201
    %v2299 = vunpack.c.h.b16 %v2201
    %v2300 = vunpack.c.l.b16 %v2202
    %v2301 = vunpack.c.h.b16 %v2202
    %v2302 = vunpack.c.l.b16 %v2203
    %v2303 = vunpack.c.h.b16 %v2203
    %v2304 = vunpack.c.l.b16 %v2204
    %v2305 = vunpack.c.h.b16 %v2204
    %v2306 = vunpack.c.l.b16 %v2205
    %v2307 = vunpack.c.h.b16 %v2205
    %v2308 = vunpack.c.l.b16 %v2206
    %v2309 = vunpack.c.h.b16 %v2206
    %v2310 = vunpack.c.l.b16 %v2207
    %v2311 = vunpack.c.h.b16 %v2207
    %v2312 = vunpack.c.l.b16 %v2208
    %v2313 = vunpack.c.h.b16 %v2208
    %v2314 = vunpack.c.l.b16 %v2209
    %v2315 = vunpack.c.h.b16 %v2209
    %v2316 = vpack.c.b16 %v2256, %v2252
    %v2317 = vpack.c.b16 %v2257, %v2253
    %v2318 = vpack.c.b16 %v2258, %v2254
    %v2319 = vpack.c.b16 %v2259, %v2255
    %v2320 = vpack.c.b16 %v2264, %v2260
    %v2321 = vpack.c.b16 %v2265, %v2261
    %v2322 = vpack.c.b16 %v2266, %v2262
    %v2323 = vpack.c.b16 %v2267, %v2263
    %v2324 = vpack.c.b16 %v2272, %v2268
    %v2325 = vpack.c.b16 %v2273, %v2269
    %v2326 = vpack.c.b16 %v2274, %v2270
    %v2327 = vpack.c.b16 %v2275, %v2271
    %v2328 = vpack.c.b16 %v2280, %v2276
    %v2329 = vpack.c.b16 %v2281, %v2277
    %v2330 = vpack.c.b16 %v2282, %v2278
    %v2331 = vpack.c.b16 %v2283, %v2279
    %v2332 = vpack.c.b16 %v2288, %v2284
    %v2333 = vpack.c.b16 %v2289, %v2285
    %v2334 = vpack.c.b16 %v2290, %v2286
    %v2335 = vpack.c.b16 %v2291, %v2287
    %v2336 = vpack.c.b16 %v2296, %v2292
    %v2337 = vpack.c.b16 %v2297, %v2293
    %v2338 = vpack.c.b16 %v2298, %v2294
    %v2339 = vpack.c.b16 %v2299, %v2295
    %v2340 = vpack.c.b16 %v2304, %v2300
    %v2341 = vpack.c.b16 %v2305, %v2301
    %v2342 = vpack.c.b16 %v2306, %v2302
    %v2343 = vpack.c.b16 %v2307, %v2303
    %v2344 = vpack.c.b16 %v2312, %v2308
    %v2345 = vpack.c.b16 %v2313, %v2309
    %v2346 = vpack.c.b16 %v2314, %v2310
    %v2347 = vpack.c.b16 %v2315, %v2311
    %2380 = vmatpush.bf16.msra.mxu0 %v2344
    %2381 = vmatpush.bf16.msra.mxu0 %v2340
    %2382 = vmatpush.bf16.msra.mxu0 %v2336
    %2383 = vmatpush.bf16.msra.mxu0 %v2332
    %2384 = vmatpush.bf16.msra.mxu0 %v2328
    %2385 = vmatpush.bf16.msra.mxu0 %v2324
    %2386 = vmatpush.bf16.msra.mxu0 %v2320
    %2387 = vmatpush.bf16.msra.mxu0 %v2316
    %2388 = vmatmul.bf16.gmra.mxu0 %v1668
    %v2389 = vpop.f32.mrf.mxu0
    %v2390 = vadd.f32 %v2212, %v2389
    %v2391 = vpop.f32.mrf.mxu0
    %2392 = vdwg.mxu0
    %2393 = vmatpush.bf16.msra.mxu0 %v2345
    %2394 = vmatpush.bf16.msra.mxu0 %v2341
    %2395 = vmatpush.bf16.msra.mxu0 %v2337
    %2396 = vmatpush.bf16.msra.mxu0 %v2333
    %2397 = vmatpush.bf16.msra.mxu0 %v2329
    %2398 = vmatpush.bf16.msra.mxu0 %v2325
    %2399 = vmatpush.bf16.msra.mxu0 %v2321
    %2400 = vmatpush.bf16.msra.mxu0 %v2317
    %2401 = vmatmul.bf16.gmra.mxu0 %v1668
    %v2402 = vpop.f32.mrf.mxu0
    %v2403 = vadd.f32 %v2213, %v2402
    %v2404 = vpop.f32.mrf.mxu0
    %2405 = vdwg.mxu0
    %2406 = vmatpush.bf16.msra.mxu0 %v2346
    %2407 = vmatpush.bf16.msra.mxu0 %v2342
    %2408 = vmatpush.bf16.msra.mxu0 %v2338
    %2409 = vmatpush.bf16.msra.mxu0 %v2334
    %2410 = vmatpush.bf16.msra.mxu0 %v2330
    %2411 = vmatpush.bf16.msra.mxu0 %v2326
    %2412 = vmatpush.bf16.msra.mxu0 %v2322
    %2413 = vmatpush.bf16.msra.mxu0 %v2318
    %2414 = vmatmul.bf16.gmra.mxu0 %v1668
    %v2415 = vpop.f32.mrf.mxu0
    %v2416 = vadd.f32 %v2214, %v2415
    %v2417 = vpop.f32.mrf.mxu0
    %2418 = vdwg.mxu0
    %2419 = vmatpush.bf16.msra.mxu0 %v2347
    %2420 = vmatpush.bf16.msra.mxu0 %v2343
    %2421 = vmatpush.bf16.msra.mxu0 %v2339
    %2422 = vmatpush.bf16.msra.mxu0 %v2335
    %2423 = vmatpush.bf16.msra.mxu0 %v2331
    %2424 = vmatpush.bf16.msra.mxu0 %v2327
    %2425 = vmatpush.bf16.msra.mxu0 %v2323
    %2426 = vmatpush.bf16.msra.mxu0 %v2319
    %2427 = vmatmul.bf16.gmra.mxu0 %v1668
    %v2428 = vpop.f32.mrf.mxu0
    %v2429 = vadd.f32 %v2215, %v2428
    %v2430 = vpop.f32.mrf.mxu0
    %2431 = vdwg.mxu0
    %v2432 = vld [vmem:[#allocation7] sm:$0xff]
    %v2433 = vld [vmem:[#allocation7 + $0x8] sm:$0xff]
    %v2434 = vld [vmem:[#allocation7 + $0x10] sm:$0xff]
    %v2435 = vld [vmem:[#allocation7 + $0x18] sm:$0xff]
    %v2436 = vld [vmem:[#allocation7 + $0x20] sm:$0xff]
    %v2437 = vld [vmem:[#allocation7 + $0x28] sm:$0xff]
    %v2438 = vld [vmem:[#allocation7 + $0x30] sm:$0xff]
    %v2439 = vld [vmem:[#allocation7 + $0x38] sm:$0xff]
    %v2440 = vld [vmem:[#allocation7 + $0x40] sm:$0xff]
    %v2441 = vld [vmem:[#allocation7 + $0x48] sm:$0xff]
    %v2442 = vld [vmem:[#allocation7 + $0x50] sm:$0xff]
    %v2443 = vld [vmem:[#allocation7 + $0x58] sm:$0xff]
    %v2444 = vld [vmem:[#allocation7 + $0x60] sm:$0xff]
    %v2445 = vld [vmem:[#allocation7 + $0x68] sm:$0xff]
    %v2446 = vld [vmem:[#allocation7 + $0x70] sm:$0xff]
    %v2447 = vld [vmem:[#allocation7 + $0x78] sm:$0xff]
    %v2448 = vld [vmem:[#allocation7 + $0x80] sm:$0xff]
    %v2449 = vld [vmem:[#allocation7 + $0x88] sm:$0xff]
    %v2450 = vld [vmem:[#allocation7 + $0x90] sm:$0xff]
    %v2451 = vld [vmem:[#allocation7 + $0x98] sm:$0xff]
    %v2452 = vld [vmem:[#allocation7 + $0xa0] sm:$0xff]
    %v2453 = vld [vmem:[#allocation7 + $0xa8] sm:$0xff]
    %v2454 = vld [vmem:[#allocation7 + $0xb0] sm:$0xff]
    %v2455 = vld [vmem:[#allocation7 + $0xb8] sm:$0xff]
    %v2456 = vld [vmem:[#allocation7 + $0xc0] sm:$0xff]
    %v2457 = vld [vmem:[#allocation7 + $0xc8] sm:$0xff]
    %v2458 = vld [vmem:[#allocation7 + $0xd0] sm:$0xff]
    %v2459 = vld [vmem:[#allocation7 + $0xd8] sm:$0xff]
    %v2460 = vld [vmem:[#allocation7 + $0xe0] sm:$0xff]
    %v2461 = vld [vmem:[#allocation7 + $0xe8] sm:$0xff]
    %v2462 = vld [vmem:[#allocation7 + $0xf0] sm:$0xff]
    %v2463 = vld [vmem:[#allocation7 + $0xf8] sm:$0xff]
    %v2496 = vunpack.c.l.b16 %v2432
    %v2497 = vunpack.c.h.b16 %v2432
    %v2498 = vunpack.c.l.b16 %v2433
    %v2499 = vunpack.c.h.b16 %v2433
    %v2500 = vunpack.c.l.b16 %v2434
    %v2501 = vunpack.c.h.b16 %v2434
    %v2502 = vunpack.c.l.b16 %v2435
    %v2503 = vunpack.c.h.b16 %v2435
    %v2504 = vunpack.c.l.b16 %v2436
    %v2505 = vunpack.c.h.b16 %v2436
    %v2506 = vunpack.c.l.b16 %v2437
    %v2507 = vunpack.c.h.b16 %v2437
    %v2508 = vunpack.c.l.b16 %v2438
    %v2509 = vunpack.c.h.b16 %v2438
    %v2510 = vunpack.c.l.b16 %v2439
    %v2511 = vunpack.c.h.b16 %v2439
    %v2512 = vunpack.c.l.b16 %v2440
    %v2513 = vunpack.c.h.b16 %v2440
    %v2514 = vunpack.c.l.b16 %v2441
    %v2515 = vunpack.c.h.b16 %v2441
    %v2516 = vunpack.c.l.b16 %v2442
    %v2517 = vunpack.c.h.b16 %v2442
    %v2518 = vunpack.c.l.b16 %v2443
    %v2519 = vunpack.c.h.b16 %v2443
    %v2520 = vunpack.c.l.b16 %v2444
    %v2521 = vunpack.c.h.b16 %v2444
    %v2522 = vunpack.c.l.b16 %v2445
    %v2523 = vunpack.c.h.b16 %v2445
    %v2524 = vunpack.c.l.b16 %v2446
    %v2525 = vunpack.c.h.b16 %v2446
    %v2526 = vunpack.c.l.b16 %v2447
    %v2527 = vunpack.c.h.b16 %v2447
    %v2528 = vunpack.c.l.b16 %v2448
    %v2529 = vunpack.c.h.b16 %v2448
    %v2530 = vunpack.c.l.b16 %v2449
    %v2531 = vunpack.c.h.b16 %v2449
    %v2532 = vunpack.c.l.b16 %v2450
    %v2533 = vunpack.c.h.b16 %v2450
    %v2534 = vunpack.c.l.b16 %v2451
    %v2535 = vunpack.c.h.b16 %v2451
    %v2536 = vunpack.c.l.b16 %v2452
    %v2537 = vunpack.c.h.b16 %v2452
    %v2538 = vunpack.c.l.b16 %v2453
    %v2539 = vunpack.c.h.b16 %v2453
    %v2540 = vunpack.c.l.b16 %v2454
    %v2541 = vunpack.c.h.b16 %v2454
    %v2542 = vunpack.c.l.b16 %v2455
    %v2543 = vunpack.c.h.b16 %v2455
    %v2544 = vunpack.c.l.b16 %v2456
    %v2545 = vunpack.c.h.b16 %v2456
    %v2546 = vunpack.c.l.b16 %v2457
    %v2547 = vunpack.c.h.b16 %v2457
    %v2548 = vunpack.c.l.b16 %v2458
    %v2549 = vunpack.c.h.b16 %v2458
    %v2550 = vunpack.c.l.b16 %v2459
    %v2551 = vunpack.c.h.b16 %v2459
    %v2552 = vunpack.c.l.b16 %v2460
    %v2553 = vunpack.c.h.b16 %v2460
    %v2554 = vunpack.c.l.b16 %v2461
    %v2555 = vunpack.c.h.b16 %v2461
    %v2556 = vunpack.c.l.b16 %v2462
    %v2557 = vunpack.c.h.b16 %v2462
    %v2558 = vunpack.c.l.b16 %v2463
    %v2559 = vunpack.c.h.b16 %v2463
    %v2560 = vpack.c.b16 %v2500, %v2496
    %v2561 = vpack.c.b16 %v2501, %v2497
    %v2562 = vpack.c.b16 %v2502, %v2498
    %v2563 = vpack.c.b16 %v2503, %v2499
    %v2564 = vpack.c.b16 %v2508, %v2504
    %v2565 = vpack.c.b16 %v2509, %v2505
    %v2566 = vpack.c.b16 %v2510, %v2506
    %v2567 = vpack.c.b16 %v2511, %v2507
    %v2568 = vpack.c.b16 %v2516, %v2512
    %v2569 = vpack.c.b16 %v2517, %v2513
    %v2570 = vpack.c.b16 %v2518, %v2514
    %v2571 = vpack.c.b16 %v2519, %v2515
    %v2572 = vpack.c.b16 %v2524, %v2520
    %v2573 = vpack.c.b16 %v2525, %v2521
    %v2574 = vpack.c.b16 %v2526, %v2522
    %v2575 = vpack.c.b16 %v2527, %v2523
    %v2576 = vpack.c.b16 %v2532, %v2528
    %v2577 = vpack.c.b16 %v2533, %v2529
    %v2578 = vpack.c.b16 %v2534, %v2530
    %v2579 = vpack.c.b16 %v2535, %v2531
    %v2580 = vpack.c.b16 %v2540, %v2536
    %v2581 = vpack.c.b16 %v2541, %v2537
    %v2582 = vpack.c.b16 %v2542, %v2538
    %v2583 = vpack.c.b16 %v2543, %v2539
    %v2584 = vpack.c.b16 %v2548, %v2544
    %v2585 = vpack.c.b16 %v2549, %v2545
    %v2586 = vpack.c.b16 %v2550, %v2546
    %v2587 = vpack.c.b16 %v2551, %v2547
    %v2588 = vpack.c.b16 %v2556, %v2552
    %v2589 = vpack.c.b16 %v2557, %v2553
    %v2590 = vpack.c.b16 %v2558, %v2554
    %v2591 = vpack.c.b16 %v2559, %v2555
    %2624 = vmatpush.bf16.msra.mxu0 %v2588
    %2625 = vmatpush.bf16.msra.mxu0 %v2584
    %2626 = vmatpush.bf16.msra.mxu0 %v2580
    %2627 = vmatpush.bf16.msra.mxu0 %v2576
    %2628 = vmatpush.bf16.msra.mxu0 %v2572
    %2629 = vmatpush.bf16.msra.mxu0 %v2568
    %2630 = vmatpush.bf16.msra.mxu0 %v2564
    %2631 = vmatpush.bf16.msra.mxu0 %v2560
    %2632 = vmatmul.bf16.gmra.mxu0 %v1668
    %v2633 = vpop.f32.mrf.mxu0
    %v2634 = vadd.f32 %v1882, %v2633
    %v2635 = vpop.f32.mrf.mxu0
    %2636 = vdwg.mxu0
    %2637 = vmatpush.bf16.msra.mxu0 %v2589
    %2638 = vmatpush.bf16.msra.mxu0 %v2585
    %2639 = vmatpush.bf16.msra.mxu0 %v2581
    %2640 = vmatpush.bf16.msra.mxu0 %v2577
    %2641 = vmatpush.bf16.msra.mxu0 %v2573
    %2642 = vmatpush.bf16.msra.mxu0 %v2569
    %2643 = vmatpush.bf16.msra.mxu0 %v2565
    %2644 = vmatpush.bf16.msra.mxu0 %v2561
    %2645 = vmatmul.bf16.gmra.mxu0 %v1668
    %v2646 = vpop.f32.mrf.mxu0
    %v2647 = vadd.f32 %v1895, %v2646
    %v2648 = vpop.f32.mrf.mxu0
    %2649 = vdwg.mxu0
    %2650 = vmatpush.bf16.msra.mxu0 %v2590
    %2651 = vmatpush.bf16.msra.mxu0 %v2586
    %2652 = vmatpush.bf16.msra.mxu0 %v2582
    %2653 = vmatpush.bf16.msra.mxu0 %v2578
    %2654 = vmatpush.bf16.msra.mxu0 %v2574
    %2655 = vmatpush.bf16.msra.mxu0 %v2570
    %2656 = vmatpush.bf16.msra.mxu0 %v2566
    %2657 = vmatpush.bf16.msra.mxu0 %v2562
    %2658 = vmatmul.bf16.gmra.mxu0 %v1668
    %v2659 = vpop.f32.mrf.mxu0
    %v2660 = vadd.f32 %v1908, %v2659
    %v2661 = vpop.f32.mrf.mxu0
    %2662 = vdwg.mxu0
    %2663 = vmatpush.bf16.msra.mxu0 %v2591
    %2664 = vmatpush.bf16.msra.mxu0 %v2587
    %2665 = vmatpush.bf16.msra.mxu0 %v2583
    %2666 = vmatpush.bf16.msra.mxu0 %v2579
    %2667 = vmatpush.bf16.msra.mxu0 %v2575
    %2668 = vmatpush.bf16.msra.mxu0 %v2571
    %2669 = vmatpush.bf16.msra.mxu0 %v2567
    %2670 = vmatpush.bf16.msra.mxu0 %v2563
    %2671 = vmatmul.bf16.gmra.mxu0 %v1668
    %v2672 = vpop.f32.mrf.mxu0
    %v2673 = vadd.f32 %v1921, %v2672
    %v2674 = vpop.f32.mrf.mxu0
    %2675 = vdwg.mxu0
    %v2676 = vmul.f32 %v2634, 0.5
    %v2677 = vmul.f32 %v2647, 0.5
    %v2678 = vmul.f32 %v2660, 0.5
    %v2679 = vtanh.pop %v2676
    %v2680 = vtanh.pop %v2677
    %v2681 = vtanh.pop %v2678
    %v2682 = vadd.f32 %v2679, 1.0
    %v2683 = vadd.f32 %v2680, 1.0
    %v2684 = vadd.f32 %v2681, 1.0
    %v2685 = vmul.f32 %v2682, 0.5
    %v2686 = vmul.f32 %v2683, 0.5
    %v2687 = vmul.f32 %v2684, 0.5
    %v2688 = vtanh.pop %v2673
    %v2689 = vmul.f32 %v2686, %v1137
    %v2690 = vmul.f32 %v2685, %v2688
    %v2691 = vadd.f32 %v2689, %v2690
    %v2692 = vtanh.pop %v2691
    %v2693 = vmul.f32 %v2687, %v2692
    %v2694 = vpack.c.bf16 %v2693, %v2693
    %v2695 = vld [vmem:[%s1141] sm:$0xff]
    %v2696 = vld [vmem:[%s1141 + $0x8] sm:$0xff]
    %v2697 = vld [vmem:[%s1141 + $0x10] sm:$0xff]
    %v2698 = vld [vmem:[%s1141 + $0x18] sm:$0xff]
    %v2699 = vld [vmem:[%s1141 + $0x20] sm:$0xff]
    %v2700 = vld [vmem:[%s1141 + $0x28] sm:$0xff]
    %v2701 = vld [vmem:[%s1141 + $0x30] sm:$0xff]
    %v2702 = vld [vmem:[%s1141 + $0x38] sm:$0xff]
    %v2703 = vld [vmem:[%s1141 + $0x40] sm:$0xff]
    %v2704 = vld [vmem:[%s1141 + $0x48] sm:$0xff]
    %v2705 = vld [vmem:[%s1141 + $0x50] sm:$0xff]
    %v2706 = vld [vmem:[%s1141 + $0x58] sm:$0xff]
    %v2707 = vld [vmem:[%s1141 + $0x60] sm:$0xff]
    %v2708 = vld [vmem:[%s1141 + $0x68] sm:$0xff]
    %v2709 = vld [vmem:[%s1141 + $0x70] sm:$0xff]
    %v2710 = vld [vmem:[%s1141 + $0x78] sm:$0xff]
    %v2711 = vld [vmem:[%s1141 + $0x80] sm:$0xff]
    %v2712 = vld [vmem:[%s1141 + $0x88] sm:$0xff]
    %v2713 = vld [vmem:[%s1141 + $0x90] sm:$0xff]
    %v2714 = vld [vmem:[%s1141 + $0x98] sm:$0xff]
    %v2715 = vld [vmem:[%s1141 + $0xa0] sm:$0xff]
    %v2716 = vld [vmem:[%s1141 + $0xa8] sm:$0xff]
    %v2717 = vld [vmem:[%s1141 + $0xb0] sm:$0xff]
    %v2718 = vld [vmem:[%s1141 + $0xb8] sm:$0xff]
    %v2719 = vld [vmem:[%s1141 + $0xc0] sm:$0xff]
    %v2720 = vld [vmem:[%s1141 + $0xc8] sm:$0xff]
    %v2721 = vld [vmem:[%s1141 + $0xd0] sm:$0xff]
    %v2722 = vld [vmem:[%s1141 + $0xd8] sm:$0xff]
    %v2723 = vld [vmem:[%s1141 + $0xe0] sm:$0xff]
    %v2724 = vld [vmem:[%s1141 + $0xe8] sm:$0xff]
    %v2725 = vld [vmem:[%s1141 + $0xf0] sm:$0xff]
    %v2726 = vld [vmem:[%s1141 + $0xf8] sm:$0xff]
    %v2759 = vunpack.c.l.b16 %v2695
    %v2760 = vunpack.c.h.b16 %v2695
    %v2761 = vunpack.c.l.b16 %v2696
    %v2762 = vunpack.c.h.b16 %v2696
    %v2763 = vunpack.c.l.b16 %v2697
    %v2764 = vunpack.c.h.b16 %v2697
    %v2765 = vunpack.c.l.b16 %v2698
    %v2766 = vunpack.c.h.b16 %v2698
    %v2767 = vunpack.c.l.b16 %v2699
    %v2768 = vunpack.c.h.b16 %v2699
    %v2769 = vunpack.c.l.b16 %v2700
    %v2770 = vunpack.c.h.b16 %v2700
    %v2771 = vunpack.c.l.b16 %v2701
    %v2772 = vunpack.c.h.b16 %v2701
    %v2773 = vunpack.c.l.b16 %v2702
    %v2774 = vunpack.c.h.b16 %v2702
    %v2775 = vunpack.c.l.b16 %v2703
    %v2776 = vunpack.c.h.b16 %v2703
    %v2777 = vunpack.c.l.b16 %v2704
    %v2778 = vunpack.c.h.b16 %v2704
    %v2779 = vunpack.c.l.b16 %v2705
    %v2780 = vunpack.c.h.b16 %v2705
    %v2781 = vunpack.c.l.b16 %v2706
    %v2782 = vunpack.c.h.b16 %v2706
    %v2783 = vunpack.c.l.b16 %v2707
    %v2784 = vunpack.c.h.b16 %v2707
    %v2785 = vunpack.c.l.b16 %v2708
    %v2786 = vunpack.c.h.b16 %v2708
    %v2787 = vunpack.c.l.b16 %v2709
    %v2788 = vunpack.c.h.b16 %v2709
    %v2789 = vunpack.c.l.b16 %v2710
    %v2790 = vunpack.c.h.b16 %v2710
    %v2791 = vunpack.c.l.b16 %v2711
    %v2792 = vunpack.c.h.b16 %v2711
    %v2793 = vunpack.c.l.b16 %v2712
    %v2794 = vunpack.c.h.b16 %v2712
    %v2795 = vunpack.c.l.b16 %v2713
    %v2796 = vunpack.c.h.b16 %v2713
    %v2797 = vunpack.c.l.b16 %v2714
    %v2798 = vunpack.c.h.b16 %v2714
    %v2799 = vunpack.c.l.b16 %v2715
    %v2800 = vunpack.c.h.b16 %v2715
    %v2801 = vunpack.c.l.b16 %v2716
    %v2802 = vunpack.c.h.b16 %v2716
    %v2803 = vunpack.c.l.b16 %v2717
    %v2804 = vunpack.c.h.b16 %v2717
    %v2805 = vunpack.c.l.b16 %v2718
    %v2806 = vunpack.c.h.b16 %v2718
    %v2807 = vunpack.c.l.b16 %v2719
    %v2808 = vunpack.c.h.b16 %v2719
    %v2809 = vunpack.c.l.b16 %v2720
    %v2810 = vunpack.c.h.b16 %v2720
    %v2811 = vunpack.c.l.b16 %v2721
    %v2812 = vunpack.c.h.b16 %v2721
    %v2813 = vunpack.c.l.b16 %v2722
    %v2814 = vunpack.c.h.b16 %v2722
    %v2815 = vunpack.c.l.b16 %v2723
    %v2816 = vunpack.c.h.b16 %v2723
    %v2817 = vunpack.c.l.b16 %v2724
    %v2818 = vunpack.c.h.b16 %v2724
    %v2819 = vunpack.c.l.b16 %v2725
    %v2820 = vunpack.c.h.b16 %v2725
    %v2821 = vunpack.c.l.b16 %v2726
    %v2822 = vunpack.c.h.b16 %v2726
    %v2823 = vpack.c.b16 %v2763, %v2759
    %v2824 = vpack.c.b16 %v2764, %v2760
    %v2825 = vpack.c.b16 %v2765, %v2761
    %v2826 = vpack.c.b16 %v2766, %v2762
    %v2827 = vpack.c.b16 %v2771, %v2767
    %v2828 = vpack.c.b16 %v2772, %v2768
    %v2829 = vpack.c.b16 %v2773, %v2769
    %v2830 = vpack.c.b16 %v2774, %v2770
    %v2831 = vpack.c.b16 %v2779, %v2775
    %v2832 = vpack.c.b16 %v2780, %v2776
    %v2833 = vpack.c.b16 %v2781, %v2777
    %v2834 = vpack.c.b16 %v2782, %v2778
    %v2835 = vpack.c.b16 %v2787, %v2783
    %v2836 = vpack.c.b16 %v2788, %v2784
    %v2837 = vpack.c.b16 %v2789, %v2785
    %v2838 = vpack.c.b16 %v2790, %v2786
    %v2839 = vpack.c.b16 %v2795, %v2791
    %v2840 = vpack.c.b16 %v2796, %v2792
    %v2841 = vpack.c.b16 %v2797, %v2793
    %v2842 = vpack.c.b16 %v2798, %v2794
    %v2843 = vpack.c.b16 %v2803, %v2799
    %v2844 = vpack.c.b16 %v2804, %v2800
    %v2845 = vpack.c.b16 %v2805, %v2801
    %v2846 = vpack.c.b16 %v2806, %v2802
    %v2847 = vpack.c.b16 %v2811, %v2807
    %v2848 = vpack.c.b16 %v2812, %v2808
    %v2849 = vpack.c.b16 %v2813, %v2809
    %v2850 = vpack.c.b16 %v2814, %v2810
    %v2851 = vpack.c.b16 %v2819, %v2815
    %v2852 = vpack.c.b16 %v2820, %v2816
    %v2853 = vpack.c.b16 %v2821, %v2817
    %v2854 = vpack.c.b16 %v2822, %v2818
    %2887 = vmatpush.bf16.msra.mxu0 %v2851
    %2888 = vmatpush.bf16.msra.mxu0 %v2847
    %2889 = vmatpush.bf16.msra.mxu0 %v2843
    %2890 = vmatpush.bf16.msra.mxu0 %v2839
    %2891 = vmatpush.bf16.msra.mxu0 %v2835
    %2892 = vmatpush.bf16.msra.mxu0 %v2831
    %2893 = vmatpush.bf16.msra.mxu0 %v2827
    %2894 = vmatpush.bf16.msra.mxu0 %v2823
    %2895 = vmatmul.bf16.gmra.mxu0 %v2694
    %v2896 = vpop.f32.mrf.mxu0
    %v2897 = vadd.f32 %v2136, %v2896
    %v2898 = vpop.f32.mrf.mxu0
    %2899 = vdwg.mxu0
    %2900 = vmatpush.bf16.msra.mxu0 %v2852
    %2901 = vmatpush.bf16.msra.mxu0 %v2848
    %2902 = vmatpush.bf16.msra.mxu0 %v2844
    %2903 = vmatpush.bf16.msra.mxu0 %v2840
    %2904 = vmatpush.bf16.msra.mxu0 %v2836
    %2905 = vmatpush.bf16.msra.mxu0 %v2832
    %2906 = vmatpush.bf16.msra.mxu0 %v2828
    %2907 = vmatpush.bf16.msra.mxu0 %v2824
    %2908 = vmatmul.bf16.gmra.mxu0 %v2694
    %v2909 = vpop.f32.mrf.mxu0
    %v2910 = vadd.f32 %v2149, %v2909
    %v2911 = vpop.f32.mrf.mxu0
    %2912 = vdwg.mxu0
    %2913 = vmatpush.bf16.msra.mxu0 %v2853
    %2914 = vmatpush.bf16.msra.mxu0 %v2849
    %2915 = vmatpush.bf16.msra.mxu0 %v2845
    %2916 = vmatpush.bf16.msra.mxu0 %v2841
    %2917 = vmatpush.bf16.msra.mxu0 %v2837
    %2918 = vmatpush.bf16.msra.mxu0 %v2833
    %2919 = vmatpush.bf16.msra.mxu0 %v2829
    %2920 = vmatpush.bf16.msra.mxu0 %v2825
    %2921 = vmatmul.bf16.gmra.mxu0 %v2694
    %v2922 = vpop.f32.mrf.mxu0
    %v2923 = vadd.f32 %v2162, %v2922
    %v2924 = vpop.f32.mrf.mxu0
    %2925 = vdwg.mxu0
    %2926 = vmatpush.bf16.msra.mxu0 %v2854
    %2927 = vmatpush.bf16.msra.mxu0 %v2850
    %2928 = vmatpush.bf16.msra.mxu0 %v2846
    %2929 = vmatpush.bf16.msra.mxu0 %v2842
    %2930 = vmatpush.bf16.msra.mxu0 %v2838
    %2931 = vmatpush.bf16.msra.mxu0 %v2834
    %2932 = vmatpush.bf16.msra.mxu0 %v2830
    %2933 = vmatpush.bf16.msra.mxu0 %v2826
    %2934 = vmatmul.bf16.gmra.mxu0 %v2694
    %v2935 = vpop.f32.mrf.mxu0
    %v2936 = vadd.f32 %v2175, %v2935
    %v2937 = vpop.f32.mrf.mxu0
    %2938 = vdwg.mxu0
    %v2939 = vmul.f32 %v2897, 0.5
    %v2940 = vmul.f32 %v2910, 0.5
    %v2941 = vmul.f32 %v2923, 0.5
    %v2942 = vtanh.pop %v2939
    %v2943 = vtanh.pop %v2940
    %v2944 = vtanh.pop %v2941
    %v2945 = vadd.f32 %v2942, 1.0
    %v2946 = vadd.f32 %v2943, 1.0
    %v2947 = vadd.f32 %v2944, 1.0
    %v2948 = vmul.f32 %v2945, 0.5
    %v2949 = vmul.f32 %v2946, 0.5
    %v2950 = vmul.f32 %v2947, 0.5
    %v2951 = vtanh.pop %v2936
    %v2952 = vmul.f32 %v2949, %v1401
    %v2953 = vmul.f32 %v2948, %v2951
    %v2954 = vadd.f32 %v2952, %v2953
    %v2955 = vtanh.pop %v2954
    %v2956 = vmul.f32 %v2950, %v2955
    %v2957 = vpack.c.bf16 %v2956, %v2956
    %v2958 = vld [vmem:[%s1405] sm:$0xff]
    %v2959 = vld [vmem:[%s1405 + $0x8] sm:$0xff]
    %v2960 = vld [vmem:[%s1405 + $0x10] sm:$0xff]
    %v2961 = vld [vmem:[%s1405 + $0x18] sm:$0xff]
    %v2962 = vld [vmem:[%s1405 + $0x20] sm:$0xff]
    %v2963 = vld [vmem:[%s1405 + $0x28] sm:$0xff]
    %v2964 = vld [vmem:[%s1405 + $0x30] sm:$0xff]
    %v2965 = vld [vmem:[%s1405 + $0x38] sm:$0xff]
    %v2966 = vld [vmem:[%s1405 + $0x40] sm:$0xff]
    %v2967 = vld [vmem:[%s1405 + $0x48] sm:$0xff]
    %v2968 = vld [vmem:[%s1405 + $0x50] sm:$0xff]
    %v2969 = vld [vmem:[%s1405 + $0x58] sm:$0xff]
    %v2970 = vld [vmem:[%s1405 + $0x60] sm:$0xff]
    %v2971 = vld [vmem:[%s1405 + $0x68] sm:$0xff]
    %v2972 = vld [vmem:[%s1405 + $0x70] sm:$0xff]
    %v2973 = vld [vmem:[%s1405 + $0x78] sm:$0xff]
    %v2974 = vld [vmem:[%s1405 + $0x80] sm:$0xff]
    %v2975 = vld [vmem:[%s1405 + $0x88] sm:$0xff]
    %v2976 = vld [vmem:[%s1405 + $0x90] sm:$0xff]
    %v2977 = vld [vmem:[%s1405 + $0x98] sm:$0xff]
    %v2978 = vld [vmem:[%s1405 + $0xa0] sm:$0xff]
    %v2979 = vld [vmem:[%s1405 + $0xa8] sm:$0xff]
    %v2980 = vld [vmem:[%s1405 + $0xb0] sm:$0xff]
    %v2981 = vld [vmem:[%s1405 + $0xb8] sm:$0xff]
    %v2982 = vld [vmem:[%s1405 + $0xc0] sm:$0xff]
    %v2983 = vld [vmem:[%s1405 + $0xc8] sm:$0xff]
    %v2984 = vld [vmem:[%s1405 + $0xd0] sm:$0xff]
    %v2985 = vld [vmem:[%s1405 + $0xd8] sm:$0xff]
    %v2986 = vld [vmem:[%s1405 + $0xe0] sm:$0xff]
    %v2987 = vld [vmem:[%s1405 + $0xe8] sm:$0xff]
    %v2988 = vld [vmem:[%s1405 + $0xf0] sm:$0xff]
    %v2989 = vld [vmem:[%s1405 + $0xf8] sm:$0xff]
    %v3022 = vunpack.c.l.b16 %v2958
    %v3023 = vunpack.c.h.b16 %v2958
    %v3024 = vunpack.c.l.b16 %v2959
    %v3025 = vunpack.c.h.b16 %v2959
    %v3026 = vunpack.c.l.b16 %v2960
    %v3027 = vunpack.c.h.b16 %v2960
    %v3028 = vunpack.c.l.b16 %v2961
    %v3029 = vunpack.c.h.b16 %v2961
    %v3030 = vunpack.c.l.b16 %v2962
    %v3031 = vunpack.c.h.b16 %v2962
    %v3032 = vunpack.c.l.b16 %v2963
    %v3033 = vunpack.c.h.b16 %v2963
    %v3034 = vunpack.c.l.b16 %v2964
    %v3035 = vunpack.c.h.b16 %v2964
    %v3036 = vunpack.c.l.b16 %v2965
    %v3037 = vunpack.c.h.b16 %v2965
    %v3038 = vunpack.c.l.b16 %v2966
    %v3039 = vunpack.c.h.b16 %v2966
    %v3040 = vunpack.c.l.b16 %v2967
    %v3041 = vunpack.c.h.b16 %v2967
    %v3042 = vunpack.c.l.b16 %v2968
    %v3043 = vunpack.c.h.b16 %v2968
    %v3044 = vunpack.c.l.b16 %v2969
    %v3045 = vunpack.c.h.b16 %v2969
    %v3046 = vunpack.c.l.b16 %v2970
    %v3047 = vunpack.c.h.b16 %v2970
    %v3048 = vunpack.c.l.b16 %v2971
    %v3049 = vunpack.c.h.b16 %v2971
    %v3050 = vunpack.c.l.b16 %v2972
    %v3051 = vunpack.c.h.b16 %v2972
    %v3052 = vunpack.c.l.b16 %v2973
    %v3053 = vunpack.c.h.b16 %v2973
    %v3054 = vunpack.c.l.b16 %v2974
    %v3055 = vunpack.c.h.b16 %v2974
    %v3056 = vunpack.c.l.b16 %v2975
    %v3057 = vunpack.c.h.b16 %v2975
    %v3058 = vunpack.c.l.b16 %v2976
    %v3059 = vunpack.c.h.b16 %v2976
    %v3060 = vunpack.c.l.b16 %v2977
    %v3061 = vunpack.c.h.b16 %v2977
    %v3062 = vunpack.c.l.b16 %v2978
    %v3063 = vunpack.c.h.b16 %v2978
    %v3064 = vunpack.c.l.b16 %v2979
    %v3065 = vunpack.c.h.b16 %v2979
    %v3066 = vunpack.c.l.b16 %v2980
    %v3067 = vunpack.c.h.b16 %v2980
    %v3068 = vunpack.c.l.b16 %v2981
    %v3069 = vunpack.c.h.b16 %v2981
    %v3070 = vunpack.c.l.b16 %v2982
    %v3071 = vunpack.c.h.b16 %v2982
    %v3072 = vunpack.c.l.b16 %v2983
    %v3073 = vunpack.c.h.b16 %v2983
    %v3074 = vunpack.c.l.b16 %v2984
    %v3075 = vunpack.c.h.b16 %v2984
    %v3076 = vunpack.c.l.b16 %v2985
    %v3077 = vunpack.c.h.b16 %v2985
    %v3078 = vunpack.c.l.b16 %v2986
    %v3079 = vunpack.c.h.b16 %v2986
    %v3080 = vunpack.c.l.b16 %v2987
    %v3081 = vunpack.c.h.b16 %v2987
    %v3082 = vunpack.c.l.b16 %v2988
    %v3083 = vunpack.c.h.b16 %v2988
    %v3084 = vunpack.c.l.b16 %v2989
    %v3085 = vunpack.c.h.b16 %v2989
    %v3086 = vpack.c.b16 %v3026, %v3022
    %v3087 = vpack.c.b16 %v3027, %v3023
    %v3088 = vpack.c.b16 %v3028, %v3024
    %v3089 = vpack.c.b16 %v3029, %v3025
    %v3090 = vpack.c.b16 %v3034, %v3030
    %v3091 = vpack.c.b16 %v3035, %v3031
    %v3092 = vpack.c.b16 %v3036, %v3032
    %v3093 = vpack.c.b16 %v3037, %v3033
    %v3094 = vpack.c.b16 %v3042, %v3038
    %v3095 = vpack.c.b16 %v3043, %v3039
    %v3096 = vpack.c.b16 %v3044, %v3040
    %v3097 = vpack.c.b16 %v3045, %v3041
    %v3098 = vpack.c.b16 %v3050, %v3046
    %v3099 = vpack.c.b16 %v3051, %v3047
    %v3100 = vpack.c.b16 %v3052, %v3048
    %v3101 = vpack.c.b16 %v3053, %v3049
    %v3102 = vpack.c.b16 %v3058, %v3054
    %v3103 = vpack.c.b16 %v3059, %v3055
    %v3104 = vpack.c.b16 %v3060, %v3056
    %v3105 = vpack.c.b16 %v3061, %v3057
    %v3106 = vpack.c.b16 %v3066, %v3062
    %v3107 = vpack.c.b16 %v3067, %v3063
    %v3108 = vpack.c.b16 %v3068, %v3064
    %v3109 = vpack.c.b16 %v3069, %v3065
    %v3110 = vpack.c.b16 %v3074, %v3070
    %v3111 = vpack.c.b16 %v3075, %v3071
    %v3112 = vpack.c.b16 %v3076, %v3072
    %v3113 = vpack.c.b16 %v3077, %v3073
    %v3114 = vpack.c.b16 %v3082, %v3078
    %v3115 = vpack.c.b16 %v3083, %v3079
    %v3116 = vpack.c.b16 %v3084, %v3080
    %v3117 = vpack.c.b16 %v3085, %v3081
    %3150 = vmatpush.bf16.msra.mxu0 %v3114
    %3151 = vmatpush.bf16.msra.mxu0 %v3110
    %3152 = vmatpush.bf16.msra.mxu0 %v3106
    %3153 = vmatpush.bf16.msra.mxu0 %v3102
    %3154 = vmatpush.bf16.msra.mxu0 %v3098
    %3155 = vmatpush.bf16.msra.mxu0 %v3094
    %3156 = vmatpush.bf16.msra.mxu0 %v3090
    %3157 = vmatpush.bf16.msra.mxu0 %v3086
    %3158 = vmatmul.bf16.gmra.mxu0 %v2957
    %v3159 = vpop.f32.mrf.mxu0
    %v3160 = vadd.f32 %v2390, %v3159
    %v3161 = vpop.f32.mrf.mxu0
    %3162 = vdwg.mxu0
    %3163 = vmatpush.bf16.msra.mxu0 %v3115
    %3164 = vmatpush.bf16.msra.mxu0 %v3111
    %3165 = vmatpush.bf16.msra.mxu0 %v3107
    %3166 = vmatpush.bf16.msra.mxu0 %v3103
    %3167 = vmatpush.bf16.msra.mxu0 %v3099
    %3168 = vmatpush.bf16.msra.mxu0 %v3095
    %3169 = vmatpush.bf16.msra.mxu0 %v3091
    %3170 = vmatpush.bf16.msra.mxu0 %v3087
    %3171 = vmatmul.bf16.gmra.mxu0 %v2957
    %v3172 = vpop.f32.mrf.mxu0
    %v3173 = vadd.f32 %v2403, %v3172
    %v3174 = vpop.f32.mrf.mxu0
    %3175 = vdwg.mxu0
    %3176 = vmatpush.bf16.msra.mxu0 %v3116
    %3177 = vmatpush.bf16.msra.mxu0 %v3112
    %3178 = vmatpush.bf16.msra.mxu0 %v3108
    %3179 = vmatpush.bf16.msra.mxu0 %v3104
    %3180 = vmatpush.bf16.msra.mxu0 %v3100
    %3181 = vmatpush.bf16.msra.mxu0 %v3096
    %3182 = vmatpush.bf16.msra.mxu0 %v3092
    %3183 = vmatpush.bf16.msra.mxu0 %v3088
    %3184 = vmatmul.bf16.gmra.mxu0 %v2957
    %v3185 = vpop.f32.mrf.mxu0
    %v3186 = vadd.f32 %v2416, %v3185
    %v3187 = vpop.f32.mrf.mxu0
    %3188 = vdwg.mxu0
    %3189 = vmatpush.bf16.msra.mxu0 %v3117
    %3190 = vmatpush.bf16.msra.mxu0 %v3113
    %3191 = vmatpush.bf16.msra.mxu0 %v3109
    %3192 = vmatpush.bf16.msra.mxu0 %v3105
    %3193 = vmatpush.bf16.msra.mxu0 %v3101
    %3194 = vmatpush.bf16.msra.mxu0 %v3097
    %3195 = vmatpush.bf16.msra.mxu0 %v3093
    %3196 = vmatpush.bf16.msra.mxu0 %v3089
    %3197 = vmatmul.bf16.gmra.mxu0 %v2957
    %v3198 = vpop.f32.mrf.mxu0
    %v3199 = vadd.f32 %v2429, %v3198
    %v3200 = vpop.f32.mrf.mxu0
    %3201 = vdwg.mxu0
    %v3202 = vmul.f32 %v3160, 0.5
    %v3203 = vmul.f32 %v3173, 0.5
    %v3204 = vmul.f32 %v3186, 0.5
    %v3205 = vtanh.pop %v3202
    %v3206 = vtanh.pop %v3203
    %v3207 = vtanh.pop %v3204
    %v3208 = vadd.f32 %v3205, 1.0
    %v3209 = vadd.f32 %v3206, 1.0
    %v3210 = vadd.f32 %v3207, 1.0
    %v3211 = vmul.f32 %v3208, 0.5
    %v3212 = vmul.f32 %v3209, 0.5
    %v3213 = vmul.f32 %v3210, 0.5
    %v3214 = vtanh.pop %v3199
    %v3215 = vmul.f32 %v3212, %v1665
    %v3216 = vmul.f32 %v3211, %v3214
    %v3217 = vadd.f32 %v3215, %v3216
    %v3218 = vtanh.pop %v3217
    %v3219 = vmul.f32 %v3213, %v3218
    %v3220 = vpack.c.bf16 %v3219, %v3219
    %s3221 = scalar_lea.vmem [#allocation11], 8
    %3222 = vst [vmem:[%s3221] sm:$0xff] %v3219
    %v3223 = vld [vmem:[#allocation8] sm:$0xff]
    %v3224 = vld [vmem:[#allocation8 + $0x8] sm:$0xff]
    %v3225 = vld [vmem:[#allocation8 + $0x10] sm:$0xff]
    %v3226 = vld [vmem:[#allocation8 + $0x18] sm:$0xff]
    %v3227 = vld [vmem:[#allocation8 + $0x20] sm:$0xff]
    %v3228 = vld [vmem:[#allocation8 + $0x28] sm:$0xff]
    %v3229 = vld [vmem:[#allocation8 + $0x30] sm:$0xff]
    %v3230 = vld [vmem:[#allocation8 + $0x38] sm:$0xff]
    %v3231 = vld [vmem:[#allocation8 + $0x40] sm:$0xff]
    %v3232 = vld [vmem:[#allocation8 + $0x48] sm:$0xff]
    %v3233 = vld [vmem:[#allocation8 + $0x50] sm:$0xff]
    %v3234 = vld [vmem:[#allocation8 + $0x58] sm:$0xff]
    %v3235 = vld [vmem:[#allocation8 + $0x60] sm:$0xff]
    %v3236 = vld [vmem:[#allocation8 + $0x68] sm:$0xff]
    %v3237 = vld [vmem:[#allocation8 + $0x70] sm:$0xff]
    %v3238 = vld [vmem:[#allocation8 + $0x78] sm:$0xff]
    %v3239 = vld [vmem:[#allocation8 + $0x80] sm:$0xff]
    %v3240 = vld [vmem:[#allocation8 + $0x88] sm:$0xff]
    %v3241 = vld [vmem:[#allocation8 + $0x90] sm:$0xff]
    %v3242 = vld [vmem:[#allocation8 + $0x98] sm:$0xff]
    %v3243 = vld [vmem:[#allocation8 + $0xa0] sm:$0xff]
    %v3244 = vld [vmem:[#allocation8 + $0xa8] sm:$0xff]
    %v3245 = vld [vmem:[#allocation8 + $0xb0] sm:$0xff]
    %v3246 = vld [vmem:[#allocation8 + $0xb8] sm:$0xff]
    %v3247 = vld [vmem:[#allocation8 + $0xc0] sm:$0xff]
    %v3248 = vld [vmem:[#allocation8 + $0xc8] sm:$0xff]
    %v3249 = vld [vmem:[#allocation8 + $0xd0] sm:$0xff]
    %v3250 = vld [vmem:[#allocation8 + $0xd8] sm:$0xff]
    %v3251 = vld [vmem:[#allocation8 + $0xe0] sm:$0xff]
    %v3252 = vld [vmem:[#allocation8 + $0xe8] sm:$0xff]
    %v3253 = vld [vmem:[#allocation8 + $0xf0] sm:$0xff]
    %v3254 = vld [vmem:[#allocation8 + $0xf8] sm:$0xff]
    %v3255 = vld [vmem:[#allocation10] sm:$0xf]
    %v3257 = vperm.slane %v3255, 0
    %v3258 = vperm.slane %v3255, 1
    %v3259 = vperm.slane %v3255, 2
    %v3260 = vperm.slane %v3255, 3
    %v3297 = vunpack.c.l.b16 %v3223
    %v3298 = vunpack.c.h.b16 %v3223
    %v3299 = vunpack.c.l.b16 %v3224
    %v3300 = vunpack.c.h.b16 %v3224
    %v3301 = vunpack.c.l.b16 %v3225
    %v3302 = vunpack.c.h.b16 %v3225
    %v3303 = vunpack.c.l.b16 %v3226
    %v3304 = vunpack.c.h.b16 %v3226
    %v3305 = vunpack.c.l.b16 %v3227
    %v3306 = vunpack.c.h.b16 %v3227
    %v3307 = vunpack.c.l.b16 %v3228
    %v3308 = vunpack.c.h.b16 %v3228
    %v3309 = vunpack.c.l.b16 %v3229
    %v3310 = vunpack.c.h.b16 %v3229
    %v3311 = vunpack.c.l.b16 %v3230
    %v3312 = vunpack.c.h.b16 %v3230
    %v3313 = vunpack.c.l.b16 %v3231
    %v3314 = vunpack.c.h.b16 %v3231
    %v3315 = vunpack.c.l.b16 %v3232
    %v3316 = vunpack.c.h.b16 %v3232
    %v3317 = vunpack.c.l.b16 %v3233
    %v3318 = vunpack.c.h.b16 %v3233
    %v3319 = vunpack.c.l.b16 %v3234
    %v3320 = vunpack.c.h.b16 %v3234
    %v3321 = vunpack.c.l.b16 %v3235
    %v3322 = vunpack.c.h.b16 %v3235
    %v3323 = vunpack.c.l.b16 %v3236
    %v3324 = vunpack.c.h.b16 %v3236
    %v3325 = vunpack.c.l.b16 %v3237
    %v3326 = vunpack.c.h.b16 %v3237
    %v3327 = vunpack.c.l.b16 %v3238
    %v3328 = vunpack.c.h.b16 %v3238
    %v3329 = vunpack.c.l.b16 %v3239
    %v3330 = vunpack.c.h.b16 %v3239
    %v3331 = vunpack.c.l.b16 %v3240
    %v3332 = vunpack.c.h.b16 %v3240
    %v3333 = vunpack.c.l.b16 %v3241
    %v3334 = vunpack.c.h.b16 %v3241
    %v3335 = vunpack.c.l.b16 %v3242
    %v3336 = vunpack.c.h.b16 %v3242
    %v3337 = vunpack.c.l.b16 %v3243
    %v3338 = vunpack.c.h.b16 %v3243
    %v3339 = vunpack.c.l.b16 %v3244
    %v3340 = vunpack.c.h.b16 %v3244
    %v3341 = vunpack.c.l.b16 %v3245
    %v3342 = vunpack.c.h.b16 %v3245
    %v3343 = vunpack.c.l.b16 %v3246
    %v3344 = vunpack.c.h.b16 %v3246
    %v3345 = vunpack.c.l.b16 %v3247
    %v3346 = vunpack.c.h.b16 %v3247
    %v3347 = vunpack.c.l.b16 %v3248
    %v3348 = vunpack.c.h.b16 %v3248
    %v3349 = vunpack.c.l.b16 %v3249
    %v3350 = vunpack.c.h.b16 %v3249
    %v3351 = vunpack.c.l.b16 %v3250
    %v3352 = vunpack.c.h.b16 %v3250
    %v3353 = vunpack.c.l.b16 %v3251
    %v3354 = vunpack.c.h.b16 %v3251
    %v3355 = vunpack.c.l.b16 %v3252
    %v3356 = vunpack.c.h.b16 %v3252
    %v3357 = vunpack.c.l.b16 %v3253
    %v3358 = vunpack.c.h.b16 %v3253
    %v3359 = vunpack.c.l.b16 %v3254
    %v3360 = vunpack.c.h.b16 %v3254
    %v3361 = vpack.c.b16 %v3301, %v3297
    %v3362 = vpack.c.b16 %v3302, %v3298
    %v3363 = vpack.c.b16 %v3303, %v3299
    %v3364 = vpack.c.b16 %v3304, %v3300
    %v3365 = vpack.c.b16 %v3309, %v3305
    %v3366 = vpack.c.b16 %v3310, %v3306
    %v3367 = vpack.c.b16 %v3311, %v3307
    %v3368 = vpack.c.b16 %v3312, %v3308
    %v3369 = vpack.c.b16 %v3317, %v3313
    %v3370 = vpack.c.b16 %v3318, %v3314
    %v3371 = vpack.c.b16 %v3319, %v3315
    %v3372 = vpack.c.b16 %v3320, %v3316
    %v3373 = vpack.c.b16 %v3325, %v3321
    %v3374 = vpack.c.b16 %v3326, %v3322
    %v3375 = vpack.c.b16 %v3327, %v3323
    %v3376 = vpack.c.b16 %v3328, %v3324
    %v3377 = vpack.c.b16 %v3333, %v3329
    %v3378 = vpack.c.b16 %v3334, %v3330
    %v3379 = vpack.c.b16 %v3335, %v3331
    %v3380 = vpack.c.b16 %v3336, %v3332
    %v3381 = vpack.c.b16 %v3341, %v3337
    %v3382 = vpack.c.b16 %v3342, %v3338
    %v3383 = vpack.c.b16 %v3343, %v3339
    %v3384 = vpack.c.b16 %v3344, %v3340
    %v3385 = vpack.c.b16 %v3349, %v3345
    %v3386 = vpack.c.b16 %v3350, %v3346
    %v3387 = vpack.c.b16 %v3351, %v3347
    %v3388 = vpack.c.b16 %v3352, %v3348
    %v3389 = vpack.c.b16 %v3357, %v3353
    %v3390 = vpack.c.b16 %v3358, %v3354
    %v3391 = vpack.c.b16 %v3359, %v3355
    %v3392 = vpack.c.b16 %v3360, %v3356
    %3425 = vmatpush.bf16.msra.mxu0 %v3389
    %3426 = vmatpush.bf16.msra.mxu0 %v3385
    %3427 = vmatpush.bf16.msra.mxu0 %v3381
    %3428 = vmatpush.bf16.msra.mxu0 %v3377
    %3429 = vmatpush.bf16.msra.mxu0 %v3373
    %3430 = vmatpush.bf16.msra.mxu0 %v3369
    %3431 = vmatpush.bf16.msra.mxu0 %v3365
    %3432 = vmatpush.bf16.msra.mxu0 %v3361
    %3433 = vmatmul.bf16.gmra.mxu0 %v2694
    %v3434 = vpop.f32.mrf.mxu0
    %v3435 = vadd.f32 %v3257, %v3434
    %v3436 = vpop.f32.mrf.mxu0
    %3437 = vdwg.mxu0
    %3438 = vmatpush.bf16.msra.mxu0 %v3390
    %3439 = vmatpush.bf16.msra.mxu0 %v3386
    %3440 = vmatpush.bf16.msra.mxu0 %v3382
    %3441 = vmatpush.bf16.msra.mxu0 %v3378
    %3442 = vmatpush.bf16.msra.mxu0 %v3374
    %3443 = vmatpush.bf16.msra.mxu0 %v3370
    %3444 = vmatpush.bf16.msra.mxu0 %v3366
    %3445 = vmatpush.bf16.msra.mxu0 %v3362
    %3446 = vmatmul.bf16.gmra.mxu0 %v2694
    %v3447 = vpop.f32.mrf.mxu0
    %v3448 = vadd.f32 %v3258, %v3447
    %v3449 = vpop.f32.mrf.mxu0
    %3450 = vdwg.mxu0
    %3451 = vmatpush.bf16.msra.mxu0 %v3391
    %3452 = vmatpush.bf16.msra.mxu0 %v3387
    %3453 = vmatpush.bf16.msra.mxu0 %v3383
    %3454 = vmatpush.bf16.msra.mxu0 %v3379
    %3455 = vmatpush.bf16.msra.mxu0 %v3375
    %3456 = vmatpush.bf16.msra.mxu0 %v3371
    %3457 = vmatpush.bf16.msra.mxu0 %v3367
    %3458 = vmatpush.bf16.msra.mxu0 %v3363
    %3459 = vmatmul.bf16.gmra.mxu0 %v2694
    %v3460 = vpop.f32.mrf.mxu0
    %v3461 = vadd.f32 %v3259, %v3460
    %v3462 = vpop.f32.mrf.mxu0
    %3463 = vdwg.mxu0
    %3464 = vmatpush.bf16.msra.mxu0 %v3392
    %3465 = vmatpush.bf16.msra.mxu0 %v3388
    %3466 = vmatpush.bf16.msra.mxu0 %v3384
    %3467 = vmatpush.bf16.msra.mxu0 %v3380
    %3468 = vmatpush.bf16.msra.mxu0 %v3376
    %3469 = vmatpush.bf16.msra.mxu0 %v3372
    %3470 = vmatpush.bf16.msra.mxu0 %v3368
    %3471 = vmatpush.bf16.msra.mxu0 %v3364
    %3472 = vmatmul.bf16.gmra.mxu0 %v2694
    %v3473 = vpop.f32.mrf.mxu0
    %v3474 = vadd.f32 %v3260, %v3473
    %v3475 = vpop.f32.mrf.mxu0
    %3476 = vdwg.mxu0
    %v3477 = vld [vmem:[%s366] sm:$0xff]
    %v3478 = vld [vmem:[%s366 + $0x8] sm:$0xff]
    %v3479 = vld [vmem:[%s366 + $0x10] sm:$0xff]
    %v3480 = vld [vmem:[%s366 + $0x18] sm:$0xff]
    %v3481 = vld [vmem:[%s366 + $0x20] sm:$0xff]
    %v3482 = vld [vmem:[%s366 + $0x28] sm:$0xff]
    %v3483 = vld [vmem:[%s366 + $0x30] sm:$0xff]
    %v3484 = vld [vmem:[%s366 + $0x38] sm:$0xff]
    %v3485 = vld [vmem:[%s366 + $0x40] sm:$0xff]
    %v3486 = vld [vmem:[%s366 + $0x48] sm:$0xff]
    %v3487 = vld [vmem:[%s366 + $0x50] sm:$0xff]
    %v3488 = vld [vmem:[%s366 + $0x58] sm:$0xff]
    %v3489 = vld [vmem:[%s366 + $0x60] sm:$0xff]
    %v3490 = vld [vmem:[%s366 + $0x68] sm:$0xff]
    %v3491 = vld [vmem:[%s366 + $0x70] sm:$0xff]
    %v3492 = vld [vmem:[%s366 + $0x78] sm:$0xff]
    %v3493 = vld [vmem:[%s366 + $0x80] sm:$0xff]
    %v3494 = vld [vmem:[%s366 + $0x88] sm:$0xff]
    %v3495 = vld [vmem:[%s366 + $0x90] sm:$0xff]
    %v3496 = vld [vmem:[%s366 + $0x98] sm:$0xff]
    %v3497 = vld [vmem:[%s366 + $0xa0] sm:$0xff]
    %v3498 = vld [vmem:[%s366 + $0xa8] sm:$0xff]
    %v3499 = vld [vmem:[%s366 + $0xb0] sm:$0xff]
    %v3500 = vld [vmem:[%s366 + $0xb8] sm:$0xff]
    %v3501 = vld [vmem:[%s366 + $0xc0] sm:$0xff]
    %v3502 = vld [vmem:[%s366 + $0xc8] sm:$0xff]
    %v3503 = vld [vmem:[%s366 + $0xd0] sm:$0xff]
    %v3504 = vld [vmem:[%s366 + $0xd8] sm:$0xff]
    %v3505 = vld [vmem:[%s366 + $0xe0] sm:$0xff]
    %v3506 = vld [vmem:[%s366 + $0xe8] sm:$0xff]
    %v3507 = vld [vmem:[%s366 + $0xf0] sm:$0xff]
    %v3508 = vld [vmem:[%s366 + $0xf8] sm:$0xff]
    %v3509 = vld [vmem:[%s399] sm:$0xf]
    %v3511 = vperm.slane %v3509, 0
    %v3512 = vperm.slane %v3509, 1
    %v3513 = vperm.slane %v3509, 2
    %v3514 = vperm.slane %v3509, 3
    %v3551 = vunpack.c.l.b16 %v3477
    %v3552 = vunpack.c.h.b16 %v3477
    %v3553 = vunpack.c.l.b16 %v3478
    %v3554 = vunpack.c.h.b16 %v3478
    %v3555 = vunpack.c.l.b16 %v3479
    %v3556 = vunpack.c.h.b16 %v3479
    %v3557 = vunpack.c.l.b16 %v3480
    %v3558 = vunpack.c.h.b16 %v3480
    %v3559 = vunpack.c.l.b16 %v3481
    %v3560 = vunpack.c.h.b16 %v3481
    %v3561 = vunpack.c.l.b16 %v3482
    %v3562 = vunpack.c.h.b16 %v3482
    %v3563 = vunpack.c.l.b16 %v3483
    %v3564 = vunpack.c.h.b16 %v3483
    %v3565 = vunpack.c.l.b16 %v3484
    %v3566 = vunpack.c.h.b16 %v3484
    %v3567 = vunpack.c.l.b16 %v3485
    %v3568 = vunpack.c.h.b16 %v3485
    %v3569 = vunpack.c.l.b16 %v3486
    %v3570 = vunpack.c.h.b16 %v3486
    %v3571 = vunpack.c.l.b16 %v3487
    %v3572 = vunpack.c.h.b16 %v3487
    %v3573 = vunpack.c.l.b16 %v3488
    %v3574 = vunpack.c.h.b16 %v3488
    %v3575 = vunpack.c.l.b16 %v3489
    %v3576 = vunpack.c.h.b16 %v3489
    %v3577 = vunpack.c.l.b16 %v3490
    %v3578 = vunpack.c.h.b16 %v3490
    %v3579 = vunpack.c.l.b16 %v3491
    %v3580 = vunpack.c.h.b16 %v3491
    %v3581 = vunpack.c.l.b16 %v3492
    %v3582 = vunpack.c.h.b16 %v3492
    %v3583 = vunpack.c.l.b16 %v3493
    %v3584 = vunpack.c.h.b16 %v3493
    %v3585 = vunpack.c.l.b16 %v3494
    %v3586 = vunpack.c.h.b16 %v3494
    %v3587 = vunpack.c.l.b16 %v3495
    %v3588 = vunpack.c.h.b16 %v3495
    %v3589 = vunpack.c.l.b16 %v3496
    %v3590 = vunpack.c.h.b16 %v3496
    %v3591 = vunpack.c.l.b16 %v3497
    %v3592 = vunpack.c.h.b16 %v3497
    %v3593 = vunpack.c.l.b16 %v3498
    %v3594 = vunpack.c.h.b16 %v3498
    %v3595 = vunpack.c.l.b16 %v3499
    %v3596 = vunpack.c.h.b16 %v3499
    %v3597 = vunpack.c.l.b16 %v3500
    %v3598 = vunpack.c.h.b16 %v3500
    %v3599 = vunpack.c.l.b16 %v3501
    %v3600 = vunpack.c.h.b16 %v3501
    %v3601 = vunpack.c.l.b16 %v3502
    %v3602 = vunpack.c.h.b16 %v3502
    %v3603 = vunpack.c.l.b16 %v3503
    %v3604 = vunpack.c.h.b16 %v3503
    %v3605 = vunpack.c.l.b16 %v3504
    %v3606 = vunpack.c.h.b16 %v3504
    %v3607 = vunpack.c.l.b16 %v3505
    %v3608 = vunpack.c.h.b16 %v3505
    %v3609 = vunpack.c.l.b16 %v3506
    %v3610 = vunpack.c.h.b16 %v3506
    %v3611 = vunpack.c.l.b16 %v3507
    %v3612 = vunpack.c.h.b16 %v3507
    %v3613 = vunpack.c.l.b16 %v3508
    %v3614 = vunpack.c.h.b16 %v3508
    %v3615 = vpack.c.b16 %v3555, %v3551
    %v3616 = vpack.c.b16 %v3556, %v3552
    %v3617 = vpack.c.b16 %v3557, %v3553
    %v3618 = vpack.c.b16 %v3558, %v3554
    %v3619 = vpack.c.b16 %v3563, %v3559
    %v3620 = vpack.c.b16 %v3564, %v3560
    %v3621 = vpack.c.b16 %v3565, %v3561
    %v3622 = vpack.c.b16 %v3566, %v3562
    %v3623 = vpack.c.b16 %v3571, %v3567
    %v3624 = vpack.c.b16 %v3572, %v3568
    %v3625 = vpack.c.b16 %v3573, %v3569
    %v3626 = vpack.c.b16 %v3574, %v3570
    %v3627 = vpack.c.b16 %v3579, %v3575
    %v3628 = vpack.c.b16 %v3580, %v3576
    %v3629 = vpack.c.b16 %v3581, %v3577
    %v3630 = vpack.c.b16 %v3582, %v3578
    %v3631 = vpack.c.b16 %v3587, %v3583
    %v3632 = vpack.c.b16 %v3588, %v3584
    %v3633 = vpack.c.b16 %v3589, %v3585
    %v3634 = vpack.c.b16 %v3590, %v3586
    %v3635 = vpack.c.b16 %v3595, %v3591
    %v3636 = vpack.c.b16 %v3596, %v3592
    %v3637 = vpack.c.b16 %v3597, %v3593
    %v3638 = vpack.c.b16 %v3598, %v3594
    %v3639 = vpack.c.b16 %v3603, %v3599
    %v3640 = vpack.c.b16 %v3604, %v3600
    %v3641 = vpack.c.b16 %v3605, %v3601
    %v3642 = vpack.c.b16 %v3606, %v3602
    %v3643 = vpack.c.b16 %v3611, %v3607
    %v3644 = vpack.c.b16 %v3612, %v3608
    %v3645 = vpack.c.b16 %v3613, %v3609
    %v3646 = vpack.c.b16 %v3614, %v3610
    %3679 = vmatpush.bf16.msra.mxu0 %v3643
    %3680 = vmatpush.bf16.msra.mxu0 %v3639
    %3681 = vmatpush.bf16.msra.mxu0 %v3635
    %3682 = vmatpush.bf16.msra.mxu0 %v3631
    %3683 = vmatpush.bf16.msra.mxu0 %v3627
    %3684 = vmatpush.bf16.msra.mxu0 %v3623
    %3685 = vmatpush.bf16.msra.mxu0 %v3619
    %3686 = vmatpush.bf16.msra.mxu0 %v3615
    %3687 = vmatmul.bf16.gmra.mxu0 %v2957
    %v3688 = vpop.f32.mrf.mxu0
    %v3689 = vadd.f32 %v3511, %v3688
    %v3690 = vpop.f32.mrf.mxu0
    %3691 = vdwg.mxu0
    %3692 = vmatpush.bf16.msra.mxu0 %v3644
    %3693 = vmatpush.bf16.msra.mxu0 %v3640
    %3694 = vmatpush.bf16.msra.mxu0 %v3636
    %3695 = vmatpush.bf16.msra.mxu0 %v3632
    %3696 = vmatpush.bf16.msra.mxu0 %v3628
    %3697 = vmatpush.bf16.msra.mxu0 %v3624
    %3698 = vmatpush.bf16.msra.mxu0 %v3620
    %3699 = vmatpush.bf16.msra.mxu0 %v3616
    %3700 = vmatmul.bf16.gmra.mxu0 %v2957
    %v3701 = vpop.f32.mrf.mxu0
    %v3702 = vadd.f32 %v3512, %v3701
    %v3703 = vpop.f32.mrf.mxu0
    %3704 = vdwg.mxu0
    %3705 = vmatpush.bf16.msra.mxu0 %v3645
    %3706 = vmatpush.bf16.msra.mxu0 %v3641
    %3707 = vmatpush.bf16.msra.mxu0 %v3637
    %3708 = vmatpush.bf16.msra.mxu0 %v3633
    %3709 = vmatpush.bf16.msra.mxu0 %v3629
    %3710 = vmatpush.bf16.msra.mxu0 %v3625
    %3711 = vmatpush.bf16.msra.mxu0 %v3621
    %3712 = vmatpush.bf16.msra.mxu0 %v3617
    %3713 = vmatmul.bf16.gmra.mxu0 %v2957
    %v3714 = vpop.f32.mrf.mxu0
    %v3715 = vadd.f32 %v3513, %v3714
    %v3716 = vpop.f32.mrf.mxu0
    %3717 = vdwg.mxu0
    %3718 = vmatpush.bf16.msra.mxu0 %v3646
    %3719 = vmatpush.bf16.msra.mxu0 %v3642
    %3720 = vmatpush.bf16.msra.mxu0 %v3638
    %3721 = vmatpush.bf16.msra.mxu0 %v3634
    %3722 = vmatpush.bf16.msra.mxu0 %v3630
    %3723 = vmatpush.bf16.msra.mxu0 %v3626
    %3724 = vmatpush.bf16.msra.mxu0 %v3622
    %3725 = vmatpush.bf16.msra.mxu0 %v3618
    %3726 = vmatmul.bf16.gmra.mxu0 %v2957
    %v3727 = vpop.f32.mrf.mxu0
    %v3728 = vadd.f32 %v3514, %v3727
    %v3729 = vpop.f32.mrf.mxu0
    %3730 = vdwg.mxu0
    %v3731 = vld [vmem:[%s622] sm:$0xff]
    %v3732 = vld [vmem:[%s622 + $0x8] sm:$0xff]
    %v3733 = vld [vmem:[%s622 + $0x10] sm:$0xff]
    %v3734 = vld [vmem:[%s622 + $0x18] sm:$0xff]
    %v3735 = vld [vmem:[%s622 + $0x20] sm:$0xff]
    %v3736 = vld [vmem:[%s622 + $0x28] sm:$0xff]
    %v3737 = vld [vmem:[%s622 + $0x30] sm:$0xff]
    %v3738 = vld [vmem:[%s622 + $0x38] sm:$0xff]
    %v3739 = vld [vmem:[%s622 + $0x40] sm:$0xff]
    %v3740 = vld [vmem:[%s622 + $0x48] sm:$0xff]
    %v3741 = vld [vmem:[%s622 + $0x50] sm:$0xff]
    %v3742 = vld [vmem:[%s622 + $0x58] sm:$0xff]
    %v3743 = vld [vmem:[%s622 + $0x60] sm:$0xff]
    %v3744 = vld [vmem:[%s622 + $0x68] sm:$0xff]
    %v3745 = vld [vmem:[%s622 + $0x70] sm:$0xff]
    %v3746 = vld [vmem:[%s622 + $0x78] sm:$0xff]
    %v3747 = vld [vmem:[%s622 + $0x80] sm:$0xff]
    %v3748 = vld [vmem:[%s622 + $0x88] sm:$0xff]
    %v3749 = vld [vmem:[%s622 + $0x90] sm:$0xff]
    %v3750 = vld [vmem:[%s622 + $0x98] sm:$0xff]
    %v3751 = vld [vmem:[%s622 + $0xa0] sm:$0xff]
    %v3752 = vld [vmem:[%s622 + $0xa8] sm:$0xff]
    %v3753 = vld [vmem:[%s622 + $0xb0] sm:$0xff]
    %v3754 = vld [vmem:[%s622 + $0xb8] sm:$0xff]
    %v3755 = vld [vmem:[%s622 + $0xc0] sm:$0xff]
    %v3756 = vld [vmem:[%s622 + $0xc8] sm:$0xff]
    %v3757 = vld [vmem:[%s622 + $0xd0] sm:$0xff]
    %v3758 = vld [vmem:[%s622 + $0xd8] sm:$0xff]
    %v3759 = vld [vmem:[%s622 + $0xe0] sm:$0xff]
    %v3760 = vld [vmem:[%s622 + $0xe8] sm:$0xff]
    %v3761 = vld [vmem:[%s622 + $0xf0] sm:$0xff]
    %v3762 = vld [vmem:[%s622 + $0xf8] sm:$0xff]
    %v3763 = vld [vmem:[%s655] sm:$0xf]
    %v3765 = vperm.slane %v3763, 0
    %v3766 = vperm.slane %v3763, 1
    %v3767 = vperm.slane %v3763, 2
    %v3768 = vperm.slane %v3763, 3
    %v3805 = vunpack.c.l.b16 %v3731
    %v3806 = vunpack.c.h.b16 %v3731
    %v3807 = vunpack.c.l.b16 %v3732
    %v3808 = vunpack.c.h.b16 %v3732
    %v3809 = vunpack.c.l.b16 %v3733
    %v3810 = vunpack.c.h.b16 %v3733
    %v3811 = vunpack.c.l.b16 %v3734
    %v3812 = vunpack.c.h.b16 %v3734
    %v3813 = vunpack.c.l.b16 %v3735
    %v3814 = vunpack.c.h.b16 %v3735
    %v3815 = vunpack.c.l.b16 %v3736
    %v3816 = vunpack.c.h.b16 %v3736
    %v3817 = vunpack.c.l.b16 %v3737
    %v3818 = vunpack.c.h.b16 %v3737
    %v3819 = vunpack.c.l.b16 %v3738
    %v3820 = vunpack.c.h.b16 %v3738
    %v3821 = vunpack.c.l.b16 %v3739
    %v3822 = vunpack.c.h.b16 %v3739
    %v3823 = vunpack.c.l.b16 %v3740
    %v3824 = vunpack.c.h.b16 %v3740
    %v3825 = vunpack.c.l.b16 %v3741
    %v3826 = vunpack.c.h.b16 %v3741
    %v3827 = vunpack.c.l.b16 %v3742
    %v3828 = vunpack.c.h.b16 %v3742
    %v3829 = vunpack.c.l.b16 %v3743
    %v3830 = vunpack.c.h.b16 %v3743
    %v3831 = vunpack.c.l.b16 %v3744
    %v3832 = vunpack.c.h.b16 %v3744
    %v3833 = vunpack.c.l.b16 %v3745
    %v3834 = vunpack.c.h.b16 %v3745
    %v3835 = vunpack.c.l.b16 %v3746
    %v3836 = vunpack.c.h.b16 %v3746
    %v3837 = vunpack.c.l.b16 %v3747
    %v3838 = vunpack.c.h.b16 %v3747
    %v3839 = vunpack.c.l.b16 %v3748
    %v3840 = vunpack.c.h.b16 %v3748
    %v3841 = vunpack.c.l.b16 %v3749
    %v3842 = vunpack.c.h.b16 %v3749
    %v3843 = vunpack.c.l.b16 %v3750
    %v3844 = vunpack.c.h.b16 %v3750
    %v3845 = vunpack.c.l.b16 %v3751
    %v3846 = vunpack.c.h.b16 %v3751
    %v3847 = vunpack.c.l.b16 %v3752
    %v3848 = vunpack.c.h.b16 %v3752
    %v3849 = vunpack.c.l.b16 %v3753
    %v3850 = vunpack.c.h.b16 %v3753
    %v3851 = vunpack.c.l.b16 %v3754
    %v3852 = vunpack.c.h.b16 %v3754
    %v3853 = vunpack.c.l.b16 %v3755
    %v3854 = vunpack.c.h.b16 %v3755
    %v3855 = vunpack.c.l.b16 %v3756
    %v3856 = vunpack.c.h.b16 %v3756
    %v3857 = vunpack.c.l.b16 %v3757
    %v3858 = vunpack.c.h.b16 %v3757
    %v3859 = vunpack.c.l.b16 %v3758
    %v3860 = vunpack.c.h.b16 %v3758
    %v3861 = vunpack.c.l.b16 %v3759
    %v3862 = vunpack.c.h.b16 %v3759
    %v3863 = vunpack.c.l.b16 %v3760
    %v3864 = vunpack.c.h.b16 %v3760
    %v3865 = vunpack.c.l.b16 %v3761
    %v3866 = vunpack.c.h.b16 %v3761
    %v3867 = vunpack.c.l.b16 %v3762
    %v3868 = vunpack.c.h.b16 %v3762
    %v3869 = vpack.c.b16 %v3809, %v3805
    %v3870 = vpack.c.b16 %v3810, %v3806
    %v3871 = vpack.c.b16 %v3811, %v3807
    %v3872 = vpack.c.b16 %v3812, %v3808
    %v3873 = vpack.c.b16 %v3817, %v3813
    %v3874 = vpack.c.b16 %v3818, %v3814
    %v3875 = vpack.c.b16 %v3819, %v3815
    %v3876 = vpack.c.b16 %v3820, %v3816
    %v3877 = vpack.c.b16 %v3825, %v3821
    %v3878 = vpack.c.b16 %v3826, %v3822
    %v3879 = vpack.c.b16 %v3827, %v3823
    %v3880 = vpack.c.b16 %v3828, %v3824
    %v3881 = vpack.c.b16 %v3833, %v3829
    %v3882 = vpack.c.b16 %v3834, %v3830
    %v3883 = vpack.c.b16 %v3835, %v3831
    %v3884 = vpack.c.b16 %v3836, %v3832
    %v3885 = vpack.c.b16 %v3841, %v3837
    %v3886 = vpack.c.b16 %v3842, %v3838
    %v3887 = vpack.c.b16 %v3843, %v3839
    %v3888 = vpack.c.b16 %v3844, %v3840
    %v3889 = vpack.c.b16 %v3849, %v3845
    %v3890 = vpack.c.b16 %v3850, %v3846
    %v3891 = vpack.c.b16 %v3851, %v3847
    %v3892 = vpack.c.b16 %v3852, %v3848
    %v3893 = vpack.c.b16 %v3857, %v3853
    %v3894 = vpack.c.b16 %v3858, %v3854
    %v3895 = vpack.c.b16 %v3859, %v3855
    %v3896 = vpack.c.b16 %v3860, %v3856
    %v3897 = vpack.c.b16 %v3865, %v3861
    %v3898 = vpack.c.b16 %v3866, %v3862
    %v3899 = vpack.c.b16 %v3867, %v3863
    %v3900 = vpack.c.b16 %v3868, %v3864
    %3933 = vmatpush.bf16.msra.mxu0 %v3897
    %3934 = vmatpush.bf16.msra.mxu0 %v3893
    %3935 = vmatpush.bf16.msra.mxu0 %v3889
    %3936 = vmatpush.bf16.msra.mxu0 %v3885
    %3937 = vmatpush.bf16.msra.mxu0 %v3881
    %3938 = vmatpush.bf16.msra.mxu0 %v3877
    %3939 = vmatpush.bf16.msra.mxu0 %v3873
    %3940 = vmatpush.bf16.msra.mxu0 %v3869
    %3941 = vmatmul.bf16.gmra.mxu0 %v3220
    %v3942 = vpop.f32.mrf.mxu0
    %v3943 = vadd.f32 %v3765, %v3942
    %v3944 = vpop.f32.mrf.mxu0
    %3945 = vdwg.mxu0
    %3946 = vmatpush.bf16.msra.mxu0 %v3898
    %3947 = vmatpush.bf16.msra.mxu0 %v3894
    %3948 = vmatpush.bf16.msra.mxu0 %v3890
    %3949 = vmatpush.bf16.msra.mxu0 %v3886
    %3950 = vmatpush.bf16.msra.mxu0 %v3882
    %3951 = vmatpush.bf16.msra.mxu0 %v3878
    %3952 = vmatpush.bf16.msra.mxu0 %v3874
    %3953 = vmatpush.bf16.msra.mxu0 %v3870
    %3954 = vmatmul.bf16.gmra.mxu0 %v3220
    %v3955 = vpop.f32.mrf.mxu0
    %v3956 = vadd.f32 %v3766, %v3955
    %v3957 = vpop.f32.mrf.mxu0
    %3958 = vdwg.mxu0
    %3959 = vmatpush.bf16.msra.mxu0 %v3899
    %3960 = vmatpush.bf16.msra.mxu0 %v3895
    %3961 = vmatpush.bf16.msra.mxu0 %v3891
    %3962 = vmatpush.bf16.msra.mxu0 %v3887
    %3963 = vmatpush.bf16.msra.mxu0 %v3883
    %3964 = vmatpush.bf16.msra.mxu0 %v3879
    %3965 = vmatpush.bf16.msra.mxu0 %v3875
    %3966 = vmatpush.bf16.msra.mxu0 %v3871
    %3967 = vmatmul.bf16.gmra.mxu0 %v3220
    %v3968 = vpop.f32.mrf.mxu0
    %v3969 = vadd.f32 %v3767, %v3968
    %v3970 = vpop.f32.mrf.mxu0
    %3971 = vdwg.mxu0
    %3972 = vmatpush.bf16.msra.mxu0 %v3900
    %3973 = vmatpush.bf16.msra.mxu0 %v3896
    %3974 = vmatpush.bf16.msra.mxu0 %v3892
    %3975 = vmatpush.bf16.msra.mxu0 %v3888
    %3976 = vmatpush.bf16.msra.mxu0 %v3884
    %3977 = vmatpush.bf16.msra.mxu0 %v3880
    %3978 = vmatpush.bf16.msra.mxu0 %v3876
    %3979 = vmatpush.bf16.msra.mxu0 %v3872
    %3980 = vmatmul.bf16.gmra.mxu0 %v3220
    %v3981 = vpop.f32.mrf.mxu0
    %v3982 = vadd.f32 %v3768, %v3981
    %v3983 = vpop.f32.mrf.mxu0
    %3984 = vdwg.mxu0
    %v3985 = vld [vmem:[#allocation7] sm:$0xff]
    %v3986 = vld [vmem:[#allocation7 + $0x8] sm:$0xff]
    %v3987 = vld [vmem:[#allocation7 + $0x10] sm:$0xff]
    %v3988 = vld [vmem:[#allocation7 + $0x18] sm:$0xff]
    %v3989 = vld [vmem:[#allocation7 + $0x20] sm:$0xff]
    %v3990 = vld [vmem:[#allocation7 + $0x28] sm:$0xff]
    %v3991 = vld [vmem:[#allocation7 + $0x30] sm:$0xff]
    %v3992 = vld [vmem:[#allocation7 + $0x38] sm:$0xff]
    %v3993 = vld [vmem:[#allocation7 + $0x40] sm:$0xff]
    %v3994 = vld [vmem:[#allocation7 + $0x48] sm:$0xff]
    %v3995 = vld [vmem:[#allocation7 + $0x50] sm:$0xff]
    %v3996 = vld [vmem:[#allocation7 + $0x58] sm:$0xff]
    %v3997 = vld [vmem:[#allocation7 + $0x60] sm:$0xff]
    %v3998 = vld [vmem:[#allocation7 + $0x68] sm:$0xff]
    %v3999 = vld [vmem:[#allocation7 + $0x70] sm:$0xff]
    %v4000 = vld [vmem:[#allocation7 + $0x78] sm:$0xff]
    %v4001 = vld [vmem:[#allocation7 + $0x80] sm:$0xff]
    %v4002 = vld [vmem:[#allocation7 + $0x88] sm:$0xff]
    %v4003 = vld [vmem:[#allocation7 + $0x90] sm:$0xff]
    %v4004 = vld [vmem:[#allocation7 + $0x98] sm:$0xff]
    %v4005 = vld [vmem:[#allocation7 + $0xa0] sm:$0xff]
    %v4006 = vld [vmem:[#allocation7 + $0xa8] sm:$0xff]
    %v4007 = vld [vmem:[#allocation7 + $0xb0] sm:$0xff]
    %v4008 = vld [vmem:[#allocation7 + $0xb8] sm:$0xff]
    %v4009 = vld [vmem:[#allocation7 + $0xc0] sm:$0xff]
    %v4010 = vld [vmem:[#allocation7 + $0xc8] sm:$0xff]
    %v4011 = vld [vmem:[#allocation7 + $0xd0] sm:$0xff]
    %v4012 = vld [vmem:[#allocation7 + $0xd8] sm:$0xff]
    %v4013 = vld [vmem:[#allocation7 + $0xe0] sm:$0xff]
    %v4014 = vld [vmem:[#allocation7 + $0xe8] sm:$0xff]
    %v4015 = vld [vmem:[#allocation7 + $0xf0] sm:$0xff]
    %v4016 = vld [vmem:[#allocation7 + $0xf8] sm:$0xff]
    %v4049 = vunpack.c.l.b16 %v3985
    %v4050 = vunpack.c.h.b16 %v3985
    %v4051 = vunpack.c.l.b16 %v3986
    %v4052 = vunpack.c.h.b16 %v3986
    %v4053 = vunpack.c.l.b16 %v3987
    %v4054 = vunpack.c.h.b16 %v3987
    %v4055 = vunpack.c.l.b16 %v3988
    %v4056 = vunpack.c.h.b16 %v3988
    %v4057 = vunpack.c.l.b16 %v3989
    %v4058 = vunpack.c.h.b16 %v3989
    %v4059 = vunpack.c.l.b16 %v3990
    %v4060 = vunpack.c.h.b16 %v3990
    %v4061 = vunpack.c.l.b16 %v3991
    %v4062 = vunpack.c.h.b16 %v3991
    %v4063 = vunpack.c.l.b16 %v3992
    %v4064 = vunpack.c.h.b16 %v3992
    %v4065 = vunpack.c.l.b16 %v3993
    %v4066 = vunpack.c.h.b16 %v3993
    %v4067 = vunpack.c.l.b16 %v3994
    %v4068 = vunpack.c.h.b16 %v3994
    %v4069 = vunpack.c.l.b16 %v3995
    %v4070 = vunpack.c.h.b16 %v3995
    %v4071 = vunpack.c.l.b16 %v3996
    %v4072 = vunpack.c.h.b16 %v3996
    %v4073 = vunpack.c.l.b16 %v3997
    %v4074 = vunpack.c.h.b16 %v3997
    %v4075 = vunpack.c.l.b16 %v3998
    %v4076 = vunpack.c.h.b16 %v3998
    %v4077 = vunpack.c.l.b16 %v3999
    %v4078 = vunpack.c.h.b16 %v3999
    %v4079 = vunpack.c.l.b16 %v4000
    %v4080 = vunpack.c.h.b16 %v4000
    %v4081 = vunpack.c.l.b16 %v4001
    %v4082 = vunpack.c.h.b16 %v4001
    %v4083 = vunpack.c.l.b16 %v4002
    %v4084 = vunpack.c.h.b16 %v4002
    %v4085 = vunpack.c.l.b16 %v4003
    %v4086 = vunpack.c.h.b16 %v4003
    %v4087 = vunpack.c.l.b16 %v4004
    %v4088 = vunpack.c.h.b16 %v4004
    %v4089 = vunpack.c.l.b16 %v4005
    %v4090 = vunpack.c.h.b16 %v4005
    %v4091 = vunpack.c.l.b16 %v4006
    %v4092 = vunpack.c.h.b16 %v4006
    %v4093 = vunpack.c.l.b16 %v4007
    %v4094 = vunpack.c.h.b16 %v4007
    %v4095 = vunpack.c.l.b16 %v4008
    %v4096 = vunpack.c.h.b16 %v4008
    %v4097 = vunpack.c.l.b16 %v4009
    %v4098 = vunpack.c.h.b16 %v4009
    %v4099 = vunpack.c.l.b16 %v4010
    %v4100 = vunpack.c.h.b16 %v4010
    %v4101 = vunpack.c.l.b16 %v4011
    %v4102 = vunpack.c.h.b16 %v4011
    %v4103 = vunpack.c.l.b16 %v4012
    %v4104 = vunpack.c.h.b16 %v4012
    %v4105 = vunpack.c.l.b16 %v4013
    %v4106 = vunpack.c.h.b16 %v4013
    %v4107 = vunpack.c.l.b16 %v4014
    %v4108 = vunpack.c.h.b16 %v4014
    %v4109 = vunpack.c.l.b16 %v4015
    %v4110 = vunpack.c.h.b16 %v4015
    %v4111 = vunpack.c.l.b16 %v4016
    %v4112 = vunpack.c.h.b16 %v4016
    %v4113 = vpack.c.b16 %v4053, %v4049
    %v4114 = vpack.c.b16 %v4054, %v4050
    %v4115 = vpack.c.b16 %v4055, %v4051
    %v4116 = vpack.c.b16 %v4056, %v4052
    %v4117 = vpack.c.b16 %v4061, %v4057
    %v4118 = vpack.c.b16 %v4062, %v4058
    %v4119 = vpack.c.b16 %v4063, %v4059
    %v4120 = vpack.c.b16 %v4064, %v4060
    %v4121 = vpack.c.b16 %v4069, %v4065
    %v4122 = vpack.c.b16 %v4070, %v4066
    %v4123 = vpack.c.b16 %v4071, %v4067
    %v4124 = vpack.c.b16 %v4072, %v4068
    %v4125 = vpack.c.b16 %v4077, %v4073
    %v4126 = vpack.c.b16 %v4078, %v4074
    %v4127 = vpack.c.b16 %v4079, %v4075
    %v4128 = vpack.c.b16 %v4080, %v4076
    %v4129 = vpack.c.b16 %v4085, %v4081
    %v4130 = vpack.c.b16 %v4086, %v4082
    %v4131 = vpack.c.b16 %v4087, %v4083
    %v4132 = vpack.c.b16 %v4088, %v4084
    %v4133 = vpack.c.b16 %v4093, %v4089
    %v4134 = vpack.c.b16 %v4094, %v4090
    %v4135 = vpack.c.b16 %v4095, %v4091
    %v4136 = vpack.c.b16 %v4096, %v4092
    %v4137 = vpack.c.b16 %v4101, %v4097
    %v4138 = vpack.c.b16 %v4102, %v4098
    %v4139 = vpack.c.b16 %v4103, %v4099
    %v4140 = vpack.c.b16 %v4104, %v4100
    %v4141 = vpack.c.b16 %v4109, %v4105
    %v4142 = vpack.c.b16 %v4110, %v4106
    %v4143 = vpack.c.b16 %v4111, %v4107
    %v4144 = vpack.c.b16 %v4112, %v4108
    %4177 = vmatpush.bf16.msra.mxu0 %v4141
    %4178 = vmatpush.bf16.msra.mxu0 %v4137
    %4179 = vmatpush.bf16.msra.mxu0 %v4133
    %4180 = vmatpush.bf16.msra.mxu0 %v4129
    %4181 = vmatpush.bf16.msra.mxu0 %v4125
    %4182 = vmatpush.bf16.msra.mxu0 %v4121
    %4183 = vmatpush.bf16.msra.mxu0 %v4117
    %4184 = vmatpush.bf16.msra.mxu0 %v4113
    %4185 = vmatmul.bf16.gmra.mxu0 %v3220
    %v4186 = vpop.f32.mrf.mxu0
    %v4187 = vadd.f32 %v3435, %v4186
    %v4188 = vpop.f32.mrf.mxu0
    %4189 = vdwg.mxu0
    %4190 = vmatpush.bf16.msra.mxu0 %v4142
    %4191 = vmatpush.bf16.msra.mxu0 %v4138
    %4192 = vmatpush.bf16.msra.mxu0 %v4134
    %4193 = vmatpush.bf16.msra.mxu0 %v4130
    %4194 = vmatpush.bf16.msra.mxu0 %v4126
    %4195 = vmatpush.bf16.msra.mxu0 %v4122
    %4196 = vmatpush.bf16.msra.mxu0 %v4118
    %4197 = vmatpush.bf16.msra.mxu0 %v4114
    %4198 = vmatmul.bf16.gmra.mxu0 %v3220
    %v4199 = vpop.f32.mrf.mxu0
    %v4200 = vadd.f32 %v3448, %v4199
    %v4201 = vpop.f32.mrf.mxu0
    %4202 = vdwg.mxu0
    %4203 = vmatpush.bf16.msra.mxu0 %v4143
    %4204 = vmatpush.bf16.msra.mxu0 %v4139
    %4205 = vmatpush.bf16.msra.mxu0 %v4135
    %4206 = vmatpush.bf16.msra.mxu0 %v4131
    %4207 = vmatpush.bf16.msra.mxu0 %v4127
    %4208 = vmatpush.bf16.msra.mxu0 %v4123
    %4209 = vmatpush.bf16.msra.mxu0 %v4119
    %4210 = vmatpush.bf16.msra.mxu0 %v4115
    %4211 = vmatmul.bf16.gmra.mxu0 %v3220
    %v4212 = vpop.f32.mrf.mxu0
    %v4213 = vadd.f32 %v3461, %v4212
    %v4214 = vpop.f32.mrf.mxu0
    %4215 = vdwg.mxu0
    %4216 = vmatpush.bf16.msra.mxu0 %v4144
    %4217 = vmatpush.bf16.msra.mxu0 %v4140
    %4218 = vmatpush.bf16.msra.mxu0 %v4136
    %4219 = vmatpush.bf16.msra.mxu0 %v4132
    %4220 = vmatpush.bf16.msra.mxu0 %v4128
    %4221 = vmatpush.bf16.msra.mxu0 %v4124
    %4222 = vmatpush.bf16.msra.mxu0 %v4120
    %4223 = vmatpush.bf16.msra.mxu0 %v4116
    %4224 = vmatmul.bf16.gmra.mxu0 %v3220
    %v4225 = vpop.f32.mrf.mxu0
    %v4226 = vadd.f32 %v3474, %v4225
    %v4227 = vpop.f32.mrf.mxu0
    %4228 = vdwg.mxu0
    %v4229 = vmul.f32 %v4187, 0.5
    %v4230 = vmul.f32 %v4200, 0.5
    %v4231 = vmul.f32 %v4213, 0.5
    %v4232 = vtanh.pop %v4229
    %v4233 = vtanh.pop %v4230
    %v4234 = vtanh.pop %v4231
    %v4235 = vadd.f32 %v4232, 1.0
    %v4236 = vadd.f32 %v4233, 1.0
    %v4237 = vadd.f32 %v4234, 1.0
    %v4238 = vmul.f32 %v4235, 0.5
    %v4239 = vmul.f32 %v4236, 0.5
    %v4240 = vmul.f32 %v4237, 0.5
    %v4241 = vtanh.pop %v4226
    %v4242 = vmul.f32 %v4239, %v2691
    %v4243 = vmul.f32 %v4238, %v4241
    %v4244 = vadd.f32 %v4242, %v4243
    %v4245 = vtanh.pop %v4244
    %v4246 = vmul.f32 %v4240, %v4245
    %v4247 = vpack.c.bf16 %v4246, %v4246
    %v4248 = vld [vmem:[%s1141] sm:$0xff]
    %v4249 = vld [vmem:[%s1141 + $0x8] sm:$0xff]
    %v4250 = vld [vmem:[%s1141 + $0x10] sm:$0xff]
    %v4251 = vld [vmem:[%s1141 + $0x18] sm:$0xff]
    %v4252 = vld [vmem:[%s1141 + $0x20] sm:$0xff]
    %v4253 = vld [vmem:[%s1141 + $0x28] sm:$0xff]
    %v4254 = vld [vmem:[%s1141 + $0x30] sm:$0xff]
    %v4255 = vld [vmem:[%s1141 + $0x38] sm:$0xff]
    %v4256 = vld [vmem:[%s1141 + $0x40] sm:$0xff]
    %v4257 = vld [vmem:[%s1141 + $0x48] sm:$0xff]
    %v4258 = vld [vmem:[%s1141 + $0x50] sm:$0xff]
    %v4259 = vld [vmem:[%s1141 + $0x58] sm:$0xff]
    %v4260 = vld [vmem:[%s1141 + $0x60] sm:$0xff]
    %v4261 = vld [vmem:[%s1141 + $0x68] sm:$0xff]
    %v4262 = vld [vmem:[%s1141 + $0x70] sm:$0xff]
    %v4263 = vld [vmem:[%s1141 + $0x78] sm:$0xff]
    %v4264 = vld [vmem:[%s1141 + $0x80] sm:$0xff]
    %v4265 = vld [vmem:[%s1141 + $0x88] sm:$0xff]
    %v4266 = vld [vmem:[%s1141 + $0x90] sm:$0xff]
    %v4267 = vld [vmem:[%s1141 + $0x98] sm:$0xff]
    %v4268 = vld [vmem:[%s1141 + $0xa0] sm:$0xff]
    %v4269 = vld [vmem:[%s1141 + $0xa8] sm:$0xff]
    %v4270 = vld [vmem:[%s1141 + $0xb0] sm:$0xff]
    %v4271 = vld [vmem:[%s1141 + $0xb8] sm:$0xff]
    %v4272 = vld [vmem:[%s1141 + $0xc0] sm:$0xff]
    %v4273 = vld [vmem:[%s1141 + $0xc8] sm:$0xff]
    %v4274 = vld [vmem:[%s1141 + $0xd0] sm:$0xff]
    %v4275 = vld [vmem:[%s1141 + $0xd8] sm:$0xff]
    %v4276 = vld [vmem:[%s1141 + $0xe0] sm:$0xff]
    %v4277 = vld [vmem:[%s1141 + $0xe8] sm:$0xff]
    %v4278 = vld [vmem:[%s1141 + $0xf0] sm:$0xff]
    %v4279 = vld [vmem:[%s1141 + $0xf8] sm:$0xff]
    %v4312 = vunpack.c.l.b16 %v4248
    %v4313 = vunpack.c.h.b16 %v4248
    %v4314 = vunpack.c.l.b16 %v4249
    %v4315 = vunpack.c.h.b16 %v4249
    %v4316 = vunpack.c.l.b16 %v4250
    %v4317 = vunpack.c.h.b16 %v4250
    %v4318 = vunpack.c.l.b16 %v4251
    %v4319 = vunpack.c.h.b16 %v4251
    %v4320 = vunpack.c.l.b16 %v4252
    %v4321 = vunpack.c.h.b16 %v4252
    %v4322 = vunpack.c.l.b16 %v4253
    %v4323 = vunpack.c.h.b16 %v4253
    %v4324 = vunpack.c.l.b16 %v4254
    %v4325 = vunpack.c.h.b16 %v4254
    %v4326 = vunpack.c.l.b16 %v4255
    %v4327 = vunpack.c.h.b16 %v4255
    %v4328 = vunpack.c.l.b16 %v4256
    %v4329 = vunpack.c.h.b16 %v4256
    %v4330 = vunpack.c.l.b16 %v4257
    %v4331 = vunpack.c.h.b16 %v4257
    %v4332 = vunpack.c.l.b16 %v4258
    %v4333 = vunpack.c.h.b16 %v4258
    %v4334 = vunpack.c.l.b16 %v4259
    %v4335 = vunpack.c.h.b16 %v4259
    %v4336 = vunpack.c.l.b16 %v4260
    %v4337 = vunpack.c.h.b16 %v4260
    %v4338 = vunpack.c.l.b16 %v4261
    %v4339 = vunpack.c.h.b16 %v4261
    %v4340 = vunpack.c.l.b16 %v4262
    %v4341 = vunpack.c.h.b16 %v4262
    %v4342 = vunpack.c.l.b16 %v4263
    %v4343 = vunpack.c.h.b16 %v4263
    %v4344 = vunpack.c.l.b16 %v4264
    %v4345 = vunpack.c.h.b16 %v4264
    %v4346 = vunpack.c.l.b16 %v4265
    %v4347 = vunpack.c.h.b16 %v4265
    %v4348 = vunpack.c.l.b16 %v4266
    %v4349 = vunpack.c.h.b16 %v4266
    %v4350 = vunpack.c.l.b16 %v4267
    %v4351 = vunpack.c.h.b16 %v4267
    %v4352 = vunpack.c.l.b16 %v4268
    %v4353 = vunpack.c.h.b16 %v4268
    %v4354 = vunpack.c.l.b16 %v4269
    %v4355 = vunpack.c.h.b16 %v4269
    %v4356 = vunpack.c.l.b16 %v4270
    %v4357 = vunpack.c.h.b16 %v4270
    %v4358 = vunpack.c.l.b16 %v4271
    %v4359 = vunpack.c.h.b16 %v4271
    %v4360 = vunpack.c.l.b16 %v4272
    %v4361 = vunpack.c.h.b16 %v4272
    %v4362 = vunpack.c.l.b16 %v4273
    %v4363 = vunpack.c.h.b16 %v4273
    %v4364 = vunpack.c.l.b16 %v4274
    %v4365 = vunpack.c.h.b16 %v4274
    %v4366 = vunpack.c.l.b16 %v4275
    %v4367 = vunpack.c.h.b16 %v4275
    %v4368 = vunpack.c.l.b16 %v4276
    %v4369 = vunpack.c.h.b16 %v4276
    %v4370 = vunpack.c.l.b16 %v4277
    %v4371 = vunpack.c.h.b16 %v4277
    %v4372 = vunpack.c.l.b16 %v4278
    %v4373 = vunpack.c.h.b16 %v4278
    %v4374 = vunpack.c.l.b16 %v4279
    %v4375 = vunpack.c.h.b16 %v4279
    %v4376 = vpack.c.b16 %v4316, %v4312
    %v4377 = vpack.c.b16 %v4317, %v4313
    %v4378 = vpack.c.b16 %v4318, %v4314
    %v4379 = vpack.c.b16 %v4319, %v4315
    %v4380 = vpack.c.b16 %v4324, %v4320
    %v4381 = vpack.c.b16 %v4325, %v4321
    %v4382 = vpack.c.b16 %v4326, %v4322
    %v4383 = vpack.c.b16 %v4327, %v4323
    %v4384 = vpack.c.b16 %v4332, %v4328
    %v4385 = vpack.c.b16 %v4333, %v4329
    %v4386 = vpack.c.b16 %v4334, %v4330
    %v4387 = vpack.c.b16 %v4335, %v4331
    %v4388 = vpack.c.b16 %v4340, %v4336
    %v4389 = vpack.c.b16 %v4341, %v4337
    %v4390 = vpack.c.b16 %v4342, %v4338
    %v4391 = vpack.c.b16 %v4343, %v4339
    %v4392 = vpack.c.b16 %v4348, %v4344
    %v4393 = vpack.c.b16 %v4349, %v4345
    %v4394 = vpack.c.b16 %v4350, %v4346
    %v4395 = vpack.c.b16 %v4351, %v4347
    %v4396 = vpack.c.b16 %v4356, %v4352
    %v4397 = vpack.c.b16 %v4357, %v4353
    %v4398 = vpack.c.b16 %v4358, %v4354
    %v4399 = vpack.c.b16 %v4359, %v4355
    %v4400 = vpack.c.b16 %v4364, %v4360
    %v4401 = vpack.c.b16 %v4365, %v4361
    %v4402 = vpack.c.b16 %v4366, %v4362
    %v4403 = vpack.c.b16 %v4367, %v4363
    %v4404 = vpack.c.b16 %v4372, %v4368
    %v4405 = vpack.c.b16 %v4373, %v4369
    %v4406 = vpack.c.b16 %v4374, %v4370
    %v4407 = vpack.c.b16 %v4375, %v4371
    %4440 = vmatpush.bf16.msra.mxu0 %v4404
    %4441 = vmatpush.bf16.msra.mxu0 %v4400
    %4442 = vmatpush.bf16.msra.mxu0 %v4396
    %4443 = vmatpush.bf16.msra.mxu0 %v4392
    %4444 = vmatpush.bf16.msra.mxu0 %v4388
    %4445 = vmatpush.bf16.msra.mxu0 %v4384
    %4446 = vmatpush.bf16.msra.mxu0 %v4380
    %4447 = vmatpush.bf16.msra.mxu0 %v4376
    %4448 = vmatmul.bf16.gmra.mxu0 %v4247
    %v4449 = vpop.f32.mrf.mxu0
    %v4450 = vadd.f32 %v3689, %v4449
    %v4451 = vpop.f32.mrf.mxu0
    %4452 = vdwg.mxu0
    %4453 = vmatpush.bf16.msra.mxu0 %v4405
    %4454 = vmatpush.bf16.msra.mxu0 %v4401
    %4455 = vmatpush.bf16.msra.mxu0 %v4397
    %4456 = vmatpush.bf16.msra.mxu0 %v4393
    %4457 = vmatpush.bf16.msra.mxu0 %v4389
    %4458 = vmatpush.bf16.msra.mxu0 %v4385
    %4459 = vmatpush.bf16.msra.mxu0 %v4381
    %4460 = vmatpush.bf16.msra.mxu0 %v4377
    %4461 = vmatmul.bf16.gmra.mxu0 %v4247
    %v4462 = vpop.f32.mrf.mxu0
    %v4463 = vadd.f32 %v3702, %v4462
    %v4464 = vpop.f32.mrf.mxu0
    %4465 = vdwg.mxu0
    %4466 = vmatpush.bf16.msra.mxu0 %v4406
    %4467 = vmatpush.bf16.msra.mxu0 %v4402
    %4468 = vmatpush.bf16.msra.mxu0 %v4398
    %4469 = vmatpush.bf16.msra.mxu0 %v4394
    %4470 = vmatpush.bf16.msra.mxu0 %v4390
    %4471 = vmatpush.bf16.msra.mxu0 %v4386
    %4472 = vmatpush.bf16.msra.mxu0 %v4382
    %4473 = vmatpush.bf16.msra.mxu0 %v4378
    %4474 = vmatmul.bf16.gmra.mxu0 %v4247
    %v4475 = vpop.f32.mrf.mxu0
    %v4476 = vadd.f32 %v3715, %v4475
    %v4477 = vpop.f32.mrf.mxu0
    %4478 = vdwg.mxu0
    %4479 = vmatpush.bf16.msra.mxu0 %v4407
    %4480 = vmatpush.bf16.msra.mxu0 %v4403
    %4481 = vmatpush.bf16.msra.mxu0 %v4399
    %4482 = vmatpush.bf16.msra.mxu0 %v4395
    %4483 = vmatpush.bf16.msra.mxu0 %v4391
    %4484 = vmatpush.bf16.msra.mxu0 %v4387
    %4485 = vmatpush.bf16.msra.mxu0 %v4383
    %4486 = vmatpush.bf16.msra.mxu0 %v4379
    %4487 = vmatmul.bf16.gmra.mxu0 %v4247
    %v4488 = vpop.f32.mrf.mxu0
    %v4489 = vadd.f32 %v3728, %v4488
    %v4490 = vpop.f32.mrf.mxu0
    %4491 = vdwg.mxu0
    %v4492 = vmul.f32 %v4450, 0.5
    %v4493 = vmul.f32 %v4463, 0.5
    %v4494 = vmul.f32 %v4476, 0.5
    %v4495 = vtanh.pop %v4492
    %v4496 = vtanh.pop %v4493
    %v4497 = vtanh.pop %v4494
    %v4498 = vadd.f32 %v4495, 1.0
    %v4499 = vadd.f32 %v4496, 1.0
    %v4500 = vadd.f32 %v4497, 1.0
    %v4501 = vmul.f32 %v4498, 0.5
    %v4502 = vmul.f32 %v4499, 0.5
    %v4503 = vmul.f32 %v4500, 0.5
    %v4504 = vtanh.pop %v4489
    %v4505 = vmul.f32 %v4502, %v2954
    %v4506 = vmul.f32 %v4501, %v4504
    %v4507 = vadd.f32 %v4505, %v4506
    %v4508 = vtanh.pop %v4507
    %v4509 = vmul.f32 %v4503, %v4508
    %v4510 = vpack.c.bf16 %v4509, %v4509
    %v4511 = vld [vmem:[%s1405] sm:$0xff]
    %v4512 = vld [vmem:[%s1405 + $0x8] sm:$0xff]
    %v4513 = vld [vmem:[%s1405 + $0x10] sm:$0xff]
    %v4514 = vld [vmem:[%s1405 + $0x18] sm:$0xff]
    %v4515 = vld [vmem:[%s1405 + $0x20] sm:$0xff]
    %v4516 = vld [vmem:[%s1405 + $0x28] sm:$0xff]
    %v4517 = vld [vmem:[%s1405 + $0x30] sm:$0xff]
    %v4518 = vld [vmem:[%s1405 + $0x38] sm:$0xff]
    %v4519 = vld [vmem:[%s1405 + $0x40] sm:$0xff]
    %v4520 = vld [vmem:[%s1405 + $0x48] sm:$0xff]
    %v4521 = vld [vmem:[%s1405 + $0x50] sm:$0xff]
    %v4522 = vld [vmem:[%s1405 + $0x58] sm:$0xff]
    %v4523 = vld [vmem:[%s1405 + $0x60] sm:$0xff]
    %v4524 = vld [vmem:[%s1405 + $0x68] sm:$0xff]
    %v4525 = vld [vmem:[%s1405 + $0x70] sm:$0xff]
    %v4526 = vld [vmem:[%s1405 + $0x78] sm:$0xff]
    %v4527 = vld [vmem:[%s1405 + $0x80] sm:$0xff]
    %v4528 = vld [vmem:[%s1405 + $0x88] sm:$0xff]
    %v4529 = vld [vmem:[%s1405 + $0x90] sm:$0xff]
    %v4530 = vld [vmem:[%s1405 + $0x98] sm:$0xff]
    %v4531 = vld [vmem:[%s1405 + $0xa0] sm:$0xff]
    %v4532 = vld [vmem:[%s1405 + $0xa8] sm:$0xff]
    %v4533 = vld [vmem:[%s1405 + $0xb0] sm:$0xff]
    %v4534 = vld [vmem:[%s1405 + $0xb8] sm:$0xff]
    %v4535 = vld [vmem:[%s1405 + $0xc0] sm:$0xff]
    %v4536 = vld [vmem:[%s1405 + $0xc8] sm:$0xff]
    %v4537 = vld [vmem:[%s1405 + $0xd0] sm:$0xff]
    %v4538 = vld [vmem:[%s1405 + $0xd8] sm:$0xff]
    %v4539 = vld [vmem:[%s1405 + $0xe0] sm:$0xff]
    %v4540 = vld [vmem:[%s1405 + $0xe8] sm:$0xff]
    %v4541 = vld [vmem:[%s1405 + $0xf0] sm:$0xff]
    %v4542 = vld [vmem:[%s1405 + $0xf8] sm:$0xff]
    %v4575 = vunpack.c.l.b16 %v4511
    %v4576 = vunpack.c.h.b16 %v4511
    %v4577 = vunpack.c.l.b16 %v4512
    %v4578 = vunpack.c.h.b16 %v4512
    %v4579 = vunpack.c.l.b16 %v4513
    %v4580 = vunpack.c.h.b16 %v4513
    %v4581 = vunpack.c.l.b16 %v4514
    %v4582 = vunpack.c.h.b16 %v4514
    %v4583 = vunpack.c.l.b16 %v4515
    %v4584 = vunpack.c.h.b16 %v4515
    %v4585 = vunpack.c.l.b16 %v4516
    %v4586 = vunpack.c.h.b16 %v4516
    %v4587 = vunpack.c.l.b16 %v4517
    %v4588 = vunpack.c.h.b16 %v4517
    %v4589 = vunpack.c.l.b16 %v4518
    %v4590 = vunpack.c.h.b16 %v4518
    %v4591 = vunpack.c.l.b16 %v4519
    %v4592 = vunpack.c.h.b16 %v4519
    %v4593 = vunpack.c.l.b16 %v4520
    %v4594 = vunpack.c.h.b16 %v4520
    %v4595 = vunpack.c.l.b16 %v4521
    %v4596 = vunpack.c.h.b16 %v4521
    %v4597 = vunpack.c.l.b16 %v4522
    %v4598 = vunpack.c.h.b16 %v4522
    %v4599 = vunpack.c.l.b16 %v4523
    %v4600 = vunpack.c.h.b16 %v4523
    %v4601 = vunpack.c.l.b16 %v4524
    %v4602 = vunpack.c.h.b16 %v4524
    %v4603 = vunpack.c.l.b16 %v4525
    %v4604 = vunpack.c.h.b16 %v4525
    %v4605 = vunpack.c.l.b16 %v4526
    %v4606 = vunpack.c.h.b16 %v4526
    %v4607 = vunpack.c.l.b16 %v4527
    %v4608 = vunpack.c.h.b16 %v4527
    %v4609 = vunpack.c.l.b16 %v4528
    %v4610 = vunpack.c.h.b16 %v4528
    %v4611 = vunpack.c.l.b16 %v4529
    %v4612 = vunpack.c.h.b16 %v4529
    %v4613 = vunpack.c.l.b16 %v4530
    %v4614 = vunpack.c.h.b16 %v4530
    %v4615 = vunpack.c.l.b16 %v4531
    %v4616 = vunpack.c.h.b16 %v4531
    %v4617 = vunpack.c.l.b16 %v4532
    %v4618 = vunpack.c.h.b16 %v4532
    %v4619 = vunpack.c.l.b16 %v4533
    %v4620 = vunpack.c.h.b16 %v4533
    %v4621 = vunpack.c.l.b16 %v4534
    %v4622 = vunpack.c.h.b16 %v4534
    %v4623 = vunpack.c.l.b16 %v4535
    %v4624 = vunpack.c.h.b16 %v4535
    %v4625 = vunpack.c.l.b16 %v4536
    %v4626 = vunpack.c.h.b16 %v4536
    %v4627 = vunpack.c.l.b16 %v4537
    %v4628 = vunpack.c.h.b16 %v4537
    %v4629 = vunpack.c.l.b16 %v4538
    %v4630 = vunpack.c.h.b16 %v4538
    %v4631 = vunpack.c.l.b16 %v4539
    %v4632 = vunpack.c.h.b16 %v4539
    %v4633 = vunpack.c.l.b16 %v4540
    %v4634 = vunpack.c.h.b16 %v4540
    %v4635 = vunpack.c.l.b16 %v4541
    %v4636 = vunpack.c.h.b16 %v4541
    %v4637 = vunpack.c.l.b16 %v4542
    %v4638 = vunpack.c.h.b16 %v4542
    %v4639 = vpack.c.b16 %v4579, %v4575
    %v4640 = vpack.c.b16 %v4580, %v4576
    %v4641 = vpack.c.b16 %v4581, %v4577
    %v4642 = vpack.c.b16 %v4582, %v4578
    %v4643 = vpack.c.b16 %v4587, %v4583
    %v4644 = vpack.c.b16 %v4588, %v4584
    %v4645 = vpack.c.b16 %v4589, %v4585
    %v4646 = vpack.c.b16 %v4590, %v4586
    %v4647 = vpack.c.b16 %v4595, %v4591
    %v4648 = vpack.c.b16 %v4596, %v4592
    %v4649 = vpack.c.b16 %v4597, %v4593
    %v4650 = vpack.c.b16 %v4598, %v4594
    %v4651 = vpack.c.b16 %v4603, %v4599
    %v4652 = vpack.c.b16 %v4604, %v4600
    %v4653 = vpack.c.b16 %v4605, %v4601
    %v4654 = vpack.c.b16 %v4606, %v4602
    %v4655 = vpack.c.b16 %v4611, %v4607
    %v4656 = vpack.c.b16 %v4612, %v4608
    %v4657 = vpack.c.b16 %v4613, %v4609
    %v4658 = vpack.c.b16 %v4614, %v4610
    %v4659 = vpack.c.b16 %v4619, %v4615
    %v4660 = vpack.c.b16 %v4620, %v4616
    %v4661 = vpack.c.b16 %v4621, %v4617
    %v4662 = vpack.c.b16 %v4622, %v4618
    %v4663 = vpack.c.b16 %v4627, %v4623
    %v4664 = vpack.c.b16 %v4628, %v4624
    %v4665 = vpack.c.b16 %v4629, %v4625
    %v4666 = vpack.c.b16 %v4630, %v4626
    %v4667 = vpack.c.b16 %v4635, %v4631
    %v4668 = vpack.c.b16 %v4636, %v4632
    %v4669 = vpack.c.b16 %v4637, %v4633
    %v4670 = vpack.c.b16 %v4638, %v4634
    %4703 = vmatpush.bf16.msra.mxu0 %v4667
    %4704 = vmatpush.bf16.msra.mxu0 %v4663
    %4705 = vmatpush.bf16.msra.mxu0 %v4659
    %4706 = vmatpush.bf16.msra.mxu0 %v4655
    %4707 = vmatpush.bf16.msra.mxu0 %v4651
    %4708 = vmatpush.bf16.msra.mxu0 %v4647
    %4709 = vmatpush.bf16.msra.mxu0 %v4643
    %4710 = vmatpush.bf16.msra.mxu0 %v4639
    %4711 = vmatmul.bf16.gmra.mxu0 %v4510
    %v4712 = vpop.f32.mrf.mxu0
    %v4713 = vadd.f32 %v3943, %v4712
    %v4714 = vpop.f32.mrf.mxu0
    %4715 = vdwg.mxu0
    %4716 = vmatpush.bf16.msra.mxu0 %v4668
    %4717 = vmatpush.bf16.msra.mxu0 %v4664
    %4718 = vmatpush.bf16.msra.mxu0 %v4660
    %4719 = vmatpush.bf16.msra.mxu0 %v4656
    %4720 = vmatpush.bf16.msra.mxu0 %v4652
    %4721 = vmatpush.bf16.msra.mxu0 %v4648
    %4722 = vmatpush.bf16.msra.mxu0 %v4644
    %4723 = vmatpush.bf16.msra.mxu0 %v4640
    %4724 = vmatmul.bf16.gmra.mxu0 %v4510
    %v4725 = vpop.f32.mrf.mxu0
    %v4726 = vadd.f32 %v3956, %v4725
    %v4727 = vpop.f32.mrf.mxu0
    %4728 = vdwg.mxu0
    %4729 = vmatpush.bf16.msra.mxu0 %v4669
    %4730 = vmatpush.bf16.msra.mxu0 %v4665
    %4731 = vmatpush.bf16.msra.mxu0 %v4661
    %4732 = vmatpush.bf16.msra.mxu0 %v4657
    %4733 = vmatpush.bf16.msra.mxu0 %v4653
    %4734 = vmatpush.bf16.msra.mxu0 %v4649
    %4735 = vmatpush.bf16.msra.mxu0 %v4645
    %4736 = vmatpush.bf16.msra.mxu0 %v4641
    %4737 = vmatmul.bf16.gmra.mxu0 %v4510
    %v4738 = vpop.f32.mrf.mxu0
    %v4739 = vadd.f32 %v3969, %v4738
    %v4740 = vpop.f32.mrf.mxu0
    %4741 = vdwg.mxu0
    %4742 = vmatpush.bf16.msra.mxu0 %v4670
    %4743 = vmatpush.bf16.msra.mxu0 %v4666
    %4744 = vmatpush.bf16.msra.mxu0 %v4662
    %4745 = vmatpush.bf16.msra.mxu0 %v4658
    %4746 = vmatpush.bf16.msra.mxu0 %v4654
    %4747 = vmatpush.bf16.msra.mxu0 %v4650
    %4748 = vmatpush.bf16.msra.mxu0 %v4646
    %4749 = vmatpush.bf16.msra.mxu0 %v4642
    %4750 = vmatmul.bf16.gmra.mxu0 %v4510
    %v4751 = vpop.f32.mrf.mxu0
    %v4752 = vadd.f32 %v3982, %v4751
    %v4753 = vpop.f32.mrf.mxu0
    %4754 = vdwg.mxu0
    %v4755 = vmul.f32 %v4713, 0.5
    %v4756 = vmul.f32 %v4726, 0.5
    %v4757 = vmul.f32 %v4739, 0.5
    %v4758 = vtanh.pop %v4755
    %v4759 = vtanh.pop %v4756
    %v4760 = vtanh.pop %v4757
    %v4761 = vadd.f32 %v4758, 1.0
    %v4762 = vadd.f32 %v4759, 1.0
    %v4763 = vadd.f32 %v4760, 1.0
    %v4764 = vmul.f32 %v4761, 0.5
    %v4765 = vmul.f32 %v4762, 0.5
    %v4766 = vmul.f32 %v4763, 0.5
    %v4767 = vtanh.pop %v4752
    %v4768 = vmul.f32 %v4765, %v3217
    %v4769 = vmul.f32 %v4764, %v4767
    %v4770 = vadd.f32 %v4768, %v4769
    %v4771 = vtanh.pop %v4770
    %v4772 = vmul.f32 %v4766, %v4771
    %v4773 = vpack.c.bf16 %v4772, %v4772
    %s4774 = scalar_lea.vmem [#allocation11], 16
    %4775 = vst [vmem:[%s4774] sm:$0xff] %v4772
    %v4776 = vld [vmem:[#allocation8] sm:$0xff]
    %v4777 = vld [vmem:[#allocation8 + $0x8] sm:$0xff]
    %v4778 = vld [vmem:[#allocation8 + $0x10] sm:$0xff]
    %v4779 = vld [vmem:[#allocation8 + $0x18] sm:$0xff]
    %v4780 = vld [vmem:[#allocation8 + $0x20] sm:$0xff]
    %v4781 = vld [vmem:[#allocation8 + $0x28] sm:$0xff]
    %v4782 = vld [vmem:[#allocation8 + $0x30] sm:$0xff]
    %v4783 = vld [vmem:[#allocation8 + $0x38] sm:$0xff]
    %v4784 = vld [vmem:[#allocation8 + $0x40] sm:$0xff]
    %v4785 = vld [vmem:[#allocation8 + $0x48] sm:$0xff]
    %v4786 = vld [vmem:[#allocation8 + $0x50] sm:$0xff]
    %v4787 = vld [vmem:[#allocation8 + $0x58] sm:$0xff]
    %v4788 = vld [vmem:[#allocation8 + $0x60] sm:$0xff]
    %v4789 = vld [vmem:[#allocation8 + $0x68] sm:$0xff]
    %v4790 = vld [vmem:[#allocation8 + $0x70] sm:$0xff]
    %v4791 = vld [vmem:[#allocation8 + $0x78] sm:$0xff]
    %v4792 = vld [vmem:[#allocation8 + $0x80] sm:$0xff]
    %v4793 = vld [vmem:[#allocation8 + $0x88] sm:$0xff]
    %v4794 = vld [vmem:[#allocation8 + $0x90] sm:$0xff]
    %v4795 = vld [vmem:[#allocation8 + $0x98] sm:$0xff]
    %v4796 = vld [vmem:[#allocation8 + $0xa0] sm:$0xff]
    %v4797 = vld [vmem:[#allocation8 + $0xa8] sm:$0xff]
    %v4798 = vld [vmem:[#allocation8 + $0xb0] sm:$0xff]
    %v4799 = vld [vmem:[#allocation8 + $0xb8] sm:$0xff]
    %v4800 = vld [vmem:[#allocation8 + $0xc0] sm:$0xff]
    %v4801 = vld [vmem:[#allocation8 + $0xc8] sm:$0xff]
    %v4802 = vld [vmem:[#allocation8 + $0xd0] sm:$0xff]
    %v4803 = vld [vmem:[#allocation8 + $0xd8] sm:$0xff]
    %v4804 = vld [vmem:[#allocation8 + $0xe0] sm:$0xff]
    %v4805 = vld [vmem:[#allocation8 + $0xe8] sm:$0xff]
    %v4806 = vld [vmem:[#allocation8 + $0xf0] sm:$0xff]
    %v4807 = vld [vmem:[#allocation8 + $0xf8] sm:$0xff]
    %v4808 = vld [vmem:[#allocation10] sm:$0xf]
    %v4810 = vperm.slane %v4808, 0
    %v4811 = vperm.slane %v4808, 1
    %v4812 = vperm.slane %v4808, 2
    %v4813 = vperm.slane %v4808, 3
    %v4850 = vunpack.c.l.b16 %v4776
    %v4851 = vunpack.c.h.b16 %v4776
    %v4852 = vunpack.c.l.b16 %v4777
    %v4853 = vunpack.c.h.b16 %v4777
    %v4854 = vunpack.c.l.b16 %v4778
    %v4855 = vunpack.c.h.b16 %v4778
    %v4856 = vunpack.c.l.b16 %v4779
    %v4857 = vunpack.c.h.b16 %v4779
    %v4858 = vunpack.c.l.b16 %v4780
    %v4859 = vunpack.c.h.b16 %v4780
    %v4860 = vunpack.c.l.b16 %v4781
    %v4861 = vunpack.c.h.b16 %v4781
    %v4862 = vunpack.c.l.b16 %v4782
    %v4863 = vunpack.c.h.b16 %v4782
    %v4864 = vunpack.c.l.b16 %v4783
    %v4865 = vunpack.c.h.b16 %v4783
    %v4866 = vunpack.c.l.b16 %v4784
    %v4867 = vunpack.c.h.b16 %v4784
    %v4868 = vunpack.c.l.b16 %v4785
    %v4869 = vunpack.c.h.b16 %v4785
    %v4870 = vunpack.c.l.b16 %v4786
    %v4871 = vunpack.c.h.b16 %v4786
    %v4872 = vunpack.c.l.b16 %v4787
    %v4873 = vunpack.c.h.b16 %v4787
    %v4874 = vunpack.c.l.b16 %v4788
    %v4875 = vunpack.c.h.b16 %v4788
    %v4876 = vunpack.c.l.b16 %v4789
    %v4877 = vunpack.c.h.b16 %v4789
    %v4878 = vunpack.c.l.b16 %v4790
    %v4879 = vunpack.c.h.b16 %v4790
    %v4880 = vunpack.c.l.b16 %v4791
    %v4881 = vunpack.c.h.b16 %v4791
    %v4882 = vunpack.c.l.b16 %v4792
    %v4883 = vunpack.c.h.b16 %v4792
    %v4884 = vunpack.c.l.b16 %v4793
    %v4885 = vunpack.c.h.b16 %v4793
    %v4886 = vunpack.c.l.b16 %v4794
    %v4887 = vunpack.c.h.b16 %v4794
    %v4888 = vunpack.c.l.b16 %v4795
    %v4889 = vunpack.c.h.b16 %v4795
    %v4890 = vunpack.c.l.b16 %v4796
    %v4891 = vunpack.c.h.b16 %v4796
    %v4892 = vunpack.c.l.b16 %v4797
    %v4893 = vunpack.c.h.b16 %v4797
    %v4894 = vunpack.c.l.b16 %v4798
    %v4895 = vunpack.c.h.b16 %v4798
    %v4896 = vunpack.c.l.b16 %v4799
    %v4897 = vunpack.c.h.b16 %v4799
    %v4898 = vunpack.c.l.b16 %v4800
    %v4899 = vunpack.c.h.b16 %v4800
    %v4900 = vunpack.c.l.b16 %v4801
    %v4901 = vunpack.c.h.b16 %v4801
    %v4902 = vunpack.c.l.b16 %v4802
    %v4903 = vunpack.c.h.b16 %v4802
    %v4904 = vunpack.c.l.b16 %v4803
    %v4905 = vunpack.c.h.b16 %v4803
    %v4906 = vunpack.c.l.b16 %v4804
    %v4907 = vunpack.c.h.b16 %v4804
    %v4908 = vunpack.c.l.b16 %v4805
    %v4909 = vunpack.c.h.b16 %v4805
    %v4910 = vunpack.c.l.b16 %v4806
    %v4911 = vunpack.c.h.b16 %v4806
    %v4912 = vunpack.c.l.b16 %v4807
    %v4913 = vunpack.c.h.b16 %v4807
    %v4914 = vpack.c.b16 %v4854, %v4850
    %v4915 = vpack.c.b16 %v4855, %v4851
    %v4916 = vpack.c.b16 %v4856, %v4852
    %v4917 = vpack.c.b16 %v4857, %v4853
    %v4918 = vpack.c.b16 %v4862, %v4858
    %v4919 = vpack.c.b16 %v4863, %v4859
    %v4920 = vpack.c.b16 %v4864, %v4860
    %v4921 = vpack.c.b16 %v4865, %v4861
    %v4922 = vpack.c.b16 %v4870, %v4866
    %v4923 = vpack.c.b16 %v4871, %v4867
    %v4924 = vpack.c.b16 %v4872, %v4868
    %v4925 = vpack.c.b16 %v4873, %v4869
    %v4926 = vpack.c.b16 %v4878, %v4874
    %v4927 = vpack.c.b16 %v4879, %v4875
    %v4928 = vpack.c.b16 %v4880, %v4876
    %v4929 = vpack.c.b16 %v4881, %v4877
    %v4930 = vpack.c.b16 %v4886, %v4882
    %v4931 = vpack.c.b16 %v4887, %v4883
    %v4932 = vpack.c.b16 %v4888, %v4884
    %v4933 = vpack.c.b16 %v4889, %v4885
    %v4934 = vpack.c.b16 %v4894, %v4890
    %v4935 = vpack.c.b16 %v4895, %v4891
    %v4936 = vpack.c.b16 %v4896, %v4892
    %v4937 = vpack.c.b16 %v4897, %v4893
    %v4938 = vpack.c.b16 %v4902, %v4898
    %v4939 = vpack.c.b16 %v4903, %v4899
    %v4940 = vpack.c.b16 %v4904, %v4900
    %v4941 = vpack.c.b16 %v4905, %v4901
    %v4942 = vpack.c.b16 %v4910, %v4906
    %v4943 = vpack.c.b16 %v4911, %v4907
    %v4944 = vpack.c.b16 %v4912, %v4908
    %v4945 = vpack.c.b16 %v4913, %v4909
    %4978 = vmatpush.bf16.msra.mxu0 %v4942
    %4979 = vmatpush.bf16.msra.mxu0 %v4938
    %4980 = vmatpush.bf16.msra.mxu0 %v4934
    %4981 = vmatpush.bf16.msra.mxu0 %v4930
    %4982 = vmatpush.bf16.msra.mxu0 %v4926
    %4983 = vmatpush.bf16.msra.mxu0 %v4922
    %4984 = vmatpush.bf16.msra.mxu0 %v4918
    %4985 = vmatpush.bf16.msra.mxu0 %v4914
    %4986 = vmatmul.bf16.gmra.mxu0 %v4247
    %v4987 = vpop.f32.mrf.mxu0
    %v4988 = vadd.f32 %v4810, %v4987
    %v4989 = vpop.f32.mrf.mxu0
    %4990 = vdwg.mxu0
    %4991 = vmatpush.bf16.msra.mxu0 %v4943
    %4992 = vmatpush.bf16.msra.mxu0 %v4939
    %4993 = vmatpush.bf16.msra.mxu0 %v4935
    %4994 = vmatpush.bf16.msra.mxu0 %v4931
    %4995 = vmatpush.bf16.msra.mxu0 %v4927
    %4996 = vmatpush.bf16.msra.mxu0 %v4923
    %4997 = vmatpush.bf16.msra.mxu0 %v4919
    %4998 = vmatpush.bf16.msra.mxu0 %v4915
    %4999 = vmatmul.bf16.gmra.mxu0 %v4247
    %v5000 = vpop.f32.mrf.mxu0
    %v5001 = vadd.f32 %v4811, %v5000
    %v5002 = vpop.f32.mrf.mxu0
    %5003 = vdwg.mxu0
    %5004 = vmatpush.bf16.msra.mxu0 %v4944
    %5005 = vmatpush.bf16.msra.mxu0 %v4940
    %5006 = vmatpush.bf16.msra.mxu0 %v4936
    %5007 = vmatpush.bf16.msra.mxu0 %v4932
    %5008 = vmatpush.bf16.msra.mxu0 %v4928
    %5009 = vmatpush.bf16.msra.mxu0 %v4924
    %5010 = vmatpush.bf16.msra.mxu0 %v4920
    %5011 = vmatpush.bf16.msra.mxu0 %v4916
    %5012 = vmatmul.bf16.gmra.mxu0 %v4247
    %v5013 = vpop.f32.mrf.mxu0
    %v5014 = vadd.f32 %v4812, %v5013
    %v5015 = vpop.f32.mrf.mxu0
    %5016 = vdwg.mxu0
    %5017 = vmatpush.bf16.msra.mxu0 %v4945
    %5018 = vmatpush.bf16.msra.mxu0 %v4941
    %5019 = vmatpush.bf16.msra.mxu0 %v4937
    %5020 = vmatpush.bf16.msra.mxu0 %v4933
    %5021 = vmatpush.bf16.msra.mxu0 %v4929
    %5022 = vmatpush.bf16.msra.mxu0 %v4925
    %5023 = vmatpush.bf16.msra.mxu0 %v4921
    %5024 = vmatpush.bf16.msra.mxu0 %v4917
    %5025 = vmatmul.bf16.gmra.mxu0 %v4247
    %v5026 = vpop.f32.mrf.mxu0
    %v5027 = vadd.f32 %v4813, %v5026
    %v5028 = vpop.f32.mrf.mxu0
    %5029 = vdwg.mxu0
    %v5030 = vld [vmem:[%s366] sm:$0xff]
    %v5031 = vld [vmem:[%s366 + $0x8] sm:$0xff]
    %v5032 = vld [vmem:[%s366 + $0x10] sm:$0xff]
    %v5033 = vld [vmem:[%s366 + $0x18] sm:$0xff]
    %v5034 = vld [vmem:[%s366 + $0x20] sm:$0xff]
    %v5035 = vld [vmem:[%s366 + $0x28] sm:$0xff]
    %v5036 = vld [vmem:[%s366 + $0x30] sm:$0xff]
    %v5037 = vld [vmem:[%s366 + $0x38] sm:$0xff]
    %v5038 = vld [vmem:[%s366 + $0x40] sm:$0xff]
    %v5039 = vld [vmem:[%s366 + $0x48] sm:$0xff]
    %v5040 = vld [vmem:[%s366 + $0x50] sm:$0xff]
    %v5041 = vld [vmem:[%s366 + $0x58] sm:$0xff]
    %v5042 = vld [vmem:[%s366 + $0x60] sm:$0xff]
    %v5043 = vld [vmem:[%s366 + $0x68] sm:$0xff]
    %v5044 = vld [vmem:[%s366 + $0x70] sm:$0xff]
    %v5045 = vld [vmem:[%s366 + $0x78] sm:$0xff]
    %v5046 = vld [vmem:[%s366 + $0x80] sm:$0xff]
    %v5047 = vld [vmem:[%s366 + $0x88] sm:$0xff]
    %v5048 = vld [vmem:[%s366 + $0x90] sm:$0xff]
    %v5049 = vld [vmem:[%s366 + $0x98] sm:$0xff]
    %v5050 = vld [vmem:[%s366 + $0xa0] sm:$0xff]
    %v5051 = vld [vmem:[%s366 + $0xa8] sm:$0xff]
    %v5052 = vld [vmem:[%s366 + $0xb0] sm:$0xff]
    %v5053 = vld [vmem:[%s366 + $0xb8] sm:$0xff]
    %v5054 = vld [vmem:[%s366 + $0xc0] sm:$0xff]
    %v5055 = vld [vmem:[%s366 + $0xc8] sm:$0xff]
    %v5056 = vld [vmem:[%s366 + $0xd0] sm:$0xff]
    %v5057 = vld [vmem:[%s366 + $0xd8] sm:$0xff]
    %v5058 = vld [vmem:[%s366 + $0xe0] sm:$0xff]
    %v5059 = vld [vmem:[%s366 + $0xe8] sm:$0xff]
    %v5060 = vld [vmem:[%s366 + $0xf0] sm:$0xff]
    %v5061 = vld [vmem:[%s366 + $0xf8] sm:$0xff]
    %v5062 = vld [vmem:[%s399] sm:$0xf]
    %v5064 = vperm.slane %v5062, 0
    %v5065 = vperm.slane %v5062, 1
    %v5066 = vperm.slane %v5062, 2
    %v5067 = vperm.slane %v5062, 3
    %v5104 = vunpack.c.l.b16 %v5030
    %v5105 = vunpack.c.h.b16 %v5030
    %v5106 = vunpack.c.l.b16 %v5031
    %v5107 = vunpack.c.h.b16 %v5031
    %v5108 = vunpack.c.l.b16 %v5032
    %v5109 = vunpack.c.h.b16 %v5032
    %v5110 = vunpack.c.l.b16 %v5033
    %v5111 = vunpack.c.h.b16 %v5033
    %v5112 = vunpack.c.l.b16 %v5034
    %v5113 = vunpack.c.h.b16 %v5034
    %v5114 = vunpack.c.l.b16 %v5035
    %v5115 = vunpack.c.h.b16 %v5035
    %v5116 = vunpack.c.l.b16 %v5036
    %v5117 = vunpack.c.h.b16 %v5036
    %v5118 = vunpack.c.l.b16 %v5037
    %v5119 = vunpack.c.h.b16 %v5037
    %v5120 = vunpack.c.l.b16 %v5038
    %v5121 = vunpack.c.h.b16 %v5038
    %v5122 = vunpack.c.l.b16 %v5039
    %v5123 = vunpack.c.h.b16 %v5039
    %v5124 = vunpack.c.l.b16 %v5040
    %v5125 = vunpack.c.h.b16 %v5040
    %v5126 = vunpack.c.l.b16 %v5041
    %v5127 = vunpack.c.h.b16 %v5041
    %v5128 = vunpack.c.l.b16 %v5042
    %v5129 = vunpack.c.h.b16 %v5042
    %v5130 = vunpack.c.l.b16 %v5043
    %v5131 = vunpack.c.h.b16 %v5043
    %v5132 = vunpack.c.l.b16 %v5044
    %v5133 = vunpack.c.h.b16 %v5044
    %v5134 = vunpack.c.l.b16 %v5045
    %v5135 = vunpack.c.h.b16 %v5045
    %v5136 = vunpack.c.l.b16 %v5046
    %v5137 = vunpack.c.h.b16 %v5046
    %v5138 = vunpack.c.l.b16 %v5047
    %v5139 = vunpack.c.h.b16 %v5047
    %v5140 = vunpack.c.l.b16 %v5048
    %v5141 = vunpack.c.h.b16 %v5048
    %v5142 = vunpack.c.l.b16 %v5049
    %v5143 = vunpack.c.h.b16 %v5049
    %v5144 = vunpack.c.l.b16 %v5050
    %v5145 = vunpack.c.h.b16 %v5050
    %v5146 = vunpack.c.l.b16 %v5051
    %v5147 = vunpack.c.h.b16 %v5051
    %v5148 = vunpack.c.l.b16 %v5052
    %v5149 = vunpack.c.h.b16 %v5052
    %v5150 = vunpack.c.l.b16 %v5053
    %v5151 = vunpack.c.h.b16 %v5053
    %v5152 = vunpack.c.l.b16 %v5054
    %v5153 = vunpack.c.h.b16 %v5054
    %v5154 = vunpack.c.l.b16 %v5055
    %v5155 = vunpack.c.h.b16 %v5055
    %v5156 = vunpack.c.l.b16 %v5056
    %v5157 = vunpack.c.h.b16 %v5056
    %v5158 = vunpack.c.l.b16 %v5057
    %v5159 = vunpack.c.h.b16 %v5057
    %v5160 = vunpack.c.l.b16 %v5058
    %v5161 = vunpack.c.h.b16 %v5058
    %v5162 = vunpack.c.l.b16 %v5059
    %v5163 = vunpack.c.h.b16 %v5059
    %v5164 = vunpack.c.l.b16 %v5060
    %v5165 = vunpack.c.h.b16 %v5060
    %v5166 = vunpack.c.l.b16 %v5061
    %v5167 = vunpack.c.h.b16 %v5061
    %v5168 = vpack.c.b16 %v5108, %v5104
    %v5169 = vpack.c.b16 %v5109, %v5105
    %v5170 = vpack.c.b16 %v5110, %v5106
    %v5171 = vpack.c.b16 %v5111, %v5107
    %v5172 = vpack.c.b16 %v5116, %v5112
    %v5173 = vpack.c.b16 %v5117, %v5113
    %v5174 = vpack.c.b16 %v5118, %v5114
    %v5175 = vpack.c.b16 %v5119, %v5115
    %v5176 = vpack.c.b16 %v5124, %v5120
    %v5177 = vpack.c.b16 %v5125, %v5121
    %v5178 = vpack.c.b16 %v5126, %v5122
    %v5179 = vpack.c.b16 %v5127, %v5123
    %v5180 = vpack.c.b16 %v5132, %v5128
    %v5181 = vpack.c.b16 %v5133, %v5129
    %v5182 = vpack.c.b16 %v5134, %v5130
    %v5183 = vpack.c.b16 %v5135, %v5131
    %v5184 = vpack.c.b16 %v5140, %v5136
    %v5185 = vpack.c.b16 %v5141, %v5137
    %v5186 = vpack.c.b16 %v5142, %v5138
    %v5187 = vpack.c.b16 %v5143, %v5139
    %v5188 = vpack.c.b16 %v5148, %v5144
    %v5189 = vpack.c.b16 %v5149, %v5145
    %v5190 = vpack.c.b16 %v5150, %v5146
    %v5191 = vpack.c.b16 %v5151, %v5147
    %v5192 = vpack.c.b16 %v5156, %v5152
    %v5193 = vpack.c.b16 %v5157, %v5153
    %v5194 = vpack.c.b16 %v5158, %v5154
    %v5195 = vpack.c.b16 %v5159, %v5155
    %v5196 = vpack.c.b16 %v5164, %v5160
    %v5197 = vpack.c.b16 %v5165, %v5161
    %v5198 = vpack.c.b16 %v5166, %v5162
    %v5199 = vpack.c.b16 %v5167, %v5163
    %5232 = vmatpush.bf16.msra.mxu0 %v5196
    %5233 = vmatpush.bf16.msra.mxu0 %v5192
    %5234 = vmatpush.bf16.msra.mxu0 %v5188
    %5235 = vmatpush.bf16.msra.mxu0 %v5184
    %5236 = vmatpush.bf16.msra.mxu0 %v5180
    %5237 = vmatpush.bf16.msra.mxu0 %v5176
    %5238 = vmatpush.bf16.msra.mxu0 %v5172
    %5239 = vmatpush.bf16.msra.mxu0 %v5168
    %5240 = vmatmul.bf16.gmra.mxu0 %v4510
    %v5241 = vpop.f32.mrf.mxu0
    %v5242 = vadd.f32 %v5064, %v5241
    %v5243 = vpop.f32.mrf.mxu0
    %5244 = vdwg.mxu0
    %5245 = vmatpush.bf16.msra.mxu0 %v5197
    %5246 = vmatpush.bf16.msra.mxu0 %v5193
    %5247 = vmatpush.bf16.msra.mxu0 %v5189
    %5248 = vmatpush.bf16.msra.mxu0 %v5185
    %5249 = vmatpush.bf16.msra.mxu0 %v5181
    %5250 = vmatpush.bf16.msra.mxu0 %v5177
    %5251 = vmatpush.bf16.msra.mxu0 %v5173
    %5252 = vmatpush.bf16.msra.mxu0 %v5169
    %5253 = vmatmul.bf16.gmra.mxu0 %v4510
    %v5254 = vpop.f32.mrf.mxu0
    %v5255 = vadd.f32 %v5065, %v5254
    %v5256 = vpop.f32.mrf.mxu0
    %5257 = vdwg.mxu0
    %5258 = vmatpush.bf16.msra.mxu0 %v5198
    %5259 = vmatpush.bf16.msra.mxu0 %v5194
    %5260 = vmatpush.bf16.msra.mxu0 %v5190
    %5261 = vmatpush.bf16.msra.mxu0 %v5186
    %5262 = vmatpush.bf16.msra.mxu0 %v5182
    %5263 = vmatpush.bf16.msra.mxu0 %v5178
    %5264 = vmatpush.bf16.msra.mxu0 %v5174
    %5265 = vmatpush.bf16.msra.mxu0 %v5170
    %5266 = vmatmul.bf16.gmra.mxu0 %v4510
    %v5267 = vpop.f32.mrf.mxu0
    %v5268 = vadd.f32 %v5066, %v5267
    %v5269 = vpop.f32.mrf.mxu0
    %5270 = vdwg.mxu0
    %5271 = vmatpush.bf16.msra.mxu0 %v5199
    %5272 = vmatpush.bf16.msra.mxu0 %v5195
    %5273 = vmatpush.bf16.msra.mxu0 %v5191
    %5274 = vmatpush.bf16.msra.mxu0 %v5187
    %5275 = vmatpush.bf16.msra.mxu0 %v5183
    %5276 = vmatpush.bf16.msra.mxu0 %v5179
    %5277 = vmatpush.bf16.msra.mxu0 %v5175
    %5278 = vmatpush.bf16.msra.mxu0 %v5171
    %5279 = vmatmul.bf16.gmra.mxu0 %v4510
    %v5280 = vpop.f32.mrf.mxu0
    %v5281 = vadd.f32 %v5067, %v5280
    %v5282 = vpop.f32.mrf.mxu0
    %5283 = vdwg.mxu0
    %v5284 = vld [vmem:[%s622] sm:$0xff]
    %v5285 = vld [vmem:[%s622 + $0x8] sm:$0xff]
    %v5286 = vld [vmem:[%s622 + $0x10] sm:$0xff]
    %v5287 = vld [vmem:[%s622 + $0x18] sm:$0xff]
    %v5288 = vld [vmem:[%s622 + $0x20] sm:$0xff]
    %v5289 = vld [vmem:[%s622 + $0x28] sm:$0xff]
    %v5290 = vld [vmem:[%s622 + $0x30] sm:$0xff]
    %v5291 = vld [vmem:[%s622 + $0x38] sm:$0xff]
    %v5292 = vld [vmem:[%s622 + $0x40] sm:$0xff]
    %v5293 = vld [vmem:[%s622 + $0x48] sm:$0xff]
    %v5294 = vld [vmem:[%s622 + $0x50] sm:$0xff]
    %v5295 = vld [vmem:[%s622 + $0x58] sm:$0xff]
    %v5296 = vld [vmem:[%s622 + $0x60] sm:$0xff]
    %v5297 = vld [vmem:[%s622 + $0x68] sm:$0xff]
    %v5298 = vld [vmem:[%s622 + $0x70] sm:$0xff]
    %v5299 = vld [vmem:[%s622 + $0x78] sm:$0xff]
    %v5300 = vld [vmem:[%s622 + $0x80] sm:$0xff]
    %v5301 = vld [vmem:[%s622 + $0x88] sm:$0xff]
    %v5302 = vld [vmem:[%s622 + $0x90] sm:$0xff]
    %v5303 = vld [vmem:[%s622 + $0x98] sm:$0xff]
    %v5304 = vld [vmem:[%s622 + $0xa0] sm:$0xff]
    %v5305 = vld [vmem:[%s622 + $0xa8] sm:$0xff]
    %v5306 = vld [vmem:[%s622 + $0xb0] sm:$0xff]
    %v5307 = vld [vmem:[%s622 + $0xb8] sm:$0xff]
    %v5308 = vld [vmem:[%s622 + $0xc0] sm:$0xff]
    %v5309 = vld [vmem:[%s622 + $0xc8] sm:$0xff]
    %v5310 = vld [vmem:[%s622 + $0xd0] sm:$0xff]
    %v5311 = vld [vmem:[%s622 + $0xd8] sm:$0xff]
    %v5312 = vld [vmem:[%s622 + $0xe0] sm:$0xff]
    %v5313 = vld [vmem:[%s622 + $0xe8] sm:$0xff]
    %v5314 = vld [vmem:[%s622 + $0xf0] sm:$0xff]
    %v5315 = vld [vmem:[%s622 + $0xf8] sm:$0xff]
    %v5316 = vld [vmem:[%s655] sm:$0xf]
    %v5318 = vperm.slane %v5316, 0
    %v5319 = vperm.slane %v5316, 1
    %v5320 = vperm.slane %v5316, 2
    %v5321 = vperm.slane %v5316, 3
    %v5358 = vunpack.c.l.b16 %v5284
    %v5359 = vunpack.c.h.b16 %v5284
    %v5360 = vunpack.c.l.b16 %v5285
    %v5361 = vunpack.c.h.b16 %v5285
    %v5362 = vunpack.c.l.b16 %v5286
    %v5363 = vunpack.c.h.b16 %v5286
    %v5364 = vunpack.c.l.b16 %v5287
    %v5365 = vunpack.c.h.b16 %v5287
    %v5366 = vunpack.c.l.b16 %v5288
    %v5367 = vunpack.c.h.b16 %v5288
    %v5368 = vunpack.c.l.b16 %v5289
    %v5369 = vunpack.c.h.b16 %v5289
    %v5370 = vunpack.c.l.b16 %v5290
    %v5371 = vunpack.c.h.b16 %v5290
    %v5372 = vunpack.c.l.b16 %v5291
    %v5373 = vunpack.c.h.b16 %v5291
    %v5374 = vunpack.c.l.b16 %v5292
    %v5375 = vunpack.c.h.b16 %v5292
    %v5376 = vunpack.c.l.b16 %v5293
    %v5377 = vunpack.c.h.b16 %v5293
    %v5378 = vunpack.c.l.b16 %v5294
    %v5379 = vunpack.c.h.b16 %v5294
    %v5380 = vunpack.c.l.b16 %v5295
    %v5381 = vunpack.c.h.b16 %v5295
    %v5382 = vunpack.c.l.b16 %v5296
    %v5383 = vunpack.c.h.b16 %v5296
    %v5384 = vunpack.c.l.b16 %v5297
    %v5385 = vunpack.c.h.b16 %v5297
    %v5386 = vunpack.c.l.b16 %v5298
    %v5387 = vunpack.c.h.b16 %v5298
    %v5388 = vunpack.c.l.b16 %v5299
    %v5389 = vunpack.c.h.b16 %v5299
    %v5390 = vunpack.c.l.b16 %v5300
    %v5391 = vunpack.c.h.b16 %v5300
    %v5392 = vunpack.c.l.b16 %v5301
    %v5393 = vunpack.c.h.b16 %v5301
    %v5394 = vunpack.c.l.b16 %v5302
    %v5395 = vunpack.c.h.b16 %v5302
    %v5396 = vunpack.c.l.b16 %v5303
    %v5397 = vunpack.c.h.b16 %v5303
    %v5398 = vunpack.c.l.b16 %v5304
    %v5399 = vunpack.c.h.b16 %v5304
    %v5400 = vunpack.c.l.b16 %v5305
    %v5401 = vunpack.c.h.b16 %v5305
    %v5402 = vunpack.c.l.b16 %v5306
    %v5403 = vunpack.c.h.b16 %v5306
    %v5404 = vunpack.c.l.b16 %v5307
    %v5405 = vunpack.c.h.b16 %v5307
    %v5406 = vunpack.c.l.b16 %v5308
    %v5407 = vunpack.c.h.b16 %v5308
    %v5408 = vunpack.c.l.b16 %v5309
    %v5409 = vunpack.c.h.b16 %v5309
    %v5410 = vunpack.c.l.b16 %v5310
    %v5411 = vunpack.c.h.b16 %v5310
    %v5412 = vunpack.c.l.b16 %v5311
    %v5413 = vunpack.c.h.b16 %v5311
    %v5414 = vunpack.c.l.b16 %v5312
    %v5415 = vunpack.c.h.b16 %v5312
    %v5416 = vunpack.c.l.b16 %v5313
    %v5417 = vunpack.c.h.b16 %v5313
    %v5418 = vunpack.c.l.b16 %v5314
    %v5419 = vunpack.c.h.b16 %v5314
    %v5420 = vunpack.c.l.b16 %v5315
    %v5421 = vunpack.c.h.b16 %v5315
    %v5422 = vpack.c.b16 %v5362, %v5358
    %v5423 = vpack.c.b16 %v5363, %v5359
    %v5424 = vpack.c.b16 %v5364, %v5360
    %v5425 = vpack.c.b16 %v5365, %v5361
    %v5426 = vpack.c.b16 %v5370, %v5366
    %v5427 = vpack.c.b16 %v5371, %v5367
    %v5428 = vpack.c.b16 %v5372, %v5368
    %v5429 = vpack.c.b16 %v5373, %v5369
    %v5430 = vpack.c.b16 %v5378, %v5374
    %v5431 = vpack.c.b16 %v5379, %v5375
    %v5432 = vpack.c.b16 %v5380, %v5376
    %v5433 = vpack.c.b16 %v5381, %v5377
    %v5434 = vpack.c.b16 %v5386, %v5382
    %v5435 = vpack.c.b16 %v5387, %v5383
    %v5436 = vpack.c.b16 %v5388, %v5384
    %v5437 = vpack.c.b16 %v5389, %v5385
    %v5438 = vpack.c.b16 %v5394, %v5390
    %v5439 = vpack.c.b16 %v5395, %v5391
    %v5440 = vpack.c.b16 %v5396, %v5392
    %v5441 = vpack.c.b16 %v5397, %v5393
    %v5442 = vpack.c.b16 %v5402, %v5398
    %v5443 = vpack.c.b16 %v5403, %v5399
    %v5444 = vpack.c.b16 %v5404, %v5400
    %v5445 = vpack.c.b16 %v5405, %v5401
    %v5446 = vpack.c.b16 %v5410, %v5406
    %v5447 = vpack.c.b16 %v5411, %v5407
    %v5448 = vpack.c.b16 %v5412, %v5408
    %v5449 = vpack.c.b16 %v5413, %v5409
    %v5450 = vpack.c.b16 %v5418, %v5414
    %v5451 = vpack.c.b16 %v5419, %v5415
    %v5452 = vpack.c.b16 %v5420, %v5416
    %v5453 = vpack.c.b16 %v5421, %v5417
    %5486 = vmatpush.bf16.msra.mxu0 %v5450
    %5487 = vmatpush.bf16.msra.mxu0 %v5446
    %5488 = vmatpush.bf16.msra.mxu0 %v5442
    %5489 = vmatpush.bf16.msra.mxu0 %v5438
    %5490 = vmatpush.bf16.msra.mxu0 %v5434
    %5491 = vmatpush.bf16.msra.mxu0 %v5430
    %5492 = vmatpush.bf16.msra.mxu0 %v5426
    %5493 = vmatpush.bf16.msra.mxu0 %v5422
    %5494 = vmatmul.bf16.gmra.mxu0 %v4773
    %v5495 = vpop.f32.mrf.mxu0
    %v5496 = vadd.f32 %v5318, %v5495
    %v5497 = vpop.f32.mrf.mxu0
    %5498 = vdwg.mxu0
    %5499 = vmatpush.bf16.msra.mxu0 %v5451
    %5500 = vmatpush.bf16.msra.mxu0 %v5447
    %5501 = vmatpush.bf16.msra.mxu0 %v5443
    %5502 = vmatpush.bf16.msra.mxu0 %v5439
    %5503 = vmatpush.bf16.msra.mxu0 %v5435
    %5504 = vmatpush.bf16.msra.mxu0 %v5431
    %5505 = vmatpush.bf16.msra.mxu0 %v5427
    %5506 = vmatpush.bf16.msra.mxu0 %v5423
    %5507 = vmatmul.bf16.gmra.mxu0 %v4773
    %v5508 = vpop.f32.mrf.mxu0
    %v5509 = vadd.f32 %v5319, %v5508
    %v5510 = vpop.f32.mrf.mxu0
    %5511 = vdwg.mxu0
    %5512 = vmatpush.bf16.msra.mxu0 %v5452
    %5513 = vmatpush.bf16.msra.mxu0 %v5448
    %5514 = vmatpush.bf16.msra.mxu0 %v5444
    %5515 = vmatpush.bf16.msra.mxu0 %v5440
    %5516 = vmatpush.bf16.msra.mxu0 %v5436
    %5517 = vmatpush.bf16.msra.mxu0 %v5432
    %5518 = vmatpush.bf16.msra.mxu0 %v5428
    %5519 = vmatpush.bf16.msra.mxu0 %v5424
    %5520 = vmatmul.bf16.gmra.mxu0 %v4773
    %v5521 = vpop.f32.mrf.mxu0
    %v5522 = vadd.f32 %v5320, %v5521
    %v5523 = vpop.f32.mrf.mxu0
    %5524 = vdwg.mxu0
    %5525 = vmatpush.bf16.msra.mxu0 %v5453
    %5526 = vmatpush.bf16.msra.mxu0 %v5449
    %5527 = vmatpush.bf16.msra.mxu0 %v5445
    %5528 = vmatpush.bf16.msra.mxu0 %v5441
    %5529 = vmatpush.bf16.msra.mxu0 %v5437
    %5530 = vmatpush.bf16.msra.mxu0 %v5433
    %5531 = vmatpush.bf16.msra.mxu0 %v5429
    %5532 = vmatpush.bf16.msra.mxu0 %v5425
    %5533 = vmatmul.bf16.gmra.mxu0 %v4773
    %v5534 = vpop.f32.mrf.mxu0
    %v5535 = vadd.f32 %v5321, %v5534
    %v5536 = vpop.f32.mrf.mxu0
    %5537 = vdwg.mxu0
    %v5538 = vld [vmem:[#allocation7] sm:$0xff]
    %v5539 = vld [vmem:[#allocation7 + $0x8] sm:$0xff]
    %v5540 = vld [vmem:[#allocation7 + $0x10] sm:$0xff]
    %v5541 = vld [vmem:[#allocation7 + $0x18] sm:$0xff]
    %v5542 = vld [vmem:[#allocation7 + $0x20] sm:$0xff]
    %v5543 = vld [vmem:[#allocation7 + $0x28] sm:$0xff]
    %v5544 = vld [vmem:[#allocation7 + $0x30] sm:$0xff]
    %v5545 = vld [vmem:[#allocation7 + $0x38] sm:$0xff]
    %v5546 = vld [vmem:[#allocation7 + $0x40] sm:$0xff]
    %v5547 = vld [vmem:[#allocation7 + $0x48] sm:$0xff]
    %v5548 = vld [vmem:[#allocation7 + $0x50] sm:$0xff]
    %v5549 = vld [vmem:[#allocation7 + $0x58] sm:$0xff]
    %v5550 = vld [vmem:[#allocation7 + $0x60] sm:$0xff]
    %v5551 = vld [vmem:[#allocation7 + $0x68] sm:$0xff]
    %v5552 = vld [vmem:[#allocation7 + $0x70] sm:$0xff]
    %v5553 = vld [vmem:[#allocation7 + $0x78] sm:$0xff]
    %v5554 = vld [vmem:[#allocation7 + $0x80] sm:$0xff]
    %v5555 = vld [vmem:[#allocation7 + $0x88] sm:$0xff]
    %v5556 = vld [vmem:[#allocation7 + $0x90] sm:$0xff]
    %v5557 = vld [vmem:[#allocation7 + $0x98] sm:$0xff]
    %v5558 = vld [vmem:[#allocation7 + $0xa0] sm:$0xff]
    %v5559 = vld [vmem:[#allocation7 + $0xa8] sm:$0xff]
    %v5560 = vld [vmem:[#allocation7 + $0xb0] sm:$0xff]
    %v5561 = vld [vmem:[#allocation7 + $0xb8] sm:$0xff]
    %v5562 = vld [vmem:[#allocation7 + $0xc0] sm:$0xff]
    %v5563 = vld [vmem:[#allocation7 + $0xc8] sm:$0xff]
    %v5564 = vld [vmem:[#allocation7 + $0xd0] sm:$0xff]
    %v5565 = vld [vmem:[#allocation7 + $0xd8] sm:$0xff]
    %v5566 = vld [vmem:[#allocation7 + $0xe0] sm:$0xff]
    %v5567 = vld [vmem:[#allocation7 + $0xe8] sm:$0xff]
    %v5568 = vld [vmem:[#allocation7 + $0xf0] sm:$0xff]
    %v5569 = vld [vmem:[#allocation7 + $0xf8] sm:$0xff]
    %v5602 = vunpack.c.l.b16 %v5538
    %v5603 = vunpack.c.h.b16 %v5538
    %v5604 = vunpack.c.l.b16 %v5539
    %v5605 = vunpack.c.h.b16 %v5539
    %v5606 = vunpack.c.l.b16 %v5540
    %v5607 = vunpack.c.h.b16 %v5540
    %v5608 = vunpack.c.l.b16 %v5541
    %v5609 = vunpack.c.h.b16 %v5541
    %v5610 = vunpack.c.l.b16 %v5542
    %v5611 = vunpack.c.h.b16 %v5542
    %v5612 = vunpack.c.l.b16 %v5543
    %v5613 = vunpack.c.h.b16 %v5543
    %v5614 = vunpack.c.l.b16 %v5544
    %v5615 = vunpack.c.h.b16 %v5544
    %v5616 = vunpack.c.l.b16 %v5545
    %v5617 = vunpack.c.h.b16 %v5545
    %v5618 = vunpack.c.l.b16 %v5546
    %v5619 = vunpack.c.h.b16 %v5546
    %v5620 = vunpack.c.l.b16 %v5547
    %v5621 = vunpack.c.h.b16 %v5547
    %v5622 = vunpack.c.l.b16 %v5548
    %v5623 = vunpack.c.h.b16 %v5548
    %v5624 = vunpack.c.l.b16 %v5549
    %v5625 = vunpack.c.h.b16 %v5549
    %v5626 = vunpack.c.l.b16 %v5550
    %v5627 = vunpack.c.h.b16 %v5550
    %v5628 = vunpack.c.l.b16 %v5551
    %v5629 = vunpack.c.h.b16 %v5551
    %v5630 = vunpack.c.l.b16 %v5552
    %v5631 = vunpack.c.h.b16 %v5552
    %v5632 = vunpack.c.l.b16 %v5553
    %v5633 = vunpack.c.h.b16 %v5553
    %v5634 = vunpack.c.l.b16 %v5554
    %v5635 = vunpack.c.h.b16 %v5554
    %v5636 = vunpack.c.l.b16 %v5555
    %v5637 = vunpack.c.h.b16 %v5555
    %v5638 = vunpack.c.l.b16 %v5556
    %v5639 = vunpack.c.h.b16 %v5556
    %v5640 = vunpack.c.l.b16 %v5557
    %v5641 = vunpack.c.h.b16 %v5557
    %v5642 = vunpack.c.l.b16 %v5558
    %v5643 = vunpack.c.h.b16 %v5558
    %v5644 = vunpack.c.l.b16 %v5559
    %v5645 = vunpack.c.h.b16 %v5559
    %v5646 = vunpack.c.l.b16 %v5560
    %v5647 = vunpack.c.h.b16 %v5560
    %v5648 = vunpack.c.l.b16 %v5561
    %v5649 = vunpack.c.h.b16 %v5561
    %v5650 = vunpack.c.l.b16 %v5562
    %v5651 = vunpack.c.h.b16 %v5562
    %v5652 = vunpack.c.l.b16 %v5563
    %v5653 = vunpack.c.h.b16 %v5563
    %v5654 = vunpack.c.l.b16 %v5564
    %v5655 = vunpack.c.h.b16 %v5564
    %v5656 = vunpack.c.l.b16 %v5565
    %v5657 = vunpack.c.h.b16 %v5565
    %v5658 = vunpack.c.l.b16 %v5566
    %v5659 = vunpack.c.h.b16 %v5566
    %v5660 = vunpack.c.l.b16 %v5567
    %v5661 = vunpack.c.h.b16 %v5567
    %v5662 = vunpack.c.l.b16 %v5568
    %v5663 = vunpack.c.h.b16 %v5568
    %v5664 = vunpack.c.l.b16 %v5569
    %v5665 = vunpack.c.h.b16 %v5569
    %v5666 = vpack.c.b16 %v5606, %v5602
    %v5667 = vpack.c.b16 %v5607, %v5603
    %v5668 = vpack.c.b16 %v5608, %v5604
    %v5669 = vpack.c.b16 %v5609, %v5605
    %v5670 = vpack.c.b16 %v5614, %v5610
    %v5671 = vpack.c.b16 %v5615, %v5611
    %v5672 = vpack.c.b16 %v5616, %v5612
    %v5673 = vpack.c.b16 %v5617, %v5613
    %v5674 = vpack.c.b16 %v5622, %v5618
    %v5675 = vpack.c.b16 %v5623, %v5619
    %v5676 = vpack.c.b16 %v5624, %v5620
    %v5677 = vpack.c.b16 %v5625, %v5621
    %v5678 = vpack.c.b16 %v5630, %v5626
    %v5679 = vpack.c.b16 %v5631, %v5627
    %v5680 = vpack.c.b16 %v5632, %v5628
    %v5681 = vpack.c.b16 %v5633, %v5629
    %v5682 = vpack.c.b16 %v5638, %v5634
    %v5683 = vpack.c.b16 %v5639, %v5635
    %v5684 = vpack.c.b16 %v5640, %v5636
    %v5685 = vpack.c.b16 %v5641, %v5637
    %v5686 = vpack.c.b16 %v5646, %v5642
    %v5687 = vpack.c.b16 %v5647, %v5643
    %v5688 = vpack.c.b16 %v5648, %v5644
    %v5689 = vpack.c.b16 %v5649, %v5645
    %v5690 = vpack.c.b16 %v5654, %v5650
    %v5691 = vpack.c.b16 %v5655, %v5651
    %v5692 = vpack.c.b16 %v5656, %v5652
    %v5693 = vpack.c.b16 %v5657, %v5653
    %v5694 = vpack.c.b16 %v5662, %v5658
    %v5695 = vpack.c.b16 %v5663, %v5659
    %v5696 = vpack.c.b16 %v5664, %v5660
    %v5697 = vpack.c.b16 %v5665, %v5661
    %5730 = vmatpush.bf16.msra.mxu0 %v5694
    %5731 = vmatpush.bf16.msra.mxu0 %v5690
    %5732 = vmatpush.bf16.msra.mxu0 %v5686
    %5733 = vmatpush.bf16.msra.mxu0 %v5682
    %5734 = vmatpush.bf16.msra.mxu0 %v5678
    %5735 = vmatpush.bf16.msra.mxu0 %v5674
    %5736 = vmatpush.bf16.msra.mxu0 %v5670
    %5737 = vmatpush.bf16.msra.mxu0 %v5666
    %5738 = vmatmul.bf16.gmra.mxu0 %v4773
    %v5739 = vpop.f32.mrf.mxu0
    %v5740 = vadd.f32 %v4988, %v5739
    %v5741 = vpop.f32.mrf.mxu0
    %5742 = vdwg.mxu0
    %5743 = vmatpush.bf16.msra.mxu0 %v5695
    %5744 = vmatpush.bf16.msra.mxu0 %v5691
    %5745 = vmatpush.bf16.msra.mxu0 %v5687
    %5746 = vmatpush.bf16.msra.mxu0 %v5683
    %5747 = vmatpush.bf16.msra.mxu0 %v5679
    %5748 = vmatpush.bf16.msra.mxu0 %v5675
    %5749 = vmatpush.bf16.msra.mxu0 %v5671
    %5750 = vmatpush.bf16.msra.mxu0 %v5667
    %5751 = vmatmul.bf16.gmra.mxu0 %v4773
    %v5752 = vpop.f32.mrf.mxu0
    %v5753 = vadd.f32 %v5001, %v5752
    %v5754 = vpop.f32.mrf.mxu0
    %5755 = vdwg.mxu0
    %5756 = vmatpush.bf16.msra.mxu0 %v5696
    %5757 = vmatpush.bf16.msra.mxu0 %v5692
    %5758 = vmatpush.bf16.msra.mxu0 %v5688
    %5759 = vmatpush.bf16.msra.mxu0 %v5684
    %5760 = vmatpush.bf16.msra.mxu0 %v5680
    %5761 = vmatpush.bf16.msra.mxu0 %v5676
    %5762 = vmatpush.bf16.msra.mxu0 %v5672
    %5763 = vmatpush.bf16.msra.mxu0 %v5668
    %5764 = vmatmul.bf16.gmra.mxu0 %v4773
    %v5765 = vpop.f32.mrf.mxu0
    %v5766 = vadd.f32 %v5014, %v5765
    %v5767 = vpop.f32.mrf.mxu0
    %5768 = vdwg.mxu0
    %5769 = vmatpush.bf16.msra.mxu0 %v5697
    %5770 = vmatpush.bf16.msra.mxu0 %v5693
    %5771 = vmatpush.bf16.msra.mxu0 %v5689
    %5772 = vmatpush.bf16.msra.mxu0 %v5685
    %5773 = vmatpush.bf16.msra.mxu0 %v5681
    %5774 = vmatpush.bf16.msra.mxu0 %v5677
    %5775 = vmatpush.bf16.msra.mxu0 %v5673
    %5776 = vmatpush.bf16.msra.mxu0 %v5669
    %5777 = vmatmul.bf16.gmra.mxu0 %v4773
    %v5778 = vpop.f32.mrf.mxu0
    %v5779 = vadd.f32 %v5027, %v5778
    %v5780 = vpop.f32.mrf.mxu0
    %5781 = vdwg.mxu0
    %v5782 = vmul.f32 %v5740, 0.5
    %v5783 = vmul.f32 %v5753, 0.5
    %v5784 = vmul.f32 %v5766, 0.5
    %v5785 = vtanh.pop %v5782
    %v5786 = vtanh.pop %v5783
    %v5787 = vtanh.pop %v5784
    %v5788 = vadd.f32 %v5785, 1.0
    %v5789 = vadd.f32 %v5786, 1.0
    %v5790 = vadd.f32 %v5787, 1.0
    %v5791 = vmul.f32 %v5788, 0.5
    %v5792 = vmul.f32 %v5789, 0.5
    %v5793 = vmul.f32 %v5790, 0.5
    %v5794 = vtanh.pop %v5779
    %v5795 = vmul.f32 %v5792, %v4244
    %v5796 = vmul.f32 %v5791, %v5794
    %v5797 = vadd.f32 %v5795, %v5796
    %v5798 = vtanh.pop %v5797
    %v5799 = vmul.f32 %v5793, %v5798
    %v5800 = vpack.c.bf16 %v5799, %v5799
    %v5801 = vld [vmem:[%s1141] sm:$0xff]
    %v5802 = vld [vmem:[%s1141 + $0x8] sm:$0xff]
    %v5803 = vld [vmem:[%s1141 + $0x10] sm:$0xff]
    %v5804 = vld [vmem:[%s1141 + $0x18] sm:$0xff]
    %v5805 = vld [vmem:[%s1141 + $0x20] sm:$0xff]
    %v5806 = vld [vmem:[%s1141 + $0x28] sm:$0xff]
    %v5807 = vld [vmem:[%s1141 + $0x30] sm:$0xff]
    %v5808 = vld [vmem:[%s1141 + $0x38] sm:$0xff]
    %v5809 = vld [vmem:[%s1141 + $0x40] sm:$0xff]
    %v5810 = vld [vmem:[%s1141 + $0x48] sm:$0xff]
    %v5811 = vld [vmem:[%s1141 + $0x50] sm:$0xff]
    %v5812 = vld [vmem:[%s1141 + $0x58] sm:$0xff]
    %v5813 = vld [vmem:[%s1141 + $0x60] sm:$0xff]
    %v5814 = vld [vmem:[%s1141 + $0x68] sm:$0xff]
    %v5815 = vld [vmem:[%s1141 + $0x70] sm:$0xff]
    %v5816 = vld [vmem:[%s1141 + $0x78] sm:$0xff]
    %v5817 = vld [vmem:[%s1141 + $0x80] sm:$0xff]
    %v5818 = vld [vmem:[%s1141 + $0x88] sm:$0xff]
    %v5819 = vld [vmem:[%s1141 + $0x90] sm:$0xff]
    %v5820 = vld [vmem:[%s1141 + $0x98] sm:$0xff]
    %v5821 = vld [vmem:[%s1141 + $0xa0] sm:$0xff]
    %v5822 = vld [vmem:[%s1141 + $0xa8] sm:$0xff]
    %v5823 = vld [vmem:[%s1141 + $0xb0] sm:$0xff]
    %v5824 = vld [vmem:[%s1141 + $0xb8] sm:$0xff]
    %v5825 = vld [vmem:[%s1141 + $0xc0] sm:$0xff]
    %v5826 = vld [vmem:[%s1141 + $0xc8] sm:$0xff]
    %v5827 = vld [vmem:[%s1141 + $0xd0] sm:$0xff]
    %v5828 = vld [vmem:[%s1141 + $0xd8] sm:$0xff]
    %v5829 = vld [vmem:[%s1141 + $0xe0] sm:$0xff]
    %v5830 = vld [vmem:[%s1141 + $0xe8] sm:$0xff]
    %v5831 = vld [vmem:[%s1141 + $0xf0] sm:$0xff]
    %v5832 = vld [vmem:[%s1141 + $0xf8] sm:$0xff]
    %v5865 = vunpack.c.l.b16 %v5801
    %v5866 = vunpack.c.h.b16 %v5801
    %v5867 = vunpack.c.l.b16 %v5802
    %v5868 = vunpack.c.h.b16 %v5802
    %v5869 = vunpack.c.l.b16 %v5803
    %v5870 = vunpack.c.h.b16 %v5803
    %v5871 = vunpack.c.l.b16 %v5804
    %v5872 = vunpack.c.h.b16 %v5804
    %v5873 = vunpack.c.l.b16 %v5805
    %v5874 = vunpack.c.h.b16 %v5805
    %v5875 = vunpack.c.l.b16 %v5806
    %v5876 = vunpack.c.h.b16 %v5806
    %v5877 = vunpack.c.l.b16 %v5807
    %v5878 = vunpack.c.h.b16 %v5807
    %v5879 = vunpack.c.l.b16 %v5808
    %v5880 = vunpack.c.h.b16 %v5808
    %v5881 = vunpack.c.l.b16 %v5809
    %v5882 = vunpack.c.h.b16 %v5809
    %v5883 = vunpack.c.l.b16 %v5810
    %v5884 = vunpack.c.h.b16 %v5810
    %v5885 = vunpack.c.l.b16 %v5811
    %v5886 = vunpack.c.h.b16 %v5811
    %v5887 = vunpack.c.l.b16 %v5812
    %v5888 = vunpack.c.h.b16 %v5812
    %v5889 = vunpack.c.l.b16 %v5813
    %v5890 = vunpack.c.h.b16 %v5813
    %v5891 = vunpack.c.l.b16 %v5814
    %v5892 = vunpack.c.h.b16 %v5814
    %v5893 = vunpack.c.l.b16 %v5815
    %v5894 = vunpack.c.h.b16 %v5815
    %v5895 = vunpack.c.l.b16 %v5816
    %v5896 = vunpack.c.h.b16 %v5816
    %v5897 = vunpack.c.l.b16 %v5817
    %v5898 = vunpack.c.h.b16 %v5817
    %v5899 = vunpack.c.l.b16 %v5818
    %v5900 = vunpack.c.h.b16 %v5818
    %v5901 = vunpack.c.l.b16 %v5819
    %v5902 = vunpack.c.h.b16 %v5819
    %v5903 = vunpack.c.l.b16 %v5820
    %v5904 = vunpack.c.h.b16 %v5820
    %v5905 = vunpack.c.l.b16 %v5821
    %v5906 = vunpack.c.h.b16 %v5821
    %v5907 = vunpack.c.l.b16 %v5822
    %v5908 = vunpack.c.h.b16 %v5822
    %v5909 = vunpack.c.l.b16 %v5823
    %v5910 = vunpack.c.h.b16 %v5823
    %v5911 = vunpack.c.l.b16 %v5824
    %v5912 = vunpack.c.h.b16 %v5824
    %v5913 = vunpack.c.l.b16 %v5825
    %v5914 = vunpack.c.h.b16 %v5825
    %v5915 = vunpack.c.l.b16 %v5826
    %v5916 = vunpack.c.h.b16 %v5826
    %v5917 = vunpack.c.l.b16 %v5827
    %v5918 = vunpack.c.h.b16 %v5827
    %v5919 = vunpack.c.l.b16 %v5828
    %v5920 = vunpack.c.h.b16 %v5828
    %v5921 = vunpack.c.l.b16 %v5829
    %v5922 = vunpack.c.h.b16 %v5829
    %v5923 = vunpack.c.l.b16 %v5830
    %v5924 = vunpack.c.h.b16 %v5830
    %v5925 = vunpack.c.l.b16 %v5831
    %v5926 = vunpack.c.h.b16 %v5831
    %v5927 = vunpack.c.l.b16 %v5832
    %v5928 = vunpack.c.h.b16 %v5832
    %v5929 = vpack.c.b16 %v5869, %v5865
    %v5930 = vpack.c.b16 %v5870, %v5866
    %v5931 = vpack.c.b16 %v5871, %v5867
    %v5932 = vpack.c.b16 %v5872, %v5868
    %v5933 = vpack.c.b16 %v5877, %v5873
    %v5934 = vpack.c.b16 %v5878, %v5874
    %v5935 = vpack.c.b16 %v5879, %v5875
    %v5936 = vpack.c.b16 %v5880, %v5876
    %v5937 = vpack.c.b16 %v5885, %v5881
    %v5938 = vpack.c.b16 %v5886, %v5882
    %v5939 = vpack.c.b16 %v5887, %v5883
    %v5940 = vpack.c.b16 %v5888, %v5884
    %v5941 = vpack.c.b16 %v5893, %v5889
    %v5942 = vpack.c.b16 %v5894, %v5890
    %v5943 = vpack.c.b16 %v5895, %v5891
    %v5944 = vpack.c.b16 %v5896, %v5892
    %v5945 = vpack.c.b16 %v5901, %v5897
    %v5946 = vpack.c.b16 %v5902, %v5898
    %v5947 = vpack.c.b16 %v5903, %v5899
    %v5948 = vpack.c.b16 %v5904, %v5900
    %v5949 = vpack.c.b16 %v5909, %v5905
    %v5950 = vpack.c.b16 %v5910, %v5906
    %v5951 = vpack.c.b16 %v5911, %v5907
    %v5952 = vpack.c.b16 %v5912, %v5908
    %v5953 = vpack.c.b16 %v5917, %v5913
    %v5954 = vpack.c.b16 %v5918, %v5914
    %v5955 = vpack.c.b16 %v5919, %v5915
    %v5956 = vpack.c.b16 %v5920, %v5916
    %v5957 = vpack.c.b16 %v5925, %v5921
    %v5958 = vpack.c.b16 %v5926, %v5922
    %v5959 = vpack.c.b16 %v5927, %v5923
    %v5960 = vpack.c.b16 %v5928, %v5924
    %5993 = vmatpush.bf16.msra.mxu0 %v5957
    %5994 = vmatpush.bf16.msra.mxu0 %v5953
    %5995 = vmatpush.bf16.msra.mxu0 %v5949
    %5996 = vmatpush.bf16.msra.mxu0 %v5945
    %5997 = vmatpush.bf16.msra.mxu0 %v5941
    %5998 = vmatpush.bf16.msra.mxu0 %v5937
    %5999 = vmatpush.bf16.msra.mxu0 %v5933
    %6000 = vmatpush.bf16.msra.mxu0 %v5929
    %6001 = vmatmul.bf16.gmra.mxu0 %v5800
    %v6002 = vpop.f32.mrf.mxu0
    %v6003 = vadd.f32 %v5242, %v6002
    %v6004 = vpop.f32.mrf.mxu0
    %6005 = vdwg.mxu0
    %6006 = vmatpush.bf16.msra.mxu0 %v5958
    %6007 = vmatpush.bf16.msra.mxu0 %v5954
    %6008 = vmatpush.bf16.msra.mxu0 %v5950
    %6009 = vmatpush.bf16.msra.mxu0 %v5946
    %6010 = vmatpush.bf16.msra.mxu0 %v5942
    %6011 = vmatpush.bf16.msra.mxu0 %v5938
    %6012 = vmatpush.bf16.msra.mxu0 %v5934
    %6013 = vmatpush.bf16.msra.mxu0 %v5930
    %6014 = vmatmul.bf16.gmra.mxu0 %v5800
    %v6015 = vpop.f32.mrf.mxu0
    %v6016 = vadd.f32 %v5255, %v6015
    %v6017 = vpop.f32.mrf.mxu0
    %6018 = vdwg.mxu0
    %6019 = vmatpush.bf16.msra.mxu0 %v5959
    %6020 = vmatpush.bf16.msra.mxu0 %v5955
    %6021 = vmatpush.bf16.msra.mxu0 %v5951
    %6022 = vmatpush.bf16.msra.mxu0 %v5947
    %6023 = vmatpush.bf16.msra.mxu0 %v5943
    %6024 = vmatpush.bf16.msra.mxu0 %v5939
    %6025 = vmatpush.bf16.msra.mxu0 %v5935
    %6026 = vmatpush.bf16.msra.mxu0 %v5931
    %6027 = vmatmul.bf16.gmra.mxu0 %v5800
    %v6028 = vpop.f32.mrf.mxu0
    %v6029 = vadd.f32 %v5268, %v6028
    %v6030 = vpop.f32.mrf.mxu0
    %6031 = vdwg.mxu0
    %6032 = vmatpush.bf16.msra.mxu0 %v5960
    %6033 = vmatpush.bf16.msra.mxu0 %v5956
    %6034 = vmatpush.bf16.msra.mxu0 %v5952
    %6035 = vmatpush.bf16.msra.mxu0 %v5948
    %6036 = vmatpush.bf16.msra.mxu0 %v5944
    %6037 = vmatpush.bf16.msra.mxu0 %v5940
    %6038 = vmatpush.bf16.msra.mxu0 %v5936
    %6039 = vmatpush.bf16.msra.mxu0 %v5932
    %6040 = vmatmul.bf16.gmra.mxu0 %v5800
    %v6041 = vpop.f32.mrf.mxu0
    %v6042 = vadd.f32 %v5281, %v6041
    %v6043 = vpop.f32.mrf.mxu0
    %6044 = vdwg.mxu0
    %v6045 = vmul.f32 %v6003, 0.5
    %v6046 = vmul.f32 %v6016, 0.5
    %v6047 = vmul.f32 %v6029, 0.5
    %v6048 = vtanh.pop %v6045
    %v6049 = vtanh.pop %v6046
    %v6050 = vtanh.pop %v6047
    %v6051 = vadd.f32 %v6048, 1.0
    %v6052 = vadd.f32 %v6049, 1.0
    %v6053 = vadd.f32 %v6050, 1.0
    %v6054 = vmul.f32 %v6051, 0.5
    %v6055 = vmul.f32 %v6052, 0.5
    %v6056 = vmul.f32 %v6053, 0.5
    %v6057 = vtanh.pop %v6042
    %v6058 = vmul.f32 %v6055, %v4507
    %v6059 = vmul.f32 %v6054, %v6057
    %v6060 = vadd.f32 %v6058, %v6059
    %v6061 = vtanh.pop %v6060
    %v6062 = vmul.f32 %v6056, %v6061
    %v6063 = vpack.c.bf16 %v6062, %v6062
    %v6064 = vld [vmem:[%s1405] sm:$0xff]
    %v6065 = vld [vmem:[%s1405 + $0x8] sm:$0xff]
    %v6066 = vld [vmem:[%s1405 + $0x10] sm:$0xff]
    %v6067 = vld [vmem:[%s1405 + $0x18] sm:$0xff]
    %v6068 = vld [vmem:[%s1405 + $0x20] sm:$0xff]
    %v6069 = vld [vmem:[%s1405 + $0x28] sm:$0xff]
    %v6070 = vld [vmem:[%s1405 + $0x30] sm:$0xff]
    %v6071 = vld [vmem:[%s1405 + $0x38] sm:$0xff]
    %v6072 = vld [vmem:[%s1405 + $0x40] sm:$0xff]
    %v6073 = vld [vmem:[%s1405 + $0x48] sm:$0xff]
    %v6074 = vld [vmem:[%s1405 + $0x50] sm:$0xff]
    %v6075 = vld [vmem:[%s1405 + $0x58] sm:$0xff]
    %v6076 = vld [vmem:[%s1405 + $0x60] sm:$0xff]
    %v6077 = vld [vmem:[%s1405 + $0x68] sm:$0xff]
    %v6078 = vld [vmem:[%s1405 + $0x70] sm:$0xff]
    %v6079 = vld [vmem:[%s1405 + $0x78] sm:$0xff]
    %v6080 = vld [vmem:[%s1405 + $0x80] sm:$0xff]
    %v6081 = vld [vmem:[%s1405 + $0x88] sm:$0xff]
    %v6082 = vld [vmem:[%s1405 + $0x90] sm:$0xff]
    %v6083 = vld [vmem:[%s1405 + $0x98] sm:$0xff]
    %v6084 = vld [vmem:[%s1405 + $0xa0] sm:$0xff]
    %v6085 = vld [vmem:[%s1405 + $0xa8] sm:$0xff]
    %v6086 = vld [vmem:[%s1405 + $0xb0] sm:$0xff]
    %v6087 = vld [vmem:[%s1405 + $0xb8] sm:$0xff]
    %v6088 = vld [vmem:[%s1405 + $0xc0] sm:$0xff]
    %v6089 = vld [vmem:[%s1405 + $0xc8] sm:$0xff]
    %v6090 = vld [vmem:[%s1405 + $0xd0] sm:$0xff]
    %v6091 = vld [vmem:[%s1405 + $0xd8] sm:$0xff]
    %v6092 = vld [vmem:[%s1405 + $0xe0] sm:$0xff]
    %v6093 = vld [vmem:[%s1405 + $0xe8] sm:$0xff]
    %v6094 = vld [vmem:[%s1405 + $0xf0] sm:$0xff]
    %v6095 = vld [vmem:[%s1405 + $0xf8] sm:$0xff]
    %v6128 = vunpack.c.l.b16 %v6064
    %v6129 = vunpack.c.h.b16 %v6064
    %v6130 = vunpack.c.l.b16 %v6065
    %v6131 = vunpack.c.h.b16 %v6065
    %v6132 = vunpack.c.l.b16 %v6066
    %v6133 = vunpack.c.h.b16 %v6066
    %v6134 = vunpack.c.l.b16 %v6067
    %v6135 = vunpack.c.h.b16 %v6067
    %v6136 = vunpack.c.l.b16 %v6068
    %v6137 = vunpack.c.h.b16 %v6068
    %v6138 = vunpack.c.l.b16 %v6069
    %v6139 = vunpack.c.h.b16 %v6069
    %v6140 = vunpack.c.l.b16 %v6070
    %v6141 = vunpack.c.h.b16 %v6070
    %v6142 = vunpack.c.l.b16 %v6071
    %v6143 = vunpack.c.h.b16 %v6071
    %v6144 = vunpack.c.l.b16 %v6072
    %v6145 = vunpack.c.h.b16 %v6072
    %v6146 = vunpack.c.l.b16 %v6073
    %v6147 = vunpack.c.h.b16 %v6073
    %v6148 = vunpack.c.l.b16 %v6074
    %v6149 = vunpack.c.h.b16 %v6074
    %v6150 = vunpack.c.l.b16 %v6075
    %v6151 = vunpack.c.h.b16 %v6075
    %v6152 = vunpack.c.l.b16 %v6076
    %v6153 = vunpack.c.h.b16 %v6076
    %v6154 = vunpack.c.l.b16 %v6077
    %v6155 = vunpack.c.h.b16 %v6077
    %v6156 = vunpack.c.l.b16 %v6078
    %v6157 = vunpack.c.h.b16 %v6078
    %v6158 = vunpack.c.l.b16 %v6079
    %v6159 = vunpack.c.h.b16 %v6079
    %v6160 = vunpack.c.l.b16 %v6080
    %v6161 = vunpack.c.h.b16 %v6080
    %v6162 = vunpack.c.l.b16 %v6081
    %v6163 = vunpack.c.h.b16 %v6081
    %v6164 = vunpack.c.l.b16 %v6082
    %v6165 = vunpack.c.h.b16 %v6082
    %v6166 = vunpack.c.l.b16 %v6083
    %v6167 = vunpack.c.h.b16 %v6083
    %v6168 = vunpack.c.l.b16 %v6084
    %v6169 = vunpack.c.h.b16 %v6084
    %v6170 = vunpack.c.l.b16 %v6085
    %v6171 = vunpack.c.h.b16 %v6085
    %v6172 = vunpack.c.l.b16 %v6086
    %v6173 = vunpack.c.h.b16 %v6086
    %v6174 = vunpack.c.l.b16 %v6087
    %v6175 = vunpack.c.h.b16 %v6087
    %v6176 = vunpack.c.l.b16 %v6088
    %v6177 = vunpack.c.h.b16 %v6088
    %v6178 = vunpack.c.l.b16 %v6089
    %v6179 = vunpack.c.h.b16 %v6089
    %v6180 = vunpack.c.l.b16 %v6090
    %v6181 = vunpack.c.h.b16 %v6090
    %v6182 = vunpack.c.l.b16 %v6091
    %v6183 = vunpack.c.h.b16 %v6091
    %v6184 = vunpack.c.l.b16 %v6092
    %v6185 = vunpack.c.h.b16 %v6092
    %v6186 = vunpack.c.l.b16 %v6093
    %v6187 = vunpack.c.h.b16 %v6093
    %v6188 = vunpack.c.l.b16 %v6094
    %v6189 = vunpack.c.h.b16 %v6094
    %v6190 = vunpack.c.l.b16 %v6095
    %v6191 = vunpack.c.h.b16 %v6095
    %v6192 = vpack.c.b16 %v6132, %v6128
    %v6193 = vpack.c.b16 %v6133, %v6129
    %v6194 = vpack.c.b16 %v6134, %v6130
    %v6195 = vpack.c.b16 %v6135, %v6131
    %v6196 = vpack.c.b16 %v6140, %v6136
    %v6197 = vpack.c.b16 %v6141, %v6137
    %v6198 = vpack.c.b16 %v6142, %v6138
    %v6199 = vpack.c.b16 %v6143, %v6139
    %v6200 = vpack.c.b16 %v6148, %v6144
    %v6201 = vpack.c.b16 %v6149, %v6145
    %v6202 = vpack.c.b16 %v6150, %v6146
    %v6203 = vpack.c.b16 %v6151, %v6147
    %v6204 = vpack.c.b16 %v6156, %v6152
    %v6205 = vpack.c.b16 %v6157, %v6153
    %v6206 = vpack.c.b16 %v6158, %v6154
    %v6207 = vpack.c.b16 %v6159, %v6155
    %v6208 = vpack.c.b16 %v6164, %v6160
    %v6209 = vpack.c.b16 %v6165, %v6161
    %v6210 = vpack.c.b16 %v6166, %v6162
    %v6211 = vpack.c.b16 %v6167, %v6163
    %v6212 = vpack.c.b16 %v6172, %v6168
    %v6213 = vpack.c.b16 %v6173, %v6169
    %v6214 = vpack.c.b16 %v6174, %v6170
    %v6215 = vpack.c.b16 %v6175, %v6171
    %v6216 = vpack.c.b16 %v6180, %v6176
    %v6217 = vpack.c.b16 %v6181, %v6177
    %v6218 = vpack.c.b16 %v6182, %v6178
    %v6219 = vpack.c.b16 %v6183, %v6179
    %v6220 = vpack.c.b16 %v6188, %v6184
    %v6221 = vpack.c.b16 %v6189, %v6185
    %v6222 = vpack.c.b16 %v6190, %v6186
    %v6223 = vpack.c.b16 %v6191, %v6187
    %6256 = vmatpush.bf16.msra.mxu0 %v6220
    %6257 = vmatpush.bf16.msra.mxu0 %v6216
    %6258 = vmatpush.bf16.msra.mxu0 %v6212
    %6259 = vmatpush.bf16.msra.mxu0 %v6208
    %6260 = vmatpush.bf16.msra.mxu0 %v6204
    %6261 = vmatpush.bf16.msra.mxu0 %v6200
    %6262 = vmatpush.bf16.msra.mxu0 %v6196
    %6263 = vmatpush.bf16.msra.mxu0 %v6192
    %6264 = vmatmul.bf16.gmra.mxu0 %v6063
    %v6265 = vpop.f32.mrf.mxu0
    %v6266 = vadd.f32 %v5496, %v6265
    %v6267 = vpop.f32.mrf.mxu0
    %6268 = vdwg.mxu0
    %6269 = vmatpush.bf16.msra.mxu0 %v6221
    %6270 = vmatpush.bf16.msra.mxu0 %v6217
    %6271 = vmatpush.bf16.msra.mxu0 %v6213
    %6272 = vmatpush.bf16.msra.mxu0 %v6209
    %6273 = vmatpush.bf16.msra.mxu0 %v6205
    %6274 = vmatpush.bf16.msra.mxu0 %v6201
    %6275 = vmatpush.bf16.msra.mxu0 %v6197
    %6276 = vmatpush.bf16.msra.mxu0 %v6193
    %6277 = vmatmul.bf16.gmra.mxu0 %v6063
    %v6278 = vpop.f32.mrf.mxu0
    %v6279 = vadd.f32 %v5509, %v6278
    %v6280 = vpop.f32.mrf.mxu0
    %6281 = vdwg.mxu0
    %6282 = vmatpush.bf16.msra.mxu0 %v6222
    %6283 = vmatpush.bf16.msra.mxu0 %v6218
    %6284 = vmatpush.bf16.msra.mxu0 %v6214
    %6285 = vmatpush.bf16.msra.mxu0 %v6210
    %6286 = vmatpush.bf16.msra.mxu0 %v6206
    %6287 = vmatpush.bf16.msra.mxu0 %v6202
    %6288 = vmatpush.bf16.msra.mxu0 %v6198
    %6289 = vmatpush.bf16.msra.mxu0 %v6194
    %6290 = vmatmul.bf16.gmra.mxu0 %v6063
    %v6291 = vpop.f32.mrf.mxu0
    %v6292 = vadd.f32 %v5522, %v6291
    %v6293 = vpop.f32.mrf.mxu0
    %6294 = vdwg.mxu0
    %6295 = vmatpush.bf16.msra.mxu0 %v6223
    %6296 = vmatpush.bf16.msra.mxu0 %v6219
    %6297 = vmatpush.bf16.msra.mxu0 %v6215
    %6298 = vmatpush.bf16.msra.mxu0 %v6211
    %6299 = vmatpush.bf16.msra.mxu0 %v6207
    %6300 = vmatpush.bf16.msra.mxu0 %v6203
    %6301 = vmatpush.bf16.msra.mxu0 %v6199
    %6302 = vmatpush.bf16.msra.mxu0 %v6195
    %6303 = vmatmul.bf16.gmra.mxu0 %v6063
    %v6304 = vpop.f32.mrf.mxu0
    %v6305 = vadd.f32 %v5535, %v6304
    %v6306 = vpop.f32.mrf.mxu0
    %6307 = vdwg.mxu0
    %v6308 = vmul.f32 %v6266, 0.5
    %v6309 = vmul.f32 %v6279, 0.5
    %v6310 = vmul.f32 %v6292, 0.5
    %v6311 = vtanh.pop %v6308
    %v6312 = vtanh.pop %v6309
    %v6313 = vtanh.pop %v6310
    %v6314 = vadd.f32 %v6311, 1.0
    %v6315 = vadd.f32 %v6312, 1.0
    %v6316 = vadd.f32 %v6313, 1.0
    %v6317 = vmul.f32 %v6314, 0.5
    %v6318 = vmul.f32 %v6315, 0.5
    %v6319 = vmul.f32 %v6316, 0.5
    %v6320 = vtanh.pop %v6305
    %v6321 = vmul.f32 %v6318, %v4770
    %v6322 = vmul.f32 %v6317, %v6320
    %v6323 = vadd.f32 %v6321, %v6322
    %v6324 = vtanh.pop %v6323
    %v6325 = vmul.f32 %v6319, %v6324
    %s6326 = scalar_lea.vmem [#allocation11], 24
    %6327 = vst [vmem:[%s6326] sm:$0xff] %v6325
    // Predicated region
    $region42: #{tpu_custom_call.1} parent=1 // pred_check
      _
    $region43: #{tpu_custom_call.1} parent=1 // pred_check_branch
      %6329 = sbr.rel (0) target = $region45
    $region44: #{tpu_custom_call.1} parent=1 // pred_region
      %6331 = vsyncadd [#allocation4], 0
      %s6332 = sshll.u32 [#allocation11], 4
      %s6333 = int_to_ptr.vmem [resolvable:$true] %s6332
      %s6334 = sshll.u32 %s5, 4
      %s6335 = int_to_ptr.hbm [resolvable:$true] %s6334
      %6340 = dma.vmem_to_hbm [thread:$0]  %s6333, 512, %s6335, [#allocation4], 128, 128, 8
    $region45: #{tpu_custom_call.1} parent=1 // pred_fallthru
      _
    // Predicated region
    $region46: #{tpu_custom_call.1} parent=1 // pred_check
      _
    $region47: #{tpu_custom_call.1} parent=1 // pred_check_branch
      %6342 = sbr.rel (0) target = $region49
    $region48: #{tpu_custom_call.1} parent=1 // pred_region
      %6344 = dma.done [#allocation4], 512
    $region49: #{tpu_custom_call.1} parent=1 // pred_fallthru
      _
    %6345 = vsyncpa [#allocation3], 1
    %6346 = vsyncpa [#allocation6], 1
    %6347 = vsyncpa [#allocation9], 1
    %6348 = vsyncpa [#allocation4], 1

</llo_original>
